<compile_context>
chip_gen: v6e
topology: v6e:2x2x1
jax: 0.10.0
libtpu: 0.0.40
codegen_flags: <defaults>
</compile_context>

<pallas_src>
import jax
import jax.numpy as jnp
from jax import lax
from jax.experimental import pallas as pl
from jax.experimental.pallas import tpu as pltpu

LANE = 128  # TPU lane width; channel dims are zero-padded to multiples of this.


def _round_up(n, m):
    return ((n + m - 1) // m) * m


def _choose_batch_tile(batch, seq_len, target_rows=512):
    """Batch rows folded into one grid step (matmul M dim = bt * L).

    Keeps at least 2 grid steps when possible (pipelining + both v7x TensorCores)
    while growing M toward `target_rows` for decent MXU utilisation on small L.
    """
    max_bt = batch // 2 if batch > 1 else 1
    bt = 1
    for cand in range(1, max(1, max_bt) + 1):
        if batch % cand == 0:
            bt = cand
            if cand * seq_len >= target_rows:
                break
    return bt


def _make_fused_encoder_kernel(num_layers, K, L, bt, cin0, cin0_p, cout_p,
                               compute_dtype):
    """Fused multi-layer encoder kernel; one (bt, L) activation slab per grid step."""
    M = bt * L
    cmax = max(cin0_p, cout_p)

    def kernel(x_ref, s_ref, *refs):
        # refs = (w0, b0, w1, b1, ..., w_{n-1}, b_{n-1}, o_ref)
        o_ref = refs[-1]
        wb = refs[:-1]

        # Flatten the batch tile into the matmul M dimension; lane-pad in VMEM
        # (the HBM copy of x stays unpadded).
        h = x_ref[...].reshape(M, cin0).astype(jnp.float32)
        if cin0 != cin0_p:
            h = jnp.concatenate(
                [h, jnp.zeros((M, cin0_p - cin0), jnp.float32)], axis=1)

        # Hoisted (1 - mask) lane broadcast, reused by every layer.
        scale = jnp.broadcast_to(
            s_ref[...].reshape(M, 1).astype(jnp.float32), (M, cmax))

        # Hoisted per-tap boundary masks: after rolling "up" by k rows, the last k
        # rows of every length-L sequence must be zero (the conv's right zero pad,
        # and no leakage across batch rows inside the flattened slab).
        row_in_seq = lax.broadcasted_iota(jnp.int32, (M, 1), 0) % L
        keep = [(row_in_seq < (L - k)).astype(jnp.float32) for k in range(1, K)]

        for i in range(num_layers):
            w_ref = wb[2 * i]        # (K, cin_p, cout_p) bf16
            b_ref = wb[2 * i + 1]    # (1, cout_p) f32
            width = h.shape[1]

            # masked_fill(mask, 0.0) -- scale is {0, 1}.
            hm = h * scale[:, :width]

            # Tap 0 (no shift) + K-1 rolled taps; each tap is one MXU matmul with
            # bf16 operands and f32 accumulation.
            acc = jnp.dot(hm.astype(compute_dtype), w_ref[0],
                          preferred_element_type=jnp.float32)
            for k in range(1, K):
                tap = pltpu.roll(hm, shift=(M - k) % M, axis=0) * keep[k - 1]
                acc = acc + jnp.dot(tap.astype(compute_dtype), w_ref[k],
                                    preferred_element_type=jnp.float32)

            h = acc + b_ref[...]     # f32; stays resident across layers
            # Dropout(p): identity in eval mode.

        o_ref[...] = h.reshape(bt, L, cout_p).astype(o_ref.dtype)

    return kernel


def encoder_forward(x, x_mask, params, *, compute_dtype=jnp.bfloat16):
    """Fused Pallas Encoder forward (eval mode).

    x:      (B, L, input_size) float
    x_mask: (B, L) bool  (True -> position zeroed before every conv layer)
    params: list of (W, b) per layer; W: (K, Cin, Cout) with W[k, c, o] == torch_W[o, c, k],
            b: (1, Cout)
    Returns (B, L, hidden_size) in `compute_dtype` (bf16 at the HBM boundary).
    """
    B, L, cin0 = x.shape
    num_layers = len(params)
    K = params[0][0].shape[0]
    hidden = params[0][0].shape[2]

    cin0_p = _round_up(cin0, LANE)
    cout_p = _round_up(hidden, LANE)
    bt = _choose_batch_tile(B, L)
    grid = (B // bt,)

    # bf16 at the HBM boundary; x is NOT channel-padded here (padding is in-kernel).
    x_c = x.astype(compute_dtype)
    scale = (~x_mask)[:, :, None].astype(compute_dtype)          # (B, L, 1), {0, 1}

    # Host-side weight prep: pad channels to lane multiples, cast to bf16.
    w_list, b_list = [], []
    for (w, b) in params:
        cin = w.shape[1]
        cin_p = _round_up(cin, LANE)
        w_p = jnp.pad(w, ((0, 0), (0, cin_p - cin), (0, cout_p - w.shape[2])))
        w_list.append(w_p.astype(compute_dtype))                 # (K, cin_p, cout_p)
        b_list.append(
            jnp.pad(b, ((0, 0), (0, cout_p - b.shape[1]))).astype(jnp.float32))

    kernel = _make_fused_encoder_kernel(
        num_layers, K, L, bt, cin0, cin0_p, cout_p, compute_dtype)

    # Advisory cost estimate for the XLA scheduler.
    flops = int(2 * B * L * sum(
        K * _round_up(w.shape[1], LANE) * cout_p for (w, _) in params))
    bytes_accessed = int(
        x_c.size * x_c.dtype.itemsize + scale.size * scale.dtype.itemsize
        + sum(int(w.size) * 2 + int(b.size) * 4 for w, b in zip(w_list, b_list))
        + B * L * cout_p * x_c.dtype.itemsize)

    # Generation-dependent VMEM budget: ~3/4 of physical (48 MiB on v7x's 64 MiB,
    # 96 MiB on v5e/v6e's 128 MiB), never above 100 MiB.
    try:
        vmem_cap = int(pltpu.get_tpu_info().vmem_capacity_bytes)
    except Exception:
        vmem_cap = 64 * 1024 * 1024
    vmem_limit = int(min(vmem_cap * 3 // 4, 100 * 1024 * 1024))

    weight_bias = [a for pair in zip(w_list, b_list) for a in pair]

    def run(single_buffer_weights):
        # Grid-invariant weights/biases: single-buffer to halve their VMEM residency.
        wb_kwargs = (dict(pipeline_mode=pl.Buffered(1))
                     if single_buffer_weights else {})
        in_specs = [
            pl.BlockSpec((bt, L, cin0), lambda i: (i, 0, 0)),    # activations (unpadded)
            pl.BlockSpec((bt, L, 1), lambda i: (i, 0, 0)),       # (1 - mask) scale
        ]
        for w_p, b_p in zip(w_list, b_list):
            in_specs.append(pl.BlockSpec(w_p.shape, lambda i: (0, 0, 0), **wb_kwargs))
            in_specs.append(pl.BlockSpec(b_p.shape, lambda i: (0, 0), **wb_kwargs))
        return pl.pallas_call(
            kernel,
            out_shape=jax.ShapeDtypeStruct((B, L, cout_p), compute_dtype),
            grid_spec=pltpu.PrefetchScalarGridSpec(
                num_scalar_prefetch=0,
                grid=grid,
                in_specs=in_specs,
                out_specs=pl.BlockSpec((bt, L, cout_p), lambda i: (i, 0, 0)),
            ),
            compiler_params=pltpu.CompilerParams(
                dimension_semantics=("parallel",),
                vmem_limit_bytes=vmem_limit,
            ),
            cost_estimate=pl.CostEstimate(
                flops=flops, transcendentals=0, bytes_accessed=bytes_accessed),
        )(x_c, scale, *weight_bias)

    try:
        out = jax.block_until_ready(run(single_buffer_weights=True))
    except Exception:
        # TODO(synk): pl.Buffered(1) rejected by this jax build; fall back to the
        # default double-buffered weight blocks (correctness unaffected).
        out = jax.block_until_ready(run(single_buffer_weights=False))

    if cout_p != hidden:
        # Callers that can consume the lane-padded width should skip this slice.
        out = out[:, :, :hidden]
    return out


def encoder_reference(x, x_mask, params, *, compute_dtype=jnp.bfloat16):
    """Pure-JAX reference with identical masking/matmul numerics (f32 accumulation)."""
    scale = (1.0 - x_mask.astype(jnp.float32))[:, :, None]
    h = x.astype(jnp.float32)
    for (w, b) in params:
        K = w.shape[0]
        hm = (h * scale).astype(compute_dtype)
        wc = w.astype(compute_dtype)
        acc = jnp.zeros((h.shape[0], h.shape[1], w.shape[2]), jnp.float32)
        for k in range(K):
            xs = jnp.pad(hm[:, k:, :], ((0, 0), (0, k), (0, 0)))
            acc = acc + jnp.einsum("blc,co->blo", xs, wc[k],
                                   preferred_element_type=jnp.float32)
        h = acc + b[None, :, :]
    return h


def init_params(key, num_layers, input_size, hidden_size, kernel_size):
    params = []
    for i in range(num_layers):
        cin = input_size if i == 0 else hidden_size
        key, kw, kb = jax.random.split(key, 3)
        # Conv1d-style fan-in scaling; W[k, c, o] == torch_weight[o, c, k]
        bound = 1.0 / jnp.sqrt(cin * kernel_size)
        w = jax.random.uniform(kw, (kernel_size, cin, hidden_size),
                               jnp.float32, -bound, bound)
        b = jax.random.uniform(kb, (1, hidden_size), jnp.float32, -bound, bound)
        params.append((w, b))
    return params


if __name__ == "__main__":
    B, L = 4, 24
    input_size, hidden_size = 48, 96
    num_layers, kernel_size = 2, 3

    key = jax.random.PRNGKey(0)
    kx, km, kp = jax.random.split(key, 3)

    x = jax.random.normal(kx, (B, L, input_size), jnp.float32)
    x_mask = jax.random.bernoulli(km, 0.3, (B, L))          # True -> masked
    params = init_params(kp, num_layers, input_size, hidden_size, kernel_size)

    out = jax.block_until_ready(encoder_forward(x, x_mask, params))

    ref = encoder_reference(x, x_mask, params)
    assert out.shape == (B, L, hidden_size), out.shape
    assert jnp.allclose(out.astype(jnp.float32), ref, atol=2e-2, rtol=2e-2), \
        "mismatch vs reference"

    print("KERNEL_OK")
</pallas_src>

<mosaic_0001>
module attributes {stable_mosaic.version = 11 : i64} {
  func.func @kernel(%arg0: i32, %arg1: memref<2x24x48xbf16, #tpu.memory_space<vmem>>, %arg2: memref<2x24x1xbf16, #tpu.memory_space<vmem>>, %arg3: memref<3x128x128xbf16, #tpu.memory_space<vmem>>, %arg4: memref<1x128xf32, #tpu.memory_space<vmem>>, %arg5: memref<3x128x128xbf16, #tpu.memory_space<vmem>>, %arg6: memref<1x128xf32, #tpu.memory_space<vmem>>, %arg7: memref<2x24x128xbf16, #tpu.memory_space<vmem>>) attributes {dimension_semantics = [#tpu.dimension_semantics<parallel>], iteration_bounds = array<i64: 2>, scalar_prefetch = 0 : i64, scratch_operands = 0 : i64, tpu.core_type = #tpu.core_type<tc>, window_params = [{transform_indices = @transform_0, window_bounds = array<i64: 2, 24, 48>}, {transform_indices = @transform_1, window_bounds = array<i64: 2, 24, 1>}, {pipeline_mode = #tpu.pipeline_mode<synchronous>, transform_indices = @transform_2, window_bounds = array<i64: 3, 128, 128>}, {pipeline_mode = #tpu.pipeline_mode<synchronous>, transform_indices = @transform_3, window_bounds = array<i64: 1, 128>}, {pipeline_mode = #tpu.pipeline_mode<synchronous>, transform_indices = @transform_4, window_bounds = array<i64: 3, 128, 128>}, {pipeline_mode = #tpu.pipeline_mode<synchronous>, transform_indices = @transform_5, window_bounds = array<i64: 1, 128>}, {transform_indices = @transform_6, window_bounds = array<i64: 2, 24, 128>}]} {
    %c0 = arith.constant 0 : index
    %c0_0 = arith.constant 0 : index
    %c0_1 = arith.constant 0 : index
    %0 = vector.load %arg1[%c0, %c0_0, %c0_1] : memref<2x24x48xbf16, #tpu.memory_space<vmem>>, vector<2x24x48xbf16>
    %1 = vector.shape_cast %0 : vector<2x24x48xbf16> to vector<48x48xbf16>
    %2 = arith.extf %1 : vector<48x48xbf16> to vector<48x48xf32>
    %cst = arith.constant 0.000000e+00 : f32
    %3 = vector.broadcast %cst : f32 to vector<48x80xf32>
    %4 = tpu.concatenate %2, %3 in 1 : vector<48x48xf32>, vector<48x80xf32> -> vector<48x128xf32>
    %c0_2 = arith.constant 0 : index
    %c0_3 = arith.constant 0 : index
    %c0_4 = arith.constant 0 : index
    %5 = vector.load %arg2[%c0_2, %c0_3, %c0_4] : memref<2x24x1xbf16, #tpu.memory_space<vmem>>, vector<2x24x1xbf16>
    %6 = vector.shape_cast %5 : vector<2x24x1xbf16> to vector<48x1xbf16>
    %7 = arith.extf %6 : vector<48x1xbf16> to vector<48x1xf32>
    %8 = vector.shape_cast %7 : vector<48x1xf32> to vector<48x1xf32>
    %9 = vector.broadcast %8 : vector<48x1xf32> to vector<48x128xf32>
    %10 = tpu.iota {dimensions = array<i32: 0>} : vector<48x1xi32>
    %c24_i32 = arith.constant 24 : i32
    %c0_i32 = arith.constant 0 : i32
    %11 = arith.cmpi eq, %c24_i32, %c0_i32 : i32
    %c1_i32 = arith.constant 1 : i32
    %12 = arith.select %11, %c1_i32, %c24_i32 : i32
    %13 = vector.broadcast %12 : i32 to vector<48x1xi32>
    %14 = arith.remsi %10, %13 : vector<48x1xi32>
    %c0_i32_5 = arith.constant 0 : i32
    %15 = vector.broadcast %c0_i32_5 : i32 to vector<48x1xi32>
    %16 = arith.cmpi ne, %14, %15 : vector<48x1xi32>
    %c0_i32_6 = arith.constant 0 : i32
    %17 = vector.broadcast %c0_i32_6 : i32 to vector<48x1xi32>
    %18 = arith.cmpi slt, %14, %17 : vector<48x1xi32>
    %c0_i32_7 = arith.constant 0 : i32
    %19 = arith.cmpi slt, %12, %c0_i32_7 : i32
    %20 = vector.broadcast %19 : i1 to vector<48x1xi1>
    %21 = vector.broadcast %20 : vector<48x1xi1> to vector<48x1xi1>
    %22 = arith.xori %18, %21 : vector<48x1xi1>
    %23 = arith.andi %22, %16 : vector<48x1xi1>
    %24 = vector.broadcast %12 : i32 to vector<48x1xi32>
    %25 = arith.addi %14, %24 : vector<48x1xi32>
    %26 = arith.select %23, %25, %14 : vector<48x1xi1>, vector<48x1xi32>
    %c23_i32 = arith.constant 23 : i32
    %27 = vector.broadcast %c23_i32 : i32 to vector<48x1xi32>
    %28 = arith.cmpi slt, %26, %27 : vector<48x1xi32>
    %29 = arith.extui %28 : vector<48x1xi1> to vector<48x1xi32>
    %30 = arith.sitofp %29 : vector<48x1xi32> to vector<48x1xf32>
    %c22_i32 = arith.constant 22 : i32
    %31 = vector.broadcast %c22_i32 : i32 to vector<48x1xi32>
    %32 = arith.cmpi slt, %26, %31 : vector<48x1xi32>
    %33 = arith.extui %32 : vector<48x1xi1> to vector<48x1xi32>
    %34 = arith.sitofp %33 : vector<48x1xi32> to vector<48x1xf32>
    %35 = arith.mulf %4, %9 : vector<48x128xf32>
    %36 = arith.truncf %35 : vector<48x128xf32> to vector<48x128xbf16>
    %c0_8 = arith.constant 0 : index
    %c0_9 = arith.constant 0 : index
    %c0_10 = arith.constant 0 : index
    %37 = vector.load %arg3[%c0_8, %c0_9, %c0_10] : memref<3x128x128xbf16, #tpu.memory_space<vmem>>, vector<1x128x128xbf16>
    %38 = vector.shape_cast %37 : vector<1x128x128xbf16> to vector<128x128xbf16>
    %cst_11 = arith.constant dense<0.000000e+00> : vector<48x128xf32>
    %39 = tpu.matmul %36, %38, %cst_11 {dimension_numbers = #tpu.dot_dimension_numbers<[1], [0], [0], [1], [0, 0, 1, 1], [], []>} : vector<48x128xbf16>, vector<128x128xbf16>, vector<48x128xf32> -> vector<48x128xf32>
    %c47_i32 = arith.constant 47 : i32
    %40 = tpu.dynamic_rotate %35 by %c47_i32 dim 0 : vector<48x128xf32>, i32 -> vector<48x128xf32>
    %41 = vector.broadcast %30 : vector<48x1xf32> to vector<48x128xf32>
    %42 = arith.mulf %40, %41 : vector<48x128xf32>
    %43 = arith.truncf %42 : vector<48x128xf32> to vector<48x128xbf16>
    %c1 = arith.constant 1 : index
    %c0_12 = arith.constant 0 : index
    %c0_13 = arith.constant 0 : index
    %44 = vector.load %arg3[%c1, %c0_12, %c0_13] : memref<3x128x128xbf16, #tpu.memory_space<vmem>>, vector<1x128x128xbf16>
    %45 = vector.shape_cast %44 : vector<1x128x128xbf16> to vector<128x128xbf16>
    %cst_14 = arith.constant dense<0.000000e+00> : vector<48x128xf32>
    %46 = tpu.matmul %43, %45, %cst_14 {dimension_numbers = #tpu.dot_dimension_numbers<[1], [0], [0], [1], [0, 0, 1, 1], [], []>} : vector<48x128xbf16>, vector<128x128xbf16>, vector<48x128xf32> -> vector<48x128xf32>
    %47 = arith.addf %39, %46 : vector<48x128xf32>
    %c46_i32 = arith.constant 46 : i32
    %48 = tpu.dynamic_rotate %35 by %c46_i32 dim 0 : vector<48x128xf32>, i32 -> vector<48x128xf32>
    %49 = vector.broadcast %34 : vector<48x1xf32> to vector<48x128xf32>
    %50 = arith.mulf %48, %49 : vector<48x128xf32>
    %51 = arith.truncf %50 : vector<48x128xf32> to vector<48x128xbf16>
    %c2 = arith.constant 2 : index
    %c0_15 = arith.constant 0 : index
    %c0_16 = arith.constant 0 : index
    %52 = vector.load %arg3[%c2, %c0_15, %c0_16] : memref<3x128x128xbf16, #tpu.memory_space<vmem>>, vector<1x128x128xbf16>
    %53 = vector.shape_cast %52 : vector<1x128x128xbf16> to vector<128x128xbf16>
    %cst_17 = arith.constant dense<0.000000e+00> : vector<48x128xf32>
    %54 = tpu.matmul %51, %53, %cst_17 {dimension_numbers = #tpu.dot_dimension_numbers<[1], [0], [0], [1], [0, 0, 1, 1], [], []>} : vector<48x128xbf16>, vector<128x128xbf16>, vector<48x128xf32> -> vector<48x128xf32>
    %55 = arith.addf %47, %54 : vector<48x128xf32>
    %c0_18 = arith.constant 0 : index
    %c0_19 = arith.constant 0 : index
    %56 = vector.load %arg4[%c0_18, %c0_19] : memref<1x128xf32, #tpu.memory_space<vmem>>, vector<1x128xf32>
    %57 = vector.broadcast %56 : vector<1x128xf32> to vector<48x128xf32>
    %58 = arith.addf %55, %57 : vector<48x128xf32>
    %59 = arith.mulf %58, %9 : vector<48x128xf32>
    %60 = arith.truncf %59 : vector<48x128xf32> to vector<48x128xbf16>
    %c0_20 = arith.constant 0 : index
    %c0_21 = arith.constant 0 : index
    %c0_22 = arith.constant 0 : index
    %61 = vector.load %arg5[%c0_20, %c0_21, %c0_22] : memref<3x128x128xbf16, #tpu.memory_space<vmem>>, vector<1x128x128xbf16>
    %62 = vector.shape_cast %61 : vector<1x128x128xbf16> to vector<128x128xbf16>
    %cst_23 = arith.constant dense<0.000000e+00> : vector<48x128xf32>
    %63 = tpu.matmul %60, %62, %cst_23 {dimension_numbers = #tpu.dot_dimension_numbers<[1], [0], [0], [1], [0, 0, 1, 1], [], []>} : vector<48x128xbf16>, vector<128x128xbf16>, vector<48x128xf32> -> vector<48x128xf32>
    %c47_i32_24 = arith.constant 47 : i32
    %64 = tpu.dynamic_rotate %59 by %c47_i32_24 dim 0 : vector<48x128xf32>, i32 -> vector<48x128xf32>
    %65 = vector.broadcast %30 : vector<48x1xf32> to vector<48x128xf32>
    %66 = arith.mulf %64, %65 : vector<48x128xf32>
    %67 = arith.truncf %66 : vector<48x128xf32> to vector<48x128xbf16>
    %c1_25 = arith.constant 1 : index
    %c0_26 = arith.constant 0 : index
    %c0_27 = arith.constant 0 : index
    %68 = vector.load %arg5[%c1_25, %c0_26, %c0_27] : memref<3x128x128xbf16, #tpu.memory_space<vmem>>, vector<1x128x128xbf16>
    %69 = vector.shape_cast %68 : vector<1x128x128xbf16> to vector<128x128xbf16>
    %cst_28 = arith.constant dense<0.000000e+00> : vector<48x128xf32>
    %70 = tpu.matmul %67, %69, %cst_28 {dimension_numbers = #tpu.dot_dimension_numbers<[1], [0], [0], [1], [0, 0, 1, 1], [], []>} : vector<48x128xbf16>, vector<128x128xbf16>, vector<48x128xf32> -> vector<48x128xf32>
    %71 = arith.addf %63, %70 : vector<48x128xf32>
    %c46_i32_29 = arith.constant 46 : i32
    %72 = tpu.dynamic_rotate %59 by %c46_i32_29 dim 0 : vector<48x128xf32>, i32 -> vector<48x128xf32>
    %73 = vector.broadcast %34 : vector<48x1xf32> to vector<48x128xf32>
    %74 = arith.mulf %72, %73 : vector<48x128xf32>
    %75 = arith.truncf %74 : vector<48x128xf32> to vector<48x128xbf16>
    %c2_30 = arith.constant 2 : index
    %c0_31 = arith.constant 0 : index
    %c0_32 = arith.constant 0 : index
    %76 = vector.load %arg5[%c2_30, %c0_31, %c0_32] : memref<3x128x128xbf16, #tpu.memory_space<vmem>>, vector<1x128x128xbf16>
    %77 = vector.shape_cast %76 : vector<1x128x128xbf16> to vector<128x128xbf16>
    %cst_33 = arith.constant dense<0.000000e+00> : vector<48x128xf32>
    %78 = tpu.matmul %75, %77, %cst_33 {dimension_numbers = #tpu.dot_dimension_numbers<[1], [0], [0], [1], [0, 0, 1, 1], [], []>} : vector<48x128xbf16>, vector<128x128xbf16>, vector<48x128xf32> -> vector<48x128xf32>
    %79 = arith.addf %71, %78 : vector<48x128xf32>
    %c0_34 = arith.constant 0 : index
    %c0_35 = arith.constant 0 : index
    %80 = vector.load %arg6[%c0_34, %c0_35] : memref<1x128xf32, #tpu.memory_space<vmem>>, vector<1x128xf32>
    %81 = vector.broadcast %80 : vector<1x128xf32> to vector<48x128xf32>
    %82 = arith.addf %79, %81 : vector<48x128xf32>
    %83 = vector.shape_cast %82 : vector<48x128xf32> to vector<2x24x128xf32>
    %84 = arith.truncf %83 : vector<2x24x128xf32> to vector<2x24x128xbf16>
    %c0_36 = arith.constant 0 : index
    %c0_37 = arith.constant 0 : index
    %c0_38 = arith.constant 0 : index
    %85 = vector.load %arg7[%c0_36, %c0_37, %c0_38] : memref<2x24x128xbf16, #tpu.memory_space<vmem>>, vector<2x24x128xbf16>
    tpu.vector_store %arg7[%c0_36, %c0_37, %c0_38], %84 {strides = array<i32>} : memref<2x24x128xbf16, #tpu.memory_space<vmem>>, vector<2x24x128xbf16>,
    return
  }
  func.func @transform_0(%arg0: i32) -> (i32, i32, i32) {
    %c0_i32 = arith.constant 0 : i32
    %c0_i32_0 = arith.constant 0 : i32
    %c0_i32_1 = arith.constant 0 : i32
    return %arg0, %c0_i32, %c0_i32_0 : i32, i32, i32
  }
  func.func @transform_1(%arg0: i32) -> (i32, i32, i32) {
    %c0_i32 = arith.constant 0 : i32
    %c0_i32_0 = arith.constant 0 : i32
    %c0_i32_1 = arith.constant 0 : i32
    return %arg0, %c0_i32, %c0_i32_0 : i32, i32, i32
  }
  func.func @transform_2(%arg0: i32) -> (i32, i32, i32) {
    %c0_i32 = arith.constant 0 : i32
    %c0_i32_0 = arith.constant 0 : i32
    %c0_i32_1 = arith.constant 0 : i32
    %c0_i32_2 = arith.constant 0 : i32
    return %c0_i32, %c0_i32_0, %c0_i32_1 : i32, i32, i32
  }
  func.func @transform_3(%arg0: i32) -> (i32, i32) {
    %c0_i32 = arith.constant 0 : i32
    %c0_i32_0 = arith.constant 0 : i32
    %c0_i32_1 = arith.constant 0 : i32
    return %c0_i32, %c0_i32_0 : i32, i32
  }
  func.func @transform_4(%arg0: i32) -> (i32, i32, i32) {
    %c0_i32 = arith.constant 0 : i32
    %c0_i32_0 = arith.constant 0 : i32
    %c0_i32_1 = arith.constant 0 : i32
    %c0_i32_2 = arith.constant 0 : i32
    return %c0_i32, %c0_i32_0, %c0_i32_1 : i32, i32, i32
  }
  func.func @transform_5(%arg0: i32) -> (i32, i32) {
    %c0_i32 = arith.constant 0 : i32
    %c0_i32_0 = arith.constant 0 : i32
    %c0_i32_1 = arith.constant 0 : i32
    return %c0_i32, %c0_i32_0 : i32, i32
  }
  func.func @transform_6(%arg0: i32) -> (i32, i32, i32) {
    %c0_i32 = arith.constant 0 : i32
    %c0_i32_0 = arith.constant 0 : i32
    %c0_i32_1 = arith.constant 0 : i32
    return %arg0, %c0_i32, %c0_i32_0 : i32, i32, i32
  }
}

module attributes {stable_mosaic.version = 11 : i64} {
  func.func @kernel(%arg0: i32, %arg1: memref<2x24x48xbf16, #tpu.memory_space<vmem>>, %arg2: memref<2x24x1xbf16, #tpu.memory_space<vmem>>, %arg3: memref<3x128x128xbf16, #tpu.memory_space<vmem>>, %arg4: memref<1x128xf32, #tpu.memory_space<vmem>>, %arg5: memref<3x128x128xbf16, #tpu.memory_space<vmem>>, %arg6: memref<1x128xf32, #tpu.memory_space<vmem>>, %arg7: memref<2x24x128xbf16, #tpu.memory_space<vmem>>) attributes {dimension_semantics = [#tpu.dimension_semantics<parallel>], iteration_bounds = array<i64: 2>, scalar_prefetch = 0 : i64, scratch_operands = 0 : i64, tpu.core_type = #tpu.core_type<tc>, window_params = [{transform_indices = @transform_0, window_bounds = array<i64: 2, 24, 48>}, {transform_indices = @transform_1, window_bounds = array<i64: 2, 24, 1>}, {pipeline_mode = #tpu.pipeline_mode<synchronous>, transform_indices = @transform_2, window_bounds = array<i64: 3, 128, 128>}, {pipeline_mode = #tpu.pipeline_mode<synchronous>, transform_indices = @transform_3, window_bounds = array<i64: 1, 128>}, {pipeline_mode = #tpu.pipeline_mode<synchronous>, transform_indices = @transform_4, window_bounds = array<i64: 3, 128, 128>}, {pipeline_mode = #tpu.pipeline_mode<synchronous>, transform_indices = @transform_5, window_bounds = array<i64: 1, 128>}, {transform_indices = @transform_6, window_bounds = array<i64: 2, 24, 128>}]} {
    %c0 = arith.constant 0 : index
    %c0_0 = arith.constant 0 : index
    %c0_1 = arith.constant 0 : index
    %0 = vector.load %arg1[%c0, %c0_0, %c0_1] : memref<2x24x48xbf16, #tpu.memory_space<vmem>>, vector<2x24x48xbf16>
    %1 = vector.shape_cast %0 : vector<2x24x48xbf16> to vector<48x48xbf16>
    %2 = arith.extf %1 : vector<48x48xbf16> to vector<48x48xf32>
    %cst = arith.constant 0.000000e+00 : f32
    %3 = vector.broadcast %cst : f32 to vector<48x80xf32>
    %4 = tpu.concatenate %2, %3 in 1 : vector<48x48xf32>, vector<48x80xf32> -> vector<48x128xf32>
    %c0_2 = arith.constant 0 : index
    %c0_3 = arith.constant 0 : index
    %c0_4 = arith.constant 0 : index
    %5 = vector.load %arg2[%c0_2, %c0_3, %c0_4] : memref<2x24x1xbf16, #tpu.memory_space<vmem>>, vector<2x24x1xbf16>
    %6 = vector.shape_cast %5 : vector<2x24x1xbf16> to vector<48x1xbf16>
    %7 = arith.extf %6 : vector<48x1xbf16> to vector<48x1xf32>
    %8 = vector.shape_cast %7 : vector<48x1xf32> to vector<48x1xf32>
    %9 = vector.broadcast %8 : vector<48x1xf32> to vector<48x128xf32>
    %10 = tpu.iota {dimensions = array<i32: 0>} : vector<48x1xi32>
    %c24_i32 = arith.constant 24 : i32
    %c0_i32 = arith.constant 0 : i32
    %11 = arith.cmpi eq, %c24_i32, %c0_i32 : i32
    %c1_i32 = arith.constant 1 : i32
    %12 = arith.select %11, %c1_i32, %c24_i32 : i32
    %13 = vector.broadcast %12 : i32 to vector<48x1xi32>
    %14 = arith.remsi %10, %13 : vector<48x1xi32>
    %c0_i32_5 = arith.constant 0 : i32
    %15 = vector.broadcast %c0_i32_5 : i32 to vector<48x1xi32>
    %16 = arith.cmpi ne, %14, %15 : vector<48x1xi32>
    %c0_i32_6 = arith.constant 0 : i32
    %17 = vector.broadcast %c0_i32_6 : i32 to vector<48x1xi32>
    %18 = arith.cmpi slt, %14, %17 : vector<48x1xi32>
    %c0_i32_7 = arith.constant 0 : i32
    %19 = arith.cmpi slt, %12, %c0_i32_7 : i32
    %20 = vector.broadcast %19 : i1 to vector<48x1xi1>
    %21 = vector.broadcast %20 : vector<48x1xi1> to vector<48x1xi1>
    %22 = arith.xori %18, %21 : vector<48x1xi1>
    %23 = arith.andi %22, %16 : vector<48x1xi1>
    %24 = vector.broadcast %12 : i32 to vector<48x1xi32>
    %25 = arith.addi %14, %24 : vector<48x1xi32>
    %26 = arith.select %23, %25, %14 : vector<48x1xi1>, vector<48x1xi32>
    %c23_i32 = arith.constant 23 : i32
    %27 = vector.broadcast %c23_i32 : i32 to vector<48x1xi32>
    %28 = arith.cmpi slt, %26, %27 : vector<48x1xi32>
    %29 = arith.extui %28 : vector<48x1xi1> to vector<48x1xi32>
    %30 = arith.sitofp %29 : vector<48x1xi32> to vector<48x1xf32>
    %c22_i32 = arith.constant 22 : i32
    %31 = vector.broadcast %c22_i32 : i32 to vector<48x1xi32>
    %32 = arith.cmpi slt, %26, %31 : vector<48x1xi32>
    %33 = arith.extui %32 : vector<48x1xi1> to vector<48x1xi32>
    %34 = arith.sitofp %33 : vector<48x1xi32> to vector<48x1xf32>
    %35 = arith.mulf %4, %9 : vector<48x128xf32>
    %36 = arith.truncf %35 : vector<48x128xf32> to vector<48x128xbf16>
    %c0_8 = arith.constant 0 : index
    %c0_9 = arith.constant 0 : index
    %c0_10 = arith.constant 0 : index
    %37 = vector.load %arg3[%c0_8, %c0_9, %c0_10] : memref<3x128x128xbf16, #tpu.memory_space<vmem>>, vector<1x128x128xbf16>
    %38 = vector.shape_cast %37 : vector<1x128x128xbf16> to vector<128x128xbf16>
    %cst_11 = arith.constant dense<0.000000e+00> : vector<48x128xf32>
    %39 = tpu.matmul %36, %38, %cst_11 {dimension_numbers = #tpu.dot_dimension_numbers<[1], [0], [0], [1], [0, 0, 1, 1], [], []>} : vector<48x128xbf16>, vector<128x128xbf16>, vector<48x128xf32> -> vector<48x128xf32>
    %c47_i32 = arith.constant 47 : i32
    %40 = tpu.dynamic_rotate %35 by %c47_i32 dim 0 : vector<48x128xf32>, i32 -> vector<48x128xf32>
    %41 = vector.broadcast %30 : vector<48x1xf32> to vector<48x128xf32>
    %42 = arith.mulf %40, %41 : vector<48x128xf32>
    %43 = arith.truncf %42 : vector<48x128xf32> to vector<48x128xbf16>
    %c1 = arith.constant 1 : index
    %c0_12 = arith.constant 0 : index
    %c0_13 = arith.constant 0 : index
    %44 = vector.load %arg3[%c1, %c0_12, %c0_13] : memref<3x128x128xbf16, #tpu.memory_space<vmem>>, vector<1x128x128xbf16>
    %45 = vector.shape_cast %44 : vector<1x128x128xbf16> to vector<128x128xbf16>
    %cst_14 = arith.constant dense<0.000000e+00> : vector<48x128xf32>
    %46 = tpu.matmul %43, %45, %cst_14 {dimension_numbers = #tpu.dot_dimension_numbers<[1], [0], [0], [1], [0, 0, 1, 1], [], []>} : vector<48x128xbf16>, vector<128x128xbf16>, vector<48x128xf32> -> vector<48x128xf32>
    %47 = arith.addf %39, %46 : vector<48x128xf32>
    %c46_i32 = arith.constant 46 : i32
    %48 = tpu.dynamic_rotate %35 by %c46_i32 dim 0 : vector<48x128xf32>, i32 -> vector<48x128xf32>
    %49 = vector.broadcast %34 : vector<48x1xf32> to vector<48x128xf32>
    %50 = arith.mulf %48, %49 : vector<48x128xf32>
    %51 = arith.truncf %50 : vector<48x128xf32> to vector<48x128xbf16>
    %c2 = arith.constant 2 : index
    %c0_15 = arith.constant 0 : index
    %c0_16 = arith.constant 0 : index
    %52 = vector.load %arg3[%c2, %c0_15, %c0_16] : memref<3x128x128xbf16, #tpu.memory_space<vmem>>, vector<1x128x128xbf16>
    %53 = vector.shape_cast %52 : vector<1x128x128xbf16> to vector<128x128xbf16>
    %cst_17 = arith.constant dense<0.000000e+00> : vector<48x128xf32>
    %54 = tpu.matmul %51, %53, %cst_17 {dimension_numbers = #tpu.dot_dimension_numbers<[1], [0], [0], [1], [0, 0, 1, 1], [], []>} : vector<48x128xbf16>, vector<128x128xbf16>, vector<48x128xf32> -> vector<48x128xf32>
    %55 = arith.addf %47, %54 : vector<48x128xf32>
    %c0_18 = arith.constant 0 : index
    %c0_19 = arith.constant 0 : index
    %56 = vector.load %arg4[%c0_18, %c0_19] : memref<1x128xf32, #tpu.memory_space<vmem>>, vector<1x128xf32>
    %57 = vector.broadcast %56 : vector<1x128xf32> to vector<48x128xf32>
    %58 = arith.addf %55, %57 : vector<48x128xf32>
    %59 = arith.mulf %58, %9 : vector<48x128xf32>
    %60 = arith.truncf %59 : vector<48x128xf32> to vector<48x128xbf16>
    %c0_20 = arith.constant 0 : index
    %c0_21 = arith.constant 0 : index
    %c0_22 = arith.constant 0 : index
    %61 = vector.load %arg5[%c0_20, %c0_21, %c0_22] : memref<3x128x128xbf16, #tpu.memory_space<vmem>>, vector<1x128x128xbf16>
    %62 = vector.shape_cast %61 : vector<1x128x128xbf16> to vector<128x128xbf16>
    %cst_23 = arith.constant dense<0.000000e+00> : vector<48x128xf32>
    %63 = tpu.matmul %60, %62, %cst_23 {dimension_numbers = #tpu.dot_dimension_numbers<[1], [0], [0], [1], [0, 0, 1, 1], [], []>} : vector<48x128xbf16>, vector<128x128xbf16>, vector<48x128xf32> -> vector<48x128xf32>
    %c47_i32_24 = arith.constant 47 : i32
    %64 = tpu.dynamic_rotate %59 by %c47_i32_24 dim 0 : vector<48x128xf32>, i32 -> vector<48x128xf32>
    %65 = vector.broadcast %30 : vector<48x1xf32> to vector<48x128xf32>
    %66 = arith.mulf %64, %65 : vector<48x128xf32>
    %67 = arith.truncf %66 : vector<48x128xf32> to vector<48x128xbf16>
    %c1_25 = arith.constant 1 : index
    %c0_26 = arith.constant 0 : index
    %c0_27 = arith.constant 0 : index
    %68 = vector.load %arg5[%c1_25, %c0_26, %c0_27] : memref<3x128x128xbf16, #tpu.memory_space<vmem>>, vector<1x128x128xbf16>
    %69 = vector.shape_cast %68 : vector<1x128x128xbf16> to vector<128x128xbf16>
    %cst_28 = arith.constant dense<0.000000e+00> : vector<48x128xf32>
    %70 = tpu.matmul %67, %69, %cst_28 {dimension_numbers = #tpu.dot_dimension_numbers<[1], [0], [0], [1], [0, 0, 1, 1], [], []>} : vector<48x128xbf16>, vector<128x128xbf16>, vector<48x128xf32> -> vector<48x128xf32>
    %71 = arith.addf %63, %70 : vector<48x128xf32>
    %c46_i32_29 = arith.constant 46 : i32
    %72 = tpu.dynamic_rotate %59 by %c46_i32_29 dim 0 : vector<48x128xf32>, i32 -> vector<48x128xf32>
    %73 = vector.broadcast %34 : vector<48x1xf32> to vector<48x128xf32>
    %74 = arith.mulf %72, %73 : vector<48x128xf32>
    %75 = arith.truncf %74 : vector<48x128xf32> to vector<48x128xbf16>
    %c2_30 = arith.constant 2 : index
    %c0_31 = arith.constant 0 : index
    %c0_32 = arith.constant 0 : index
    %76 = vector.load %arg5[%c2_30, %c0_31, %c0_32] : memref<3x128x128xbf16, #tpu.memory_space<vmem>>, vector<1x128x128xbf16>
    %77 = vector.shape_cast %76 : vector<1x128x128xbf16> to vector<128x128xbf16>
    %cst_33 = arith.constant dense<0.000000e+00> : vector<48x128xf32>
    %78 = tpu.matmul %75, %77, %cst_33 {dimension_numbers = #tpu.dot_dimension_numbers<[1], [0], [0], [1], [0, 0, 1, 1], [], []>} : vector<48x128xbf16>, vector<128x128xbf16>, vector<48x128xf32> -> vector<48x128xf32>
    %79 = arith.addf %71, %78 : vector<48x128xf32>
    %c0_34 = arith.constant 0 : index
    %c0_35 = arith.constant 0 : index
    %80 = vector.load %arg6[%c0_34, %c0_35] : memref<1x128xf32, #tpu.memory_space<vmem>>, vector<1x128xf32>
    %81 = vector.broadcast %80 : vector<1x128xf32> to vector<48x128xf32>
    %82 = arith.addf %79, %81 : vector<48x128xf32>
    %83 = vector.shape_cast %82 : vector<48x128xf32> to vector<2x24x128xf32>
    %84 = arith.truncf %83 : vector<2x24x128xf32> to vector<2x24x128xbf16>
    %c0_36 = arith.constant 0 : index
    %c0_37 = arith.constant 0 : index
    %c0_38 = arith.constant 0 : index
    %85 = vector.load %arg7[%c0_36, %c0_37, %c0_38] : memref<2x24x128xbf16, #tpu.memory_space<vmem>>, vector<2x24x128xbf16>
    tpu.vector_store %arg7[%c0_36, %c0_37, %c0_38], %84 {strides = array<i32>} : memref<2x24x128xbf16, #tpu.memory_space<vmem>>, vector<2x24x128xbf16>,
    return
  }
  func.func @transform_0(%arg0: i32) -> (i32, i32, i32) {
    %c0_i32 = arith.constant 0 : i32
    %c0_i32_0 = arith.constant 0 : i32
    %c0_i32_1 = arith.constant 0 : i32
    return %arg0, %c0_i32, %c0_i32_0 : i32, i32, i32
  }
  func.func @transform_1(%arg0: i32) -> (i32, i32, i32) {
    %c0_i32 = arith.constant 0 : i32
    %c0_i32_0 = arith.constant 0 : i32
    %c0_i32_1 = arith.constant 0 : i32
    return %arg0, %c0_i32, %c0_i32_0 : i32, i32, i32
  }
  func.func @transform_2(%arg0: i32) -> (i32, i32, i32) {
    %c0_i32 = arith.constant 0 : i32
    %c0_i32_0 = arith.constant 0 : i32
    %c0_i32_1 = arith.constant 0 : i32
    %c0_i32_2 = arith.constant 0 : i32
    return %c0_i32, %c0_i32_0, %c0_i32_1 : i32, i32, i32
  }
  func.func @transform_3(%arg0: i32) -> (i32, i32) {
    %c0_i32 = arith.constant 0 : i32
    %c0_i32_0 = arith.constant 0 : i32
    %c0_i32_1 = arith.constant 0 : i32
    return %c0_i32, %c0_i32_0 : i32, i32
  }
  func.func @transform_4(%arg0: i32) -> (i32, i32, i32) {
    %c0_i32 = arith.constant 0 : i32
    %c0_i32_0 = arith.constant 0 : i32
    %c0_i32_1 = arith.constant 0 : i32
    %c0_i32_2 = arith.constant 0 : i32
    return %c0_i32, %c0_i32_0, %c0_i32_1 : i32, i32, i32
  }
  func.func @transform_5(%arg0: i32) -> (i32, i32) {
    %c0_i32 = arith.constant 0 : i32
    %c0_i32_0 = arith.constant 0 : i32
    %c0_i32_1 = arith.constant 0 : i32
    return %c0_i32, %c0_i32_0 : i32, i32
  }
  func.func @transform_6(%arg0: i32) -> (i32, i32, i32) {
    %c0_i32 = arith.constant 0 : i32
    %c0_i32_0 = arith.constant 0 : i32
    %c0_i32_1 = arith.constant 0 : i32
    return %arg0, %c0_i32, %c0_i32_0 : i32, i32, i32
  }
}

</mosaic_0001>

<llo_original>
// kernel: tpu_custom_call.1
$region0: #{tpu_custom_call.1}
  #allocation0 [shape = 'u32[]', space=smem, size = 0x4, offset = 0x4, fixed_abs, tag = 'smem constant byte address 0x4 - core index']
  #allocation1 [shape = 'u32[144,128]{1,0:T(1,128)}', space=vmem, size = 0x12000, scoped, tag = 'internal scratch']
  %s0 = inlined_call_operand.vmem [shape: bf16[4,24,48], index: 0, kind: input, shape index: {}]
  %s1 = inlined_call_operand.vmem [shape: bf16[4,24,1], index: 1, kind: input, shape index: {}]
  %s2 = inlined_call_operand.hbm [shape: bf16[3,128,128], index: 2, kind: input, shape index: {}]
  %s3 = inlined_call_operand.vmem [shape: f32[1,128], index: 3, kind: input, shape index: {}]
  %s4 = inlined_call_operand.hbm [shape: bf16[3,128,128], index: 4, kind: input, shape index: {}]
  %s5 = inlined_call_operand.vmem [shape: f32[1,128], index: 5, kind: input, shape index: {}]
  %s6 = inlined_call_operand.hbm [shape: bf16[4,24,128], index: 6, kind: output, shape index: {}]
  %s7 = sld [smem:[#allocation0]]
  $region65: #{tpu_custom_call.1} parent=0
    _
  %s9 = ssub.s32 1, %s7
  %s10 = scalar_select 0, %s9, %s7
  $region1: #{tpu_custom_call.1} parent=0
    #allocation2 [shape = 'u8[98304]{0}', space=vmem, size = 0x18000, scoped, tag = 'input window, operand 2, single buffered']
    #allocation3 [shape = 's32[2]{0}', space=sflag, size = 0x8, scoped, tag = 'scoped memory for tpu_custom_call.1']
    #allocation4 [shape = 's32[2]{0}', space=sflag, size = 0x8, scoped, tag = 'scoped memory for tpu_custom_call.1']
    #allocation5 [shape = 'u8[98304]{0}', space=vmem, size = 0x18000, scoped, tag = 'input window, operand 4, single buffered']
    #allocation6 [shape = 's32[1]{0}', space=sflag, size = 0x4, scoped, tag = 'scoped memory for tpu_custom_call.1']
    #allocation7 [shape = 'u8[24576]{0}', space=vmem, size = 0x6000, scoped, tag = 'output window, operand 0']
    %11 = vsyncpa [#allocation3], 0
    %12 = vsyncpa [#allocation6], 0
    %13 = vsyncpa [#allocation4], 0
    %s14 = scalar_lea.sflag [#allocation4], 1
    %15 = vsyncpa %s14, 0
    loop: start=0, step=1, limit=4
    $region2: #{tpu_custom_call.1} parent=1 // loop_pre_header
      _
    $region3: #{tpu_custom_call.1} parent=1 // loop_header
      %s17 = sphi 0, %s21
      %p18 = scmp.ge.s32.totalorder %s17, 4
      %s27 = sphi 0, %s29
      %s30 = sphi 0, %s27
      %s31 = sphi 0, %s30
      %s47 = sphi 0, %s31
      %s53 = sphi 0, %s55
      %s56 = sphi 0, %s53
      %s57 = sphi 0, %s56
      %s73 = sphi 0, %s57
      %s77 = sphi 0, %s77
      %s79 = sphi 0, %s77
      %s80 = sphi 0, %s79
      %s94 = sphi 0, %s80
      %s98 = sphi 0, %s98
      %s100 = sphi 0, %s98
      %s101 = sphi 0, %s100
      %s115 = sphi 0, %s101
      %s119 = sphi 0, %s119
      %s121 = sphi 0, %s119
      %s122 = sphi 0, %s121
      %s136 = sphi 0, %s122
      %s140 = sphi 0, %s140
      %s142 = sphi 0, %s140
      %s143 = sphi 0, %s142
      %s157 = sphi 0, %s143
      %s163 = sphi 0, %s165
      %s166 = sphi 0, %s163
      %s167 = sphi 0, %s166
      %s183 = sphi 0, %s167
    $region4: #{tpu_custom_call.1} parent=1 // loop_header_branch
      %20 = sbr.rel (%p18) target = $region8
    $region5: #{tpu_custom_call.1} parent=1 // loop_body
      %s22 = ssub.s32 %s17, 1
      %s23 = ssub.s32 %s17, 2
      %s24 = sadd.s32 %s17, 1
      %s25 = ssub.s32 %s17, %s24
      %p26 = scmp.eq.s32.totalorder %s25, 0
      %s28 = sadd.s32 %s27, 1
      %s29 = scalar_select %p26, %s27, %s28
      %p32 = pneg %p26
      %p33 = scmp.eq.s32.totalorder %s17, 1
      %p34 = por %p32, %p33
      %p35 = scmp.ne.s32.totalorder %s27, %s30
      %p36 = scmp.eq.s32.totalorder %s17, 0
      %p37 = por %p35, %p36
      %p38 = scmp.ne.s32.totalorder %s27, %s30
      %p39 = scmp.eq.s32.totalorder %s22, 1
      %p40 = por %p38, %p39
      %p41 = scmp.ne.s32.totalorder %s30, %s31
      %p42 = scmp.eq.s32.totalorder %s22, 0
      %p43 = por %p41, %p42
      %p44 = scmp.ne.s32.totalorder %s30, %s31
      %p45 = scmp.eq.s32.totalorder %s23, 1
      %p46 = por %p44, %p45
      %p48 = scmp.ne.s32.totalorder %s31, %s47
      %p49 = scmp.eq.s32.totalorder %s23, 0
      %p50 = por %p48, %p49
      %s51 = ssub.s32 %s17, %s24
      %p52 = scmp.eq.s32.totalorder %s51, 0
      %s54 = sadd.s32 %s53, 1
      %s55 = scalar_select %p52, %s53, %s54
      %p58 = pneg %p52
      %p59 = scmp.eq.s32.totalorder %s17, 1
      %p60 = por %p58, %p59
      %p61 = scmp.ne.s32.totalorder %s53, %s56
      %p62 = scmp.eq.s32.totalorder %s17, 0
      %p63 = por %p61, %p62
      %p64 = scmp.ne.s32.totalorder %s53, %s56
      %p65 = scmp.eq.s32.totalorder %s22, 1
      %p66 = por %p64, %p65
      %p67 = scmp.ne.s32.totalorder %s56, %s57
      %p68 = scmp.eq.s32.totalorder %s22, 0
      %p69 = por %p67, %p68
      %p70 = scmp.ne.s32.totalorder %s56, %s57
      %p71 = scmp.eq.s32.totalorder %s23, 1
      %p72 = por %p70, %p71
      %p74 = scmp.ne.s32.totalorder %s57, %s73
      %p75 = scmp.eq.s32.totalorder %s23, 0
      %p76 = por %p74, %p75
      %s78 = sadd.s32 %s77, 1
      %p81 = scmp.eq.s32.totalorder %s17, 1
      %p82 = scmp.ne.s32.totalorder %s77, %s79
      %p83 = scmp.eq.s32.totalorder %s17, 0
      %p84 = por %p82, %p83
      %p85 = scmp.ne.s32.totalorder %s77, %s79
      %p86 = scmp.eq.s32.totalorder %s22, 1
      %p87 = por %p85, %p86
      %p88 = scmp.ne.s32.totalorder %s79, %s80
      %p89 = scmp.eq.s32.totalorder %s22, 0
      %p90 = por %p88, %p89
      %p91 = scmp.ne.s32.totalorder %s79, %s80
      %p92 = scmp.eq.s32.totalorder %s23, 1
      %p93 = por %p91, %p92
      %p95 = scmp.ne.s32.totalorder %s80, %s94
      %p96 = scmp.eq.s32.totalorder %s23, 0
      %p97 = por %p95, %p96
      %s99 = sadd.s32 %s98, 1
      %p102 = scmp.eq.s32.totalorder %s17, 1
      %p103 = scmp.ne.s32.totalorder %s98, %s100
      %p104 = scmp.eq.s32.totalorder %s17, 0
      %p105 = por %p103, %p104
      %p106 = scmp.ne.s32.totalorder %s98, %s100
      %p107 = scmp.eq.s32.totalorder %s22, 1
      %p108 = por %p106, %p107
      %p109 = scmp.ne.s32.totalorder %s100, %s101
      %p110 = scmp.eq.s32.totalorder %s22, 0
      %p111 = por %p109, %p110
      %p112 = scmp.ne.s32.totalorder %s100, %s101
      %p113 = scmp.eq.s32.totalorder %s23, 1
      %p114 = por %p112, %p113
      %p116 = scmp.ne.s32.totalorder %s101, %s115
      %p117 = scmp.eq.s32.totalorder %s23, 0
      %p118 = por %p116, %p117
      %s120 = sadd.s32 %s119, 1
      %p123 = scmp.eq.s32.totalorder %s17, 1
      %p124 = scmp.ne.s32.totalorder %s119, %s121
      %p125 = scmp.eq.s32.totalorder %s17, 0
      %p126 = por %p124, %p125
      %p127 = scmp.ne.s32.totalorder %s119, %s121
      %p128 = scmp.eq.s32.totalorder %s22, 1
      %p129 = por %p127, %p128
      %p130 = scmp.ne.s32.totalorder %s121, %s122
      %p131 = scmp.eq.s32.totalorder %s22, 0
      %p132 = por %p130, %p131
      %p133 = scmp.ne.s32.totalorder %s121, %s122
      %p134 = scmp.eq.s32.totalorder %s23, 1
      %p135 = por %p133, %p134
      %p137 = scmp.ne.s32.totalorder %s122, %s136
      %p138 = scmp.eq.s32.totalorder %s23, 0
      %p139 = por %p137, %p138
      %s141 = sadd.s32 %s140, 1
      %p144 = scmp.eq.s32.totalorder %s17, 1
      %p145 = scmp.ne.s32.totalorder %s140, %s142
      %p146 = scmp.eq.s32.totalorder %s17, 0
      %p147 = por %p145, %p146
      %p148 = scmp.ne.s32.totalorder %s140, %s142
      %p149 = scmp.eq.s32.totalorder %s22, 1
      %p150 = por %p148, %p149
      %p151 = scmp.ne.s32.totalorder %s142, %s143
      %p152 = scmp.eq.s32.totalorder %s22, 0
      %p153 = por %p151, %p152
      %p154 = scmp.ne.s32.totalorder %s142, %s143
      %p155 = scmp.eq.s32.totalorder %s23, 1
      %p156 = por %p154, %p155
      %p158 = scmp.ne.s32.totalorder %s143, %s157
      %p159 = scmp.eq.s32.totalorder %s23, 0
      %p160 = por %p158, %p159
      %s161 = ssub.s32 %s17, %s24
      %p162 = scmp.eq.s32.totalorder %s161, 0
      %s164 = sadd.s32 %s163, 1
      %s165 = scalar_select %p162, %s163, %s164
      %p168 = pneg %p162
      %p169 = scmp.eq.s32.totalorder %s17, 1
      %p170 = por %p168, %p169
      %p171 = scmp.ne.s32.totalorder %s163, %s166
      %p172 = scmp.eq.s32.totalorder %s17, 0
      %p173 = por %p171, %p172
      %p174 = scmp.ne.s32.totalorder %s163, %s166
      %p175 = scmp.eq.s32.totalorder %s22, 1
      %p176 = por %p174, %p175
      %p177 = scmp.ne.s32.totalorder %s166, %s167
      %p178 = scmp.eq.s32.totalorder %s22, 0
      %p179 = por %p177, %p178
      %p180 = scmp.ne.s32.totalorder %s166, %s167
      %p181 = scmp.eq.s32.totalorder %s23, 1
      %p182 = por %p180, %p181
      %p184 = scmp.ne.s32.totalorder %s167, %s183
      %p185 = scmp.eq.s32.totalorder %s23, 0
      %p186 = por %p184, %p185
      %p187 = scmp.le.s32.totalorder 1, %s17
      %p188 = scmp.lt.s32.totalorder %s17, 3
      %p189 = pnand %p187, %p188
      %p190 = pneg %p189
      // Predicated region
      $region9: #{tpu_custom_call.1} parent=5 // pred_check
        _
      $region10: #{tpu_custom_call.1} parent=5 // pred_check_branch
        %192 = sbr.rel (%p189) target = $region12
      $region11: #{tpu_custom_call.1} parent=5 // pred_region
        %s193 = ssub.s32 %s17, 1
        // Predicated region
        $region13: #{tpu_custom_call.1} parent=11 // pred_check
          %p194 = pneg %p90
        $region14: #{tpu_custom_call.1} parent=11 // pred_check_branch
          %196 = sbr.rel (%p194) target = $region16
        $region15: #{tpu_custom_call.1} parent=11 // pred_region
          %s198 = ssub.s32 3072, 3072
          %199 = vsyncadd [#allocation3], %s198
          %s200 = sshll.u32 [#allocation2], 4
          %s201 = int_to_ptr.vmem [resolvable:$true] %s200
          %206 = dma.hbm_to_vmem [thread:$0]  %s2, 3072, %s201, [#allocation3], 64, 64, 4
        $region16: #{tpu_custom_call.1} parent=11 // pred_fallthru
          _
        // Predicated region
        $region17: #{tpu_custom_call.1} parent=11 // pred_check
          %p207 = pneg %p111
        $region18: #{tpu_custom_call.1} parent=11 // pred_check_branch
          %209 = sbr.rel (%p207) target = $region20
        $region19: #{tpu_custom_call.1} parent=11 // pred_region
          _
        $region20: #{tpu_custom_call.1} parent=11 // pred_fallthru
          _
        // Predicated region
        $region21: #{tpu_custom_call.1} parent=11 // pred_check
          %p210 = pneg %p132
        $region22: #{tpu_custom_call.1} parent=11 // pred_check_branch
          %212 = sbr.rel (%p210) target = $region24
        $region23: #{tpu_custom_call.1} parent=11 // pred_region
          %s214 = ssub.s32 3072, 3072
          %215 = vsyncadd [#allocation6], %s214
          %s216 = sshll.u32 [#allocation5], 4
          %s217 = int_to_ptr.vmem [resolvable:$true] %s216
          %222 = dma.hbm_to_vmem [thread:$0]  %s4, 3072, %s217, [#allocation6], 64, 64, 4
        $region24: #{tpu_custom_call.1} parent=11 // pred_fallthru
          _
        // Predicated region
        $region25: #{tpu_custom_call.1} parent=11 // pred_check
          %p223 = pneg %p153
        $region26: #{tpu_custom_call.1} parent=11 // pred_check_branch
          %225 = sbr.rel (%p223) target = $region28
        $region27: #{tpu_custom_call.1} parent=11 // pred_region
          _
        $region28: #{tpu_custom_call.1} parent=11 // pred_fallthru
          _
      $region12: #{tpu_custom_call.1} parent=5 // pred_fallthru
        _
      %p226 = scmp.lt.s32.totalorder %s17, 2
      // Predicated region
      $region29: #{tpu_custom_call.1} parent=5 // pred_check
        %p227 = pneg %p226
      $region30: #{tpu_custom_call.1} parent=5 // pred_check_branch
        %229 = sbr.rel (%p227) target = $region32
      $region31: #{tpu_custom_call.1} parent=5 // pred_region
        // Predicated region
        $region33: #{tpu_custom_call.1} parent=31 // pred_check
          %p230 = pneg %p37
        $region34: #{tpu_custom_call.1} parent=31 // pred_check_branch
          %232 = sbr.rel (%p230) target = $region36
        $region35: #{tpu_custom_call.1} parent=31 // pred_region
          %s233 = smul.u32 2, %s17
          %p234 = scmp.lt.s32.totalorder %s233, 3
          %s235 = scalar_select %p234, %s233, 3
          %s236 = smul.addr %s235, 3
          %s237 = smul.addr %s236, 4
          %s238 = scalar_lea.vmem %s0, %s237
          %s239 = smul.u32 2, %s17
        $region36: #{tpu_custom_call.1} parent=31 // pred_fallthru
          _
        // Predicated region
        $region37: #{tpu_custom_call.1} parent=31 // pred_check
          %p240 = pneg %p63
        $region38: #{tpu_custom_call.1} parent=31 // pred_check_branch
          %242 = sbr.rel (%p240) target = $region40
        $region39: #{tpu_custom_call.1} parent=31 // pred_region
          %s243 = smul.u32 2, %s17
          %p244 = scmp.lt.s32.totalorder %s243, 3
          %s245 = scalar_select %p244, %s243, 3
          %s246 = smul.addr %s245, 3
          %s247 = smul.addr %s246, 4
          %s248 = scalar_lea.vmem %s1, %s247
          %s249 = smul.u32 2, %s17
        $region40: #{tpu_custom_call.1} parent=31 // pred_fallthru
          _
      $region32: #{tpu_custom_call.1} parent=5 // pred_fallthru
        _
      %p250 = scmp.le.s32.totalorder 1, %s17
      %p251 = scmp.lt.s32.totalorder %s17, 3
      %p252 = pnand %p250, %p251
      %p253 = pneg %p252
      // Predicated region
      $region41: #{tpu_custom_call.1} parent=5 // pred_check
        _
      $region42: #{tpu_custom_call.1} parent=5 // pred_check_branch
        %255 = sbr.rel (%p252) target = $region44
      $region43: #{tpu_custom_call.1} parent=5 // pred_region
        %s256 = ssub.s32 %s17, 1
        // Predicated region
        $region45: #{tpu_custom_call.1} parent=43 // pred_check
          %p257 = pneg %p90
        $region46: #{tpu_custom_call.1} parent=43 // pred_check_branch
          %259 = sbr.rel (%p257) target = $region48
        $region47: #{tpu_custom_call.1} parent=43 // pred_region
          %260 = dma.done [#allocation3], 3072
        $region48: #{tpu_custom_call.1} parent=43 // pred_fallthru
          _
        // Predicated region
        $region49: #{tpu_custom_call.1} parent=43 // pred_check
          %p261 = pneg %p132
        $region50: #{tpu_custom_call.1} parent=43 // pred_check_branch
          %263 = sbr.rel (%p261) target = $region52
        $region51: #{tpu_custom_call.1} parent=43 // pred_region
          %264 = dma.done [#allocation6], 3072
        $region52: #{tpu_custom_call.1} parent=43 // pred_fallthru
          _
        %s265 = smul.u32 2, %s22
        %p266 = scmp.lt.s32.totalorder %s265, 3
        %s267 = scalar_select %p266, %s265, 3
        %s268 = smul.addr %s267, 3
        %s269 = smul.addr %s268, 4
        %s270 = scalar_lea.vmem %s0, %s269
        %p271 = pneg %p43
        %p272 = pneg %p40
        %s273 = smul.u32 2, %s22
        %p274 = scmp.lt.s32.totalorder %s273, 3
        %s275 = scalar_select %p274, %s273, 3
        %s276 = smul.addr %s275, 3
        %s277 = smul.addr %s276, 4
        %s278 = scalar_lea.vmem %s1, %s277
        %p279 = pneg %p69
        %p280 = pneg %p66
        %p281 = pneg %p90
        %p282 = pneg %p87
        %p283 = pneg %p111
        %p284 = pneg %p108
        %p285 = pneg %p132
        %p286 = pneg %p129
        %p287 = pneg %p153
        %p288 = pneg %p150
        %p289 = pneg %p179
        %p290 = pneg %p176
        %s291 = sand.u32 %s166, 1
        %s292 = scalar_lea.sflag [#allocation4], %s291
        %s293 = sand.u32 %s166, 1
        %s294 = smul.addr %s293, 24
        %s295 = scalar_lea.vmem [#allocation7], %s294
        %s296 = smul.u32 2, %s22
        %p297 = scmp.lt.s32.totalorder %s296, 3
        %s298 = scalar_select %p297, %s296, 3
        %s299 = smul.addr %s298, 3
        %s300 = smul.addr %s299, 4
        %s301 = scalar_lea.vmem %s0, %s300
        %s302 = smul.u32 2, %s22
        %s303 = smul.u32 2, %s22
        %p304 = scmp.lt.s32.totalorder %s303, 3
        %s305 = scalar_select %p304, %s303, 3
        %s306 = smul.addr %s305, 3
        %s307 = smul.addr %s306, 4
        %s308 = scalar_lea.vmem %s1, %s307
        %s309 = smul.u32 2, %s22
        %s310 = smul.u32 2, %s22
        %v312 = vld [vmem:[%s301] sm:$0xf]
        %v313 = vld [vmem:[%s301 + $0x4] sm:$0xf]
        %v314 = vld [vmem:[%s301 + $0x8] sm:$0xf]
        %v315 = vld [vmem:[%s301 + $0xc] sm:$0xf]
        %v316 = vld [vmem:[%s301 + $0x10] sm:$0xf]
        %v317 = vld [vmem:[%s301 + $0x14] sm:$0xf]
        %v318 = vunpack.c.l.bf16 %v312
        %v319 = vunpack.c.l.bf16 %v313
        %v320 = vunpack.c.l.bf16 %v314
        %v321 = vunpack.c.l.bf16 %v315
        %v322 = vunpack.c.l.bf16 %v316
        %v323 = vunpack.c.l.bf16 %v317
        %vm324 = vcmask 392192
        %v325 = vsel %vm324, %v318, 0.0
        %v326 = vsel %vm324, %v319, 0.0
        %v327 = vsel %vm324, %v320, 0.0
        %v328 = vsel %vm324, %v321, 0.0
        %v329 = vsel %vm324, %v322, 0.0
        %v330 = vsel %vm324, %v323, 0.0
        %v331 = vld [vmem:[%s308] sm:$0xf]
        %v332 = vld [vmem:[%s308 + $0x4] sm:$0xf]
        %v333 = vld [vmem:[%s308 + $0x8] sm:$0xf]
        %v334 = vld [vmem:[%s308 + $0xc] sm:$0xf]
        %v335 = vld [vmem:[%s308 + $0x10] sm:$0xf]
        %v336 = vld [vmem:[%s308 + $0x14] sm:$0xf]
        %v337 = vunpack.c.l.bf16 %v331
        %v338 = vunpack.c.l.bf16 %v332
        %v339 = vunpack.c.l.bf16 %v333
        %v340 = vunpack.c.l.bf16 %v334
        %v341 = vunpack.c.l.bf16 %v335
        %v342 = vunpack.c.l.bf16 %v336
        %344 = vset.pattern.permute.xlu0 0
        %345 = vperm.xlu0 %344, %v337
        %v346 = vpop.permute.xlu0 %345
        %349 = vset.pattern.permute.xlu0 0
        %350 = vperm.xlu0 %349, %v338
        %v351 = vpop.permute.xlu0 %350
        %354 = vset.pattern.permute.xlu0 0
        %355 = vperm.xlu0 %354, %v339
        %v356 = vpop.permute.xlu0 %355
        %359 = vset.pattern.permute.xlu0 0
        %360 = vperm.xlu0 %359, %v340
        %v361 = vpop.permute.xlu0 %360
        %364 = vset.pattern.permute.xlu0 0
        %365 = vperm.xlu0 %364, %v341
        %v366 = vpop.permute.xlu0 %365
        %369 = vset.pattern.permute.xlu0 0
        %370 = vperm.xlu0 %369, %v342
        %v371 = vpop.permute.xlu0 %370
        %v373 = vlaneseq
        %v374 = vshrl.u32 %v373, 7
        %v375 = vadd.s32 %v374, 8
        %v376 = vadd.s32 %v374, 16
        %v377 = vadd.s32 %v374, 24
        %v378 = vadd.s32 %v374, 32
        %v379 = vadd.s32 %v374, 40
        %vm380 = vcmp.lt.s32.totalorder %v374, 0
        %v381 = vsub.s32 0, %v374
        %v382 = vsel %vm380, %v381, %v374
        %v383 = vmul.u32.u64.compose %v382, 2863311531
        %v384 = vextract.low.u32 %v383
        %v385 = vextract.high.u32 %v383
        %v386 = vshrl.u32 %v385, 4
        %v387 = vmul.u32 %v386, 24
        %v388 = vsub.s32 %v382, %v387
        %v389 = vsub.s32 0, %v388
        %v390 = vsel %vm380, %v389, %v388
        %vm391 = vcmp.lt.s32.totalorder %v375, 0
        %v392 = vsub.s32 0, %v375
        %v393 = vsel %vm391, %v392, %v375
        %v394 = vmul.u32.u64.compose %v393, 2863311531
        %v395 = vextract.low.u32 %v394
        %v396 = vextract.high.u32 %v394
        %v397 = vshrl.u32 %v396, 4
        %v398 = vmul.u32 %v397, 24
        %v399 = vsub.s32 %v393, %v398
        %v400 = vsub.s32 0, %v399
        %v401 = vsel %vm391, %v400, %v399
        %vm402 = vcmp.lt.s32.totalorder %v376, 0
        %v403 = vsub.s32 0, %v376
        %v404 = vsel %vm402, %v403, %v376
        %v405 = vmul.u32.u64.compose %v404, 2863311531
        %v406 = vextract.low.u32 %v405
        %v407 = vextract.high.u32 %v405
        %v408 = vshrl.u32 %v407, 4
        %v409 = vmul.u32 %v408, 24
        %v410 = vsub.s32 %v404, %v409
        %v411 = vsub.s32 0, %v410
        %v412 = vsel %vm402, %v411, %v410
        %vm413 = vcmp.lt.s32.totalorder %v377, 0
        %v414 = vsub.s32 0, %v377
        %v415 = vsel %vm413, %v414, %v377
        %v416 = vmul.u32.u64.compose %v415, 2863311531
        %v417 = vextract.low.u32 %v416
        %v418 = vextract.high.u32 %v416
        %v419 = vshrl.u32 %v418, 4
        %v420 = vmul.u32 %v419, 24
        %v421 = vsub.s32 %v415, %v420
        %v422 = vsub.s32 0, %v421
        %v423 = vsel %vm413, %v422, %v421
        %vm424 = vcmp.lt.s32.totalorder %v378, 0
        %v425 = vsub.s32 0, %v378
        %v426 = vsel %vm424, %v425, %v378
        %v427 = vmul.u32.u64.compose %v426, 2863311531
        %v428 = vextract.low.u32 %v427
        %v429 = vextract.high.u32 %v427
        %v430 = vshrl.u32 %v429, 4
        %v431 = vmul.u32 %v430, 24
        %v432 = vsub.s32 %v426, %v431
        %v433 = vsub.s32 0, %v432
        %v434 = vsel %vm424, %v433, %v432
        %vm435 = vcmp.lt.s32.totalorder %v379, 0
        %v436 = vsub.s32 0, %v379
        %v437 = vsel %vm435, %v436, %v379
        %v438 = vmul.u32.u64.compose %v437, 2863311531
        %v439 = vextract.low.u32 %v438
        %v440 = vextract.high.u32 %v438
        %v441 = vshrl.u32 %v440, 4
        %v442 = vmul.u32 %v441, 24
        %v443 = vsub.s32 %v437, %v442
        %v444 = vsub.s32 0, %v443
        %v445 = vsel %vm435, %v444, %v443
        %vm446 = vcmp.ne.s32.totalorder %v390, 0
        %vm447 = vcmp.ne.s32.totalorder %v401, 0
        %vm448 = vcmp.ne.s32.totalorder %v412, 0
        %vm449 = vcmp.ne.s32.totalorder %v423, 0
        %vm450 = vcmp.ne.s32.totalorder %v434, 0
        %vm451 = vcmp.ne.s32.totalorder %v445, 0
        %vm452 = vcmp.lt.s32.totalorder %v390, 0
        %vm453 = vcmp.lt.s32.totalorder %v401, 0
        %vm454 = vcmp.lt.s32.totalorder %v412, 0
        %vm455 = vcmp.lt.s32.totalorder %v423, 0
        %vm456 = vcmp.lt.s32.totalorder %v434, 0
        %vm457 = vcmp.lt.s32.totalorder %v445, 0
        %vm458 = vmand %vm452, %vm446
        %vm459 = vmand %vm453, %vm447
        %vm460 = vmand %vm454, %vm448
        %vm461 = vmand %vm455, %vm449
        %vm462 = vmand %vm456, %vm450
        %vm463 = vmand %vm457, %vm451
        %v464 = vadd.s32 %v390, 24
        %v465 = vadd.s32 %v401, 24
        %v466 = vadd.s32 %v412, 24
        %v467 = vadd.s32 %v423, 24
        %v468 = vadd.s32 %v434, 24
        %v469 = vadd.s32 %v445, 24
        %v470 = vsel %vm458, %v464, %v390
        %v471 = vsel %vm459, %v465, %v401
        %v472 = vsel %vm460, %v466, %v412
        %v473 = vsel %vm461, %v467, %v423
        %v474 = vsel %vm462, %v468, %v434
        %v475 = vsel %vm463, %v469, %v445
        %vm476 = vcmp.lt.s32.totalorder %v470, 23
        %vm477 = vcmp.lt.s32.totalorder %v471, 23
        %vm478 = vcmp.lt.s32.totalorder %v472, 23
        %vm479 = vcmp.lt.s32.totalorder %v473, 23
        %vm480 = vcmp.lt.s32.totalorder %v474, 23
        %vm481 = vcmp.lt.s32.totalorder %v475, 23
        %v482 = vsel %vm476, 1, 0
        %v483 = vsel %vm477, 1, 0
        %v484 = vsel %vm478, 1, 0
        %v485 = vsel %vm479, 1, 0
        %v486 = vsel %vm480, 1, 0
        %v487 = vsel %vm481, 1, 0
        %v488 = vcvt.s32.f32 %v482
        %v489 = vcvt.s32.f32 %v483
        %v490 = vcvt.s32.f32 %v484
        %v491 = vcvt.s32.f32 %v485
        %v492 = vcvt.s32.f32 %v486
        %v493 = vcvt.s32.f32 %v487
        %vm494 = vcmp.lt.s32.totalorder %v470, 22
        %vm495 = vcmp.lt.s32.totalorder %v471, 22
        %vm496 = vcmp.lt.s32.totalorder %v472, 22
        %vm497 = vcmp.lt.s32.totalorder %v473, 22
        %vm498 = vcmp.lt.s32.totalorder %v474, 22
        %vm499 = vcmp.lt.s32.totalorder %v475, 22
        %v500 = vsel %vm494, 1, 0
        %v501 = vsel %vm495, 1, 0
        %v502 = vsel %vm496, 1, 0
        %v503 = vsel %vm497, 1, 0
        %v504 = vsel %vm498, 1, 0
        %v505 = vsel %vm499, 1, 0
        %v506 = vcvt.s32.f32 %v500
        %v507 = vcvt.s32.f32 %v501
        %v508 = vcvt.s32.f32 %v502
        %v509 = vcvt.s32.f32 %v503
        %v510 = vcvt.s32.f32 %v504
        %v511 = vcvt.s32.f32 %v505
        %v512 = vmul.f32 %v325, %v346
        %v513 = vmul.f32 %v326, %v351
        %v514 = vmul.f32 %v327, %v356
        %v515 = vmul.f32 %v328, %v361
        %v516 = vmul.f32 %v329, %v366
        %v517 = vmul.f32 %v330, %v371
        %v518 = vpack.c.bf16 %v513, %v512
        %v519 = vpack.c.bf16 %v515, %v514
        %v520 = vpack.c.bf16 %v517, %v516
        %v521 = vld [vmem:[#allocation2] sm:$0xf]
        %v522 = vld [vmem:[#allocation2 + $0x4] sm:$0xf]
        %v523 = vld [vmem:[#allocation2 + $0x8] sm:$0xf]
        %v524 = vld [vmem:[#allocation2 + $0xc] sm:$0xf]
        %v525 = vld [vmem:[#allocation2 + $0x10] sm:$0xf]
        %v526 = vld [vmem:[#allocation2 + $0x14] sm:$0xf]
        %v527 = vld [vmem:[#allocation2 + $0x18] sm:$0xf]
        %v528 = vld [vmem:[#allocation2 + $0x1c] sm:$0xf]
        %v529 = vld [vmem:[#allocation2 + $0x20] sm:$0xf]
        %v530 = vld [vmem:[#allocation2 + $0x24] sm:$0xf]
        %v531 = vld [vmem:[#allocation2 + $0x28] sm:$0xf]
        %v532 = vld [vmem:[#allocation2 + $0x2c] sm:$0xf]
        %v533 = vld [vmem:[#allocation2 + $0x30] sm:$0xf]
        %v534 = vld [vmem:[#allocation2 + $0x34] sm:$0xf]
        %v535 = vld [vmem:[#allocation2 + $0x38] sm:$0xf]
        %v536 = vld [vmem:[#allocation2 + $0x3c] sm:$0xf]
        %v537 = vrot.slane %v512, 1
        %v538 = vrot.slane %v513, 1
        %v539 = vrot.slane %v514, 1
        %v540 = vrot.slane %v515, 1
        %v541 = vrot.slane %v516, 1
        %v542 = vrot.slane %v517, 1
        %vm543 = vcmp.lt.s32.totalorder %v374, 7
        %v544 = vsel %vm543, %v541, %v542
        %v545 = vsel %vm543, %v540, %v541
        %v546 = vsel %vm543, %v539, %v540
        %v547 = vsel %vm543, %v538, %v539
        %v548 = vsel %vm543, %v537, %v538
        %v549 = vsel %vm543, %v542, %v537
        %v550 = vmul.f32 %v548, %v488
        %v551 = vmul.f32 %v547, %v489
        %v552 = vmul.f32 %v546, %v490
        %v553 = vmul.f32 %v545, %v491
        %v554 = vmul.f32 %v544, %v492
        %v555 = vmul.f32 %v549, %v493
        %v556 = vpack.c.bf16 %v551, %v550
        %v557 = vpack.c.bf16 %v553, %v552
        %v558 = vpack.c.bf16 %v555, %v554
        %s559 = scalar_lea.vmem [#allocation2], 64
        %v560 = vld [vmem:[%s559] sm:$0xf]
        %v561 = vld [vmem:[%s559 + $0x4] sm:$0xf]
        %v562 = vld [vmem:[%s559 + $0x8] sm:$0xf]
        %v563 = vld [vmem:[%s559 + $0xc] sm:$0xf]
        %v564 = vld [vmem:[%s559 + $0x10] sm:$0xf]
        %v565 = vld [vmem:[%s559 + $0x14] sm:$0xf]
        %v566 = vld [vmem:[%s559 + $0x18] sm:$0xf]
        %v567 = vld [vmem:[%s559 + $0x1c] sm:$0xf]
        %v568 = vld [vmem:[%s559 + $0x20] sm:$0xf]
        %v569 = vld [vmem:[%s559 + $0x24] sm:$0xf]
        %v570 = vld [vmem:[%s559 + $0x28] sm:$0xf]
        %v571 = vld [vmem:[%s559 + $0x2c] sm:$0xf]
        %v572 = vld [vmem:[%s559 + $0x30] sm:$0xf]
        %v573 = vld [vmem:[%s559 + $0x34] sm:$0xf]
        %v574 = vld [vmem:[%s559 + $0x38] sm:$0xf]
        %v575 = vld [vmem:[%s559 + $0x3c] sm:$0xf]
        %v592 = vunpack.c.l.b16 %v560
        %v593 = vunpack.c.l.b16 %v561
        %v594 = vunpack.c.l.b16 %v562
        %v595 = vunpack.c.l.b16 %v563
        %v596 = vunpack.c.l.b16 %v564
        %v597 = vunpack.c.l.b16 %v565
        %v598 = vunpack.c.l.b16 %v566
        %v599 = vunpack.c.l.b16 %v567
        %v600 = vunpack.c.l.b16 %v568
        %v601 = vunpack.c.l.b16 %v569
        %v602 = vunpack.c.l.b16 %v570
        %v603 = vunpack.c.l.b16 %v571
        %v604 = vunpack.c.l.b16 %v572
        %v605 = vunpack.c.l.b16 %v573
        %v606 = vunpack.c.l.b16 %v574
        %v607 = vunpack.c.l.b16 %v575
        %v608 = vpack.c.b16 %v593, %v592
        %v609 = vpack.c.b16 %v595, %v594
        %v610 = vpack.c.b16 %v597, %v596
        %v611 = vpack.c.b16 %v599, %v598
        %v612 = vpack.c.b16 %v601, %v600
        %v613 = vpack.c.b16 %v603, %v602
        %v614 = vpack.c.b16 %v605, %v604
        %v615 = vpack.c.b16 %v607, %v606
        %624 = vmatprep.subr.bf16.mxu0 0
        %625 = vmatpush1.bf16.msra.mxu0 %v615
        %626 = vmatprep.subr.bf16.mxu0 0
        %627 = vmatpush1.bf16.msra.mxu0 %v614
        %628 = vmatprep.subr.bf16.mxu0 0
        %629 = vmatpush1.bf16.msra.mxu0 %v613
        %630 = vmatprep.subr.bf16.mxu0 0
        %631 = vmatpush1.bf16.msra.mxu0 %v612
        %632 = vmatprep.subr.bf16.mxu0 0
        %633 = vmatpush1.bf16.msra.mxu0 %v611
        %634 = vmatprep.subr.bf16.mxu0 0
        %635 = vmatpush1.bf16.msra.mxu0 %v610
        %636 = vmatprep.subr.bf16.mxu0 0
        %637 = vmatpush1.bf16.msra.mxu0 %v609
        %638 = vmatprep.subr.bf16.mxu0 0
        %639 = vmatpush1.bf16.msra.mxu0 %v608
        %640 = vmatprep.subr.bf16.mxu0 0
        %641 = vmatpush2.bf16.msra.mxu0 0
        %642 = vmatprep.subr.bf16.mxu0 0
        %643 = vmatpush2.bf16.msra.mxu0 0
        %644 = vmatprep.subr.bf16.mxu0 0
        %645 = vmatpush2.bf16.msra.mxu0 0
        %646 = vmatprep.subr.bf16.mxu0 0
        %647 = vmatpush2.bf16.msra.mxu0 0
        %648 = vmatprep.subr.bf16.mxu0 0
        %649 = vmatpush2.bf16.msra.mxu0 0
        %650 = vmatprep.subr.bf16.mxu0 0
        %651 = vmatpush2.bf16.msra.mxu0 0
        %652 = vmatprep.subr.bf16.mxu0 0
        %653 = vmatpush2.bf16.msra.mxu0 0
        %654 = vmatprep.subr.bf16.mxu0 0
        %655 = vmatpush2.bf16.msra.mxu0 0
        %656 = vmatprep.mubr.bf16.mxu0 0
        %657 = vmatmul.mubr.bf16.gmra.mxu0 %v556
        %v658 = vpop.f32.mrf.mxu0
        %v659 = vadd.f32 0.0, %v658
        %v660 = vpop.f32.mrf.mxu0
        %v661 = vpop.f32.mrf.mxu0
        %v662 = vadd.f32 0.0, %v661
        %v663 = vpop.f32.mrf.mxu0
        %664 = vmatprep.mubr.bf16.mxu0 0
        %665 = vmatmul.mubr.bf16.gmra.mxu0 %v557
        %v666 = vpop.f32.mrf.mxu0
        %v667 = vadd.f32 0.0, %v666
        %v668 = vpop.f32.mrf.mxu0
        %v669 = vpop.f32.mrf.mxu0
        %v670 = vadd.f32 0.0, %v669
        %v671 = vpop.f32.mrf.mxu0
        %672 = vmatprep.mubr.bf16.mxu0 0
        %673 = vmatmul.mubr.bf16.gmra.mxu0 %v558
        %v674 = vpop.f32.mrf.mxu0
        %v675 = vadd.f32 0.0, %v674
        %v676 = vpop.f32.mrf.mxu0
        %v677 = vpop.f32.mrf.mxu0
        %v678 = vadd.f32 0.0, %v677
        %v679 = vpop.f32.mrf.mxu0
        %680 = vdwg.mxu0
        %v697 = vunpack.c.l.b16 %v521
        %v698 = vunpack.c.l.b16 %v522
        %v699 = vunpack.c.l.b16 %v523
        %v700 = vunpack.c.l.b16 %v524
        %v701 = vunpack.c.l.b16 %v525
        %v702 = vunpack.c.l.b16 %v526
        %v703 = vunpack.c.l.b16 %v527
        %v704 = vunpack.c.l.b16 %v528
        %v705 = vunpack.c.l.b16 %v529
        %v706 = vunpack.c.l.b16 %v530
        %v707 = vunpack.c.l.b16 %v531
        %v708 = vunpack.c.l.b16 %v532
        %v709 = vunpack.c.l.b16 %v533
        %v710 = vunpack.c.l.b16 %v534
        %v711 = vunpack.c.l.b16 %v535
        %v712 = vunpack.c.l.b16 %v536
        %v713 = vpack.c.b16 %v698, %v697
        %v714 = vpack.c.b16 %v700, %v699
        %v715 = vpack.c.b16 %v702, %v701
        %v716 = vpack.c.b16 %v704, %v703
        %v717 = vpack.c.b16 %v706, %v705
        %v718 = vpack.c.b16 %v708, %v707
        %v719 = vpack.c.b16 %v710, %v709
        %v720 = vpack.c.b16 %v712, %v711
        %729 = vmatprep.subr.bf16.mxu0 0
        %730 = vmatpush1.bf16.msra.mxu0 %v720
        %731 = vmatprep.subr.bf16.mxu0 0
        %732 = vmatpush1.bf16.msra.mxu0 %v719
        %733 = vmatprep.subr.bf16.mxu0 0
        %734 = vmatpush1.bf16.msra.mxu0 %v718
        %735 = vmatprep.subr.bf16.mxu0 0
        %736 = vmatpush1.bf16.msra.mxu0 %v717
        %737 = vmatprep.subr.bf16.mxu0 0
        %738 = vmatpush1.bf16.msra.mxu0 %v716
        %739 = vmatprep.subr.bf16.mxu0 0
        %740 = vmatpush1.bf16.msra.mxu0 %v715
        %741 = vmatprep.subr.bf16.mxu0 0
        %742 = vmatpush1.bf16.msra.mxu0 %v714
        %743 = vmatprep.subr.bf16.mxu0 0
        %744 = vmatpush1.bf16.msra.mxu0 %v713
        %745 = vmatprep.subr.bf16.mxu0 0
        %746 = vmatpush2.bf16.msra.mxu0 0
        %747 = vmatprep.subr.bf16.mxu0 0
        %748 = vmatpush2.bf16.msra.mxu0 0
        %749 = vmatprep.subr.bf16.mxu0 0
        %750 = vmatpush2.bf16.msra.mxu0 0
        %751 = vmatprep.subr.bf16.mxu0 0
        %752 = vmatpush2.bf16.msra.mxu0 0
        %753 = vmatprep.subr.bf16.mxu0 0
        %754 = vmatpush2.bf16.msra.mxu0 0
        %755 = vmatprep.subr.bf16.mxu0 0
        %756 = vmatpush2.bf16.msra.mxu0 0
        %757 = vmatprep.subr.bf16.mxu0 0
        %758 = vmatpush2.bf16.msra.mxu0 0
        %759 = vmatprep.subr.bf16.mxu0 0
        %760 = vmatpush2.bf16.msra.mxu0 0
        %761 = vmatprep.mubr.bf16.mxu0 0
        %762 = vmatmul.mubr.bf16.gmra.mxu0 %v518
        %v763 = vpop.f32.mrf.mxu0
        %v764 = vadd.f32 %v659, %v763
        %v765 = vpop.f32.mrf.mxu0
        %v766 = vpop.f32.mrf.mxu0
        %v767 = vadd.f32 %v662, %v766
        %v768 = vpop.f32.mrf.mxu0
        %769 = vmatprep.mubr.bf16.mxu0 0
        %770 = vmatmul.mubr.bf16.gmra.mxu0 %v519
        %v771 = vpop.f32.mrf.mxu0
        %v772 = vadd.f32 %v667, %v771
        %v773 = vpop.f32.mrf.mxu0
        %v774 = vpop.f32.mrf.mxu0
        %v775 = vadd.f32 %v670, %v774
        %v776 = vpop.f32.mrf.mxu0
        %777 = vmatprep.mubr.bf16.mxu0 0
        %778 = vmatmul.mubr.bf16.gmra.mxu0 %v520
        %v779 = vpop.f32.mrf.mxu0
        %v780 = vadd.f32 %v675, %v779
        %v781 = vpop.f32.mrf.mxu0
        %v782 = vpop.f32.mrf.mxu0
        %v783 = vadd.f32 %v678, %v782
        %v784 = vpop.f32.mrf.mxu0
        %785 = vdwg.mxu0
        %v786 = vrot.slane %v512, 2
        %v787 = vrot.slane %v513, 2
        %v788 = vrot.slane %v514, 2
        %v789 = vrot.slane %v515, 2
        %v790 = vrot.slane %v516, 2
        %v791 = vrot.slane %v517, 2
        %vm792 = vcmp.lt.s32.totalorder %v374, 6
        %v793 = vsel %vm792, %v790, %v791
        %v794 = vsel %vm792, %v789, %v790
        %v795 = vsel %vm792, %v788, %v789
        %v796 = vsel %vm792, %v787, %v788
        %v797 = vsel %vm792, %v786, %v787
        %v798 = vsel %vm792, %v791, %v786
        %v799 = vmul.f32 %v797, %v506
        %v800 = vmul.f32 %v796, %v507
        %v801 = vmul.f32 %v795, %v508
        %v802 = vmul.f32 %v794, %v509
        %v803 = vmul.f32 %v793, %v510
        %v804 = vmul.f32 %v798, %v511
        %v805 = vpack.c.bf16 %v800, %v799
        %v806 = vpack.c.bf16 %v802, %v801
        %v807 = vpack.c.bf16 %v804, %v803
        %s808 = scalar_lea.vmem [#allocation2], 128
        %v809 = vld [vmem:[%s808] sm:$0xf]
        %v810 = vld [vmem:[%s808 + $0x4] sm:$0xf]
        %v811 = vld [vmem:[%s808 + $0x8] sm:$0xf]
        %v812 = vld [vmem:[%s808 + $0xc] sm:$0xf]
        %v813 = vld [vmem:[%s808 + $0x10] sm:$0xf]
        %v814 = vld [vmem:[%s808 + $0x14] sm:$0xf]
        %v815 = vld [vmem:[%s808 + $0x18] sm:$0xf]
        %v816 = vld [vmem:[%s808 + $0x1c] sm:$0xf]
        %v817 = vld [vmem:[%s808 + $0x20] sm:$0xf]
        %v818 = vld [vmem:[%s808 + $0x24] sm:$0xf]
        %v819 = vld [vmem:[%s808 + $0x28] sm:$0xf]
        %v820 = vld [vmem:[%s808 + $0x2c] sm:$0xf]
        %v821 = vld [vmem:[%s808 + $0x30] sm:$0xf]
        %v822 = vld [vmem:[%s808 + $0x34] sm:$0xf]
        %v823 = vld [vmem:[%s808 + $0x38] sm:$0xf]
        %v824 = vld [vmem:[%s808 + $0x3c] sm:$0xf]
        %v841 = vunpack.c.l.b16 %v809
        %v842 = vunpack.c.l.b16 %v810
        %v843 = vunpack.c.l.b16 %v811
        %v844 = vunpack.c.l.b16 %v812
        %v845 = vunpack.c.l.b16 %v813
        %v846 = vunpack.c.l.b16 %v814
        %v847 = vunpack.c.l.b16 %v815
        %v848 = vunpack.c.l.b16 %v816
        %v849 = vunpack.c.l.b16 %v817
        %v850 = vunpack.c.l.b16 %v818
        %v851 = vunpack.c.l.b16 %v819
        %v852 = vunpack.c.l.b16 %v820
        %v853 = vunpack.c.l.b16 %v821
        %v854 = vunpack.c.l.b16 %v822
        %v855 = vunpack.c.l.b16 %v823
        %v856 = vunpack.c.l.b16 %v824
        %v857 = vpack.c.b16 %v842, %v841
        %v858 = vpack.c.b16 %v844, %v843
        %v859 = vpack.c.b16 %v846, %v845
        %v860 = vpack.c.b16 %v848, %v847
        %v861 = vpack.c.b16 %v850, %v849
        %v862 = vpack.c.b16 %v852, %v851
        %v863 = vpack.c.b16 %v854, %v853
        %v864 = vpack.c.b16 %v856, %v855
        %873 = vmatprep.subr.bf16.mxu0 0
        %874 = vmatpush1.bf16.msra.mxu0 %v864
        %875 = vmatprep.subr.bf16.mxu0 0
        %876 = vmatpush1.bf16.msra.mxu0 %v863
        %877 = vmatprep.subr.bf16.mxu0 0
        %878 = vmatpush1.bf16.msra.mxu0 %v862
        %879 = vmatprep.subr.bf16.mxu0 0
        %880 = vmatpush1.bf16.msra.mxu0 %v861
        %881 = vmatprep.subr.bf16.mxu0 0
        %882 = vmatpush1.bf16.msra.mxu0 %v860
        %883 = vmatprep.subr.bf16.mxu0 0
        %884 = vmatpush1.bf16.msra.mxu0 %v859
        %885 = vmatprep.subr.bf16.mxu0 0
        %886 = vmatpush1.bf16.msra.mxu0 %v858
        %887 = vmatprep.subr.bf16.mxu0 0
        %888 = vmatpush1.bf16.msra.mxu0 %v857
        %889 = vmatprep.subr.bf16.mxu0 0
        %890 = vmatpush2.bf16.msra.mxu0 0
        %891 = vmatprep.subr.bf16.mxu0 0
        %892 = vmatpush2.bf16.msra.mxu0 0
        %893 = vmatprep.subr.bf16.mxu0 0
        %894 = vmatpush2.bf16.msra.mxu0 0
        %895 = vmatprep.subr.bf16.mxu0 0
        %896 = vmatpush2.bf16.msra.mxu0 0
        %897 = vmatprep.subr.bf16.mxu0 0
        %898 = vmatpush2.bf16.msra.mxu0 0
        %899 = vmatprep.subr.bf16.mxu0 0
        %900 = vmatpush2.bf16.msra.mxu0 0
        %901 = vmatprep.subr.bf16.mxu0 0
        %902 = vmatpush2.bf16.msra.mxu0 0
        %903 = vmatprep.subr.bf16.mxu0 0
        %904 = vmatpush2.bf16.msra.mxu0 0
        %905 = vmatprep.mubr.bf16.mxu0 0
        %906 = vmatmul.mubr.bf16.gmra.mxu0 %v805
        %v907 = vpop.f32.mrf.mxu0
        %v908 = vadd.f32 0.0, %v907
        %v909 = vpop.f32.mrf.mxu0
        %v910 = vpop.f32.mrf.mxu0
        %v911 = vadd.f32 0.0, %v910
        %v912 = vpop.f32.mrf.mxu0
        %913 = vmatprep.mubr.bf16.mxu0 0
        %914 = vmatmul.mubr.bf16.gmra.mxu0 %v806
        %v915 = vpop.f32.mrf.mxu0
        %v916 = vadd.f32 0.0, %v915
        %v917 = vpop.f32.mrf.mxu0
        %v918 = vpop.f32.mrf.mxu0
        %v919 = vadd.f32 0.0, %v918
        %v920 = vpop.f32.mrf.mxu0
        %921 = vmatprep.mubr.bf16.mxu0 0
        %922 = vmatmul.mubr.bf16.gmra.mxu0 %v807
        %v923 = vpop.f32.mrf.mxu0
        %v924 = vadd.f32 0.0, %v923
        %v925 = vpop.f32.mrf.mxu0
        %v926 = vpop.f32.mrf.mxu0
        %v927 = vadd.f32 0.0, %v926
        %v928 = vpop.f32.mrf.mxu0
        %929 = vdwg.mxu0
        %v930 = vadd.f32 %v764, %v908
        %v931 = vadd.f32 %v767, %v911
        %v932 = vadd.f32 %v772, %v916
        %v933 = vadd.f32 %v775, %v919
        %v934 = vadd.f32 %v780, %v924
        %v935 = vadd.f32 %v783, %v927
        %v936 = vld [vmem:[%s3] sm:$0x1]
        %v938 = vlaneseq
        %v939 = vshrl.u32 %v938, 7
        %v940 = vsub.s32 0, %v939
        %v941 = vrot.slane %v936, %v940
        %v943 = vadd.f32 %v930, %v941
        %v944 = vadd.f32 %v931, %v941
        %v945 = vadd.f32 %v932, %v941
        %v946 = vadd.f32 %v933, %v941
        %v947 = vadd.f32 %v934, %v941
        %v948 = vadd.f32 %v935, %v941
        %v949 = vmul.f32 %v943, %v346
        %v950 = vmul.f32 %v944, %v351
        %v951 = vmul.f32 %v945, %v356
        %v952 = vmul.f32 %v946, %v361
        %v953 = vmul.f32 %v947, %v366
        %v954 = vmul.f32 %v948, %v371
        %v955 = vpack.c.bf16 %v950, %v949
        %v956 = vpack.c.bf16 %v952, %v951
        %v957 = vpack.c.bf16 %v954, %v953
        %v958 = vld [vmem:[#allocation5] sm:$0xf]
        %v959 = vld [vmem:[#allocation5 + $0x4] sm:$0xf]
        %v960 = vld [vmem:[#allocation5 + $0x8] sm:$0xf]
        %v961 = vld [vmem:[#allocation5 + $0xc] sm:$0xf]
        %v962 = vld [vmem:[#allocation5 + $0x10] sm:$0xf]
        %v963 = vld [vmem:[#allocation5 + $0x14] sm:$0xf]
        %v964 = vld [vmem:[#allocation5 + $0x18] sm:$0xf]
        %v965 = vld [vmem:[#allocation5 + $0x1c] sm:$0xf]
        %v966 = vld [vmem:[#allocation5 + $0x20] sm:$0xf]
        %v967 = vld [vmem:[#allocation5 + $0x24] sm:$0xf]
        %v968 = vld [vmem:[#allocation5 + $0x28] sm:$0xf]
        %v969 = vld [vmem:[#allocation5 + $0x2c] sm:$0xf]
        %v970 = vld [vmem:[#allocation5 + $0x30] sm:$0xf]
        %v971 = vld [vmem:[#allocation5 + $0x34] sm:$0xf]
        %v972 = vld [vmem:[#allocation5 + $0x38] sm:$0xf]
        %v973 = vld [vmem:[#allocation5 + $0x3c] sm:$0xf]
        %v974 = vrot.slane %v949, 1
        %v975 = vrot.slane %v950, 1
        %v976 = vrot.slane %v951, 1
        %v977 = vrot.slane %v952, 1
        %v978 = vrot.slane %v953, 1
        %v979 = vrot.slane %v954, 1
        %v980 = vsel %vm543, %v978, %v979
        %v981 = vsel %vm543, %v977, %v978
        %v982 = vsel %vm543, %v976, %v977
        %v983 = vsel %vm543, %v975, %v976
        %v984 = vsel %vm543, %v974, %v975
        %v985 = vsel %vm543, %v979, %v974
        %v986 = vmul.f32 %v984, %v488
        %v987 = vmul.f32 %v983, %v489
        %v988 = vmul.f32 %v982, %v490
        %v989 = vmul.f32 %v981, %v491
        %v990 = vmul.f32 %v980, %v492
        %v991 = vmul.f32 %v985, %v493
        %v992 = vpack.c.bf16 %v987, %v986
        %v993 = vpack.c.bf16 %v989, %v988
        %v994 = vpack.c.bf16 %v991, %v990
        %s995 = scalar_lea.vmem [#allocation5], 64
        %v996 = vld [vmem:[%s995] sm:$0xf]
        %v997 = vld [vmem:[%s995 + $0x4] sm:$0xf]
        %v998 = vld [vmem:[%s995 + $0x8] sm:$0xf]
        %v999 = vld [vmem:[%s995 + $0xc] sm:$0xf]
        %v1000 = vld [vmem:[%s995 + $0x10] sm:$0xf]
        %v1001 = vld [vmem:[%s995 + $0x14] sm:$0xf]
        %v1002 = vld [vmem:[%s995 + $0x18] sm:$0xf]
        %v1003 = vld [vmem:[%s995 + $0x1c] sm:$0xf]
        %v1004 = vld [vmem:[%s995 + $0x20] sm:$0xf]
        %v1005 = vld [vmem:[%s995 + $0x24] sm:$0xf]
        %v1006 = vld [vmem:[%s995 + $0x28] sm:$0xf]
        %v1007 = vld [vmem:[%s995 + $0x2c] sm:$0xf]
        %v1008 = vld [vmem:[%s995 + $0x30] sm:$0xf]
        %v1009 = vld [vmem:[%s995 + $0x34] sm:$0xf]
        %v1010 = vld [vmem:[%s995 + $0x38] sm:$0xf]
        %v1011 = vld [vmem:[%s995 + $0x3c] sm:$0xf]
        %v1028 = vunpack.c.l.b16 %v996
        %v1029 = vunpack.c.l.b16 %v997
        %v1030 = vunpack.c.l.b16 %v998
        %v1031 = vunpack.c.l.b16 %v999
        %v1032 = vunpack.c.l.b16 %v1000
        %v1033 = vunpack.c.l.b16 %v1001
        %v1034 = vunpack.c.l.b16 %v1002
        %v1035 = vunpack.c.l.b16 %v1003
        %v1036 = vunpack.c.l.b16 %v1004
        %v1037 = vunpack.c.l.b16 %v1005
        %v1038 = vunpack.c.l.b16 %v1006
        %v1039 = vunpack.c.l.b16 %v1007
        %v1040 = vunpack.c.l.b16 %v1008
        %v1041 = vunpack.c.l.b16 %v1009
        %v1042 = vunpack.c.l.b16 %v1010
        %v1043 = vunpack.c.l.b16 %v1011
        %v1044 = vpack.c.b16 %v1029, %v1028
        %v1045 = vpack.c.b16 %v1031, %v1030
        %v1046 = vpack.c.b16 %v1033, %v1032
        %v1047 = vpack.c.b16 %v1035, %v1034
        %v1048 = vpack.c.b16 %v1037, %v1036
        %v1049 = vpack.c.b16 %v1039, %v1038
        %v1050 = vpack.c.b16 %v1041, %v1040
        %v1051 = vpack.c.b16 %v1043, %v1042
        %1060 = vmatprep.subr.bf16.mxu0 0
        %1061 = vmatpush1.bf16.msra.mxu0 %v1051
        %1062 = vmatprep.subr.bf16.mxu0 0
        %1063 = vmatpush1.bf16.msra.mxu0 %v1050
        %1064 = vmatprep.subr.bf16.mxu0 0
        %1065 = vmatpush1.bf16.msra.mxu0 %v1049
        %1066 = vmatprep.subr.bf16.mxu0 0
        %1067 = vmatpush1.bf16.msra.mxu0 %v1048
        %1068 = vmatprep.subr.bf16.mxu0 0
        %1069 = vmatpush1.bf16.msra.mxu0 %v1047
        %1070 = vmatprep.subr.bf16.mxu0 0
        %1071 = vmatpush1.bf16.msra.mxu0 %v1046
        %1072 = vmatprep.subr.bf16.mxu0 0
        %1073 = vmatpush1.bf16.msra.mxu0 %v1045
        %1074 = vmatprep.subr.bf16.mxu0 0
        %1075 = vmatpush1.bf16.msra.mxu0 %v1044
        %1076 = vmatprep.subr.bf16.mxu0 0
        %1077 = vmatpush2.bf16.msra.mxu0 0
        %1078 = vmatprep.subr.bf16.mxu0 0
        %1079 = vmatpush2.bf16.msra.mxu0 0
        %1080 = vmatprep.subr.bf16.mxu0 0
        %1081 = vmatpush2.bf16.msra.mxu0 0
        %1082 = vmatprep.subr.bf16.mxu0 0
        %1083 = vmatpush2.bf16.msra.mxu0 0
        %1084 = vmatprep.subr.bf16.mxu0 0
        %1085 = vmatpush2.bf16.msra.mxu0 0
        %1086 = vmatprep.subr.bf16.mxu0 0
        %1087 = vmatpush2.bf16.msra.mxu0 0
        %1088 = vmatprep.subr.bf16.mxu0 0
        %1089 = vmatpush2.bf16.msra.mxu0 0
        %1090 = vmatprep.subr.bf16.mxu0 0
        %1091 = vmatpush2.bf16.msra.mxu0 0
        %1092 = vmatprep.mubr.bf16.mxu0 0
        %1093 = vmatmul.mubr.bf16.gmra.mxu0 %v992
        %v1094 = vpop.f32.mrf.mxu0
        %v1095 = vadd.f32 0.0, %v1094
        %v1096 = vpop.f32.mrf.mxu0
        %v1097 = vpop.f32.mrf.mxu0
        %v1098 = vadd.f32 0.0, %v1097
        %v1099 = vpop.f32.mrf.mxu0
        %1100 = vmatprep.mubr.bf16.mxu0 0
        %1101 = vmatmul.mubr.bf16.gmra.mxu0 %v993
        %v1102 = vpop.f32.mrf.mxu0
        %v1103 = vadd.f32 0.0, %v1102
        %v1104 = vpop.f32.mrf.mxu0
        %v1105 = vpop.f32.mrf.mxu0
        %v1106 = vadd.f32 0.0, %v1105
        %v1107 = vpop.f32.mrf.mxu0
        %1108 = vmatprep.mubr.bf16.mxu0 0
        %1109 = vmatmul.mubr.bf16.gmra.mxu0 %v994
        %v1110 = vpop.f32.mrf.mxu0
        %v1111 = vadd.f32 0.0, %v1110
        %v1112 = vpop.f32.mrf.mxu0
        %v1113 = vpop.f32.mrf.mxu0
        %v1114 = vadd.f32 0.0, %v1113
        %v1115 = vpop.f32.mrf.mxu0
        %1116 = vdwg.mxu0
        %v1133 = vunpack.c.l.b16 %v958
        %v1134 = vunpack.c.l.b16 %v959
        %v1135 = vunpack.c.l.b16 %v960
        %v1136 = vunpack.c.l.b16 %v961
        %v1137 = vunpack.c.l.b16 %v962
        %v1138 = vunpack.c.l.b16 %v963
        %v1139 = vunpack.c.l.b16 %v964
        %v1140 = vunpack.c.l.b16 %v965
        %v1141 = vunpack.c.l.b16 %v966
        %v1142 = vunpack.c.l.b16 %v967
        %v1143 = vunpack.c.l.b16 %v968
        %v1144 = vunpack.c.l.b16 %v969
        %v1145 = vunpack.c.l.b16 %v970
        %v1146 = vunpack.c.l.b16 %v971
        %v1147 = vunpack.c.l.b16 %v972
        %v1148 = vunpack.c.l.b16 %v973
        %v1149 = vpack.c.b16 %v1134, %v1133
        %v1150 = vpack.c.b16 %v1136, %v1135
        %v1151 = vpack.c.b16 %v1138, %v1137
        %v1152 = vpack.c.b16 %v1140, %v1139
        %v1153 = vpack.c.b16 %v1142, %v1141
        %v1154 = vpack.c.b16 %v1144, %v1143
        %v1155 = vpack.c.b16 %v1146, %v1145
        %v1156 = vpack.c.b16 %v1148, %v1147
        %1165 = vmatprep.subr.bf16.mxu0 0
        %1166 = vmatpush1.bf16.msra.mxu0 %v1156
        %1167 = vmatprep.subr.bf16.mxu0 0
        %1168 = vmatpush1.bf16.msra.mxu0 %v1155
        %1169 = vmatprep.subr.bf16.mxu0 0
        %1170 = vmatpush1.bf16.msra.mxu0 %v1154
        %1171 = vmatprep.subr.bf16.mxu0 0
        %1172 = vmatpush1.bf16.msra.mxu0 %v1153
        %1173 = vmatprep.subr.bf16.mxu0 0
        %1174 = vmatpush1.bf16.msra.mxu0 %v1152
        %1175 = vmatprep.subr.bf16.mxu0 0
        %1176 = vmatpush1.bf16.msra.mxu0 %v1151
        %1177 = vmatprep.subr.bf16.mxu0 0
        %1178 = vmatpush1.bf16.msra.mxu0 %v1150
        %1179 = vmatprep.subr.bf16.mxu0 0
        %1180 = vmatpush1.bf16.msra.mxu0 %v1149
        %1181 = vmatprep.subr.bf16.mxu0 0
        %1182 = vmatpush2.bf16.msra.mxu0 0
        %1183 = vmatprep.subr.bf16.mxu0 0
        %1184 = vmatpush2.bf16.msra.mxu0 0
        %1185 = vmatprep.subr.bf16.mxu0 0
        %1186 = vmatpush2.bf16.msra.mxu0 0
        %1187 = vmatprep.subr.bf16.mxu0 0
        %1188 = vmatpush2.bf16.msra.mxu0 0
        %1189 = vmatprep.subr.bf16.mxu0 0
        %1190 = vmatpush2.bf16.msra.mxu0 0
        %1191 = vmatprep.subr.bf16.mxu0 0
        %1192 = vmatpush2.bf16.msra.mxu0 0
        %1193 = vmatprep.subr.bf16.mxu0 0
        %1194 = vmatpush2.bf16.msra.mxu0 0
        %1195 = vmatprep.subr.bf16.mxu0 0
        %1196 = vmatpush2.bf16.msra.mxu0 0
        %1197 = vmatprep.mubr.bf16.mxu0 0
        %1198 = vmatmul.mubr.bf16.gmra.mxu0 %v955
        %v1199 = vpop.f32.mrf.mxu0
        %v1200 = vadd.f32 %v1095, %v1199
        %v1201 = vpop.f32.mrf.mxu0
        %v1202 = vpop.f32.mrf.mxu0
        %v1203 = vadd.f32 %v1098, %v1202
        %v1204 = vpop.f32.mrf.mxu0
        %1205 = vmatprep.mubr.bf16.mxu0 0
        %1206 = vmatmul.mubr.bf16.gmra.mxu0 %v956
        %v1207 = vpop.f32.mrf.mxu0
        %v1208 = vadd.f32 %v1103, %v1207
        %v1209 = vpop.f32.mrf.mxu0
        %v1210 = vpop.f32.mrf.mxu0
        %v1211 = vadd.f32 %v1106, %v1210
        %v1212 = vpop.f32.mrf.mxu0
        %1213 = vmatprep.mubr.bf16.mxu0 0
        %1214 = vmatmul.mubr.bf16.gmra.mxu0 %v957
        %v1215 = vpop.f32.mrf.mxu0
        %v1216 = vadd.f32 %v1111, %v1215
        %v1217 = vpop.f32.mrf.mxu0
        %v1218 = vpop.f32.mrf.mxu0
        %v1219 = vadd.f32 %v1114, %v1218
        %v1220 = vpop.f32.mrf.mxu0
        %1221 = vdwg.mxu0
        %v1222 = vrot.slane %v949, 2
        %v1223 = vrot.slane %v950, 2
        %v1224 = vrot.slane %v951, 2
        %v1225 = vrot.slane %v952, 2
        %v1226 = vrot.slane %v953, 2
        %v1227 = vrot.slane %v954, 2
        %v1228 = vsel %vm792, %v1226, %v1227
        %v1229 = vsel %vm792, %v1225, %v1226
        %v1230 = vsel %vm792, %v1224, %v1225
        %v1231 = vsel %vm792, %v1223, %v1224
        %v1232 = vsel %vm792, %v1222, %v1223
        %v1233 = vsel %vm792, %v1227, %v1222
        %v1234 = vmul.f32 %v1232, %v506
        %v1235 = vmul.f32 %v1231, %v507
        %v1236 = vmul.f32 %v1230, %v508
        %v1237 = vmul.f32 %v1229, %v509
        %v1238 = vmul.f32 %v1228, %v510
        %v1239 = vmul.f32 %v1233, %v511
        %v1240 = vpack.c.bf16 %v1235, %v1234
        %v1241 = vpack.c.bf16 %v1237, %v1236
        %v1242 = vpack.c.bf16 %v1239, %v1238
        %s1243 = scalar_lea.vmem [#allocation5], 128
        %v1244 = vld [vmem:[%s1243] sm:$0xf]
        %v1245 = vld [vmem:[%s1243 + $0x4] sm:$0xf]
        %v1246 = vld [vmem:[%s1243 + $0x8] sm:$0xf]
        %v1247 = vld [vmem:[%s1243 + $0xc] sm:$0xf]
        %v1248 = vld [vmem:[%s1243 + $0x10] sm:$0xf]
        %v1249 = vld [vmem:[%s1243 + $0x14] sm:$0xf]
        %v1250 = vld [vmem:[%s1243 + $0x18] sm:$0xf]
        %v1251 = vld [vmem:[%s1243 + $0x1c] sm:$0xf]
        %v1252 = vld [vmem:[%s1243 + $0x20] sm:$0xf]
        %v1253 = vld [vmem:[%s1243 + $0x24] sm:$0xf]
        %v1254 = vld [vmem:[%s1243 + $0x28] sm:$0xf]
        %v1255 = vld [vmem:[%s1243 + $0x2c] sm:$0xf]
        %v1256 = vld [vmem:[%s1243 + $0x30] sm:$0xf]
        %v1257 = vld [vmem:[%s1243 + $0x34] sm:$0xf]
        %v1258 = vld [vmem:[%s1243 + $0x38] sm:$0xf]
        %v1259 = vld [vmem:[%s1243 + $0x3c] sm:$0xf]
        %v1276 = vunpack.c.l.b16 %v1244
        %v1277 = vunpack.c.l.b16 %v1245
        %v1278 = vunpack.c.l.b16 %v1246
        %v1279 = vunpack.c.l.b16 %v1247
        %v1280 = vunpack.c.l.b16 %v1248
        %v1281 = vunpack.c.l.b16 %v1249
        %v1282 = vunpack.c.l.b16 %v1250
        %v1283 = vunpack.c.l.b16 %v1251
        %v1284 = vunpack.c.l.b16 %v1252
        %v1285 = vunpack.c.l.b16 %v1253
        %v1286 = vunpack.c.l.b16 %v1254
        %v1287 = vunpack.c.l.b16 %v1255
        %v1288 = vunpack.c.l.b16 %v1256
        %v1289 = vunpack.c.l.b16 %v1257
        %v1290 = vunpack.c.l.b16 %v1258
        %v1291 = vunpack.c.l.b16 %v1259
        %v1292 = vpack.c.b16 %v1277, %v1276
        %v1293 = vpack.c.b16 %v1279, %v1278
        %v1294 = vpack.c.b16 %v1281, %v1280
        %v1295 = vpack.c.b16 %v1283, %v1282
        %v1296 = vpack.c.b16 %v1285, %v1284
        %v1297 = vpack.c.b16 %v1287, %v1286
        %v1298 = vpack.c.b16 %v1289, %v1288
        %v1299 = vpack.c.b16 %v1291, %v1290
        %1308 = vmatprep.subr.bf16.mxu0 0
        %1309 = vmatpush1.bf16.msra.mxu0 %v1299
        %1310 = vmatprep.subr.bf16.mxu0 0
        %1311 = vmatpush1.bf16.msra.mxu0 %v1298
        %1312 = vmatprep.subr.bf16.mxu0 0
        %1313 = vmatpush1.bf16.msra.mxu0 %v1297
        %1314 = vmatprep.subr.bf16.mxu0 0
        %1315 = vmatpush1.bf16.msra.mxu0 %v1296
        %1316 = vmatprep.subr.bf16.mxu0 0
        %1317 = vmatpush1.bf16.msra.mxu0 %v1295
        %1318 = vmatprep.subr.bf16.mxu0 0
        %1319 = vmatpush1.bf16.msra.mxu0 %v1294
        %1320 = vmatprep.subr.bf16.mxu0 0
        %1321 = vmatpush1.bf16.msra.mxu0 %v1293
        %1322 = vmatprep.subr.bf16.mxu0 0
        %1323 = vmatpush1.bf16.msra.mxu0 %v1292
        %1324 = vmatprep.subr.bf16.mxu0 0
        %1325 = vmatpush2.bf16.msra.mxu0 0
        %1326 = vmatprep.subr.bf16.mxu0 0
        %1327 = vmatpush2.bf16.msra.mxu0 0
        %1328 = vmatprep.subr.bf16.mxu0 0
        %1329 = vmatpush2.bf16.msra.mxu0 0
        %1330 = vmatprep.subr.bf16.mxu0 0
        %1331 = vmatpush2.bf16.msra.mxu0 0
        %1332 = vmatprep.subr.bf16.mxu0 0
        %1333 = vmatpush2.bf16.msra.mxu0 0
        %1334 = vmatprep.subr.bf16.mxu0 0
        %1335 = vmatpush2.bf16.msra.mxu0 0
        %1336 = vmatprep.subr.bf16.mxu0 0
        %1337 = vmatpush2.bf16.msra.mxu0 0
        %1338 = vmatprep.subr.bf16.mxu0 0
        %1339 = vmatpush2.bf16.msra.mxu0 0
        %1340 = vmatprep.mubr.bf16.mxu0 0
        %1341 = vmatmul.mubr.bf16.gmra.mxu0 %v1240
        %v1342 = vpop.f32.mrf.mxu0
        %v1343 = vadd.f32 0.0, %v1342
        %v1344 = vpop.f32.mrf.mxu0
        %v1345 = vpop.f32.mrf.mxu0
        %v1346 = vadd.f32 0.0, %v1345
        %v1347 = vpop.f32.mrf.mxu0
        %1348 = vmatprep.mubr.bf16.mxu0 0
        %1349 = vmatmul.mubr.bf16.gmra.mxu0 %v1241
        %v1350 = vpop.f32.mrf.mxu0
        %v1351 = vadd.f32 0.0, %v1350
        %v1352 = vpop.f32.mrf.mxu0
        %v1353 = vpop.f32.mrf.mxu0
        %v1354 = vadd.f32 0.0, %v1353
        %v1355 = vpop.f32.mrf.mxu0
        %1356 = vmatprep.mubr.bf16.mxu0 0
        %1357 = vmatmul.mubr.bf16.gmra.mxu0 %v1242
        %v1358 = vpop.f32.mrf.mxu0
        %v1359 = vadd.f32 0.0, %v1358
        %v1360 = vpop.f32.mrf.mxu0
        %v1361 = vpop.f32.mrf.mxu0
        %v1362 = vadd.f32 0.0, %v1361
        %v1363 = vpop.f32.mrf.mxu0
        %1364 = vdwg.mxu0
        %v1365 = vadd.f32 %v1200, %v1343
        %v1366 = vadd.f32 %v1203, %v1346
        %v1367 = vadd.f32 %v1208, %v1351
        %v1368 = vadd.f32 %v1211, %v1354
        %v1369 = vadd.f32 %v1216, %v1359
        %v1370 = vadd.f32 %v1219, %v1362
        %v1371 = vld [vmem:[%s5] sm:$0x1]
        %v1373 = vlaneseq
        %v1374 = vshrl.u32 %v1373, 7
        %v1375 = vsub.s32 0, %v1374
        %v1376 = vrot.slane %v1371, %v1375
        %v1378 = vadd.f32 %v1365, %v1376
        %v1379 = vadd.f32 %v1366, %v1376
        %v1380 = vadd.f32 %v1367, %v1376
        %v1381 = vadd.f32 %v1368, %v1376
        %v1382 = vadd.f32 %v1369, %v1376
        %v1383 = vadd.f32 %v1370, %v1376
        %v1384 = vpack.c.bf16 %v1379, %v1378
        %v1385 = vpack.c.bf16 %v1380, %v1380
        %v1386 = vpack.c.bf16 %v1382, %v1381
        %v1387 = vpack.c.bf16 %v1383, %v1383
        %v1392 = vunpack.c.l.b16 %v1384
        %v1393 = vunpack.c.h.b16 %v1384
        %v1394 = vunpack.c.l.b16 %v1385
        %v1395 = vunpack.c.l.b16 %v1386
        %v1396 = vunpack.c.h.b16 %v1386
        %v1397 = vunpack.c.l.b16 %v1387
        %v1398 = vpack.c.b16 %v1392, %v1392
        %v1399 = vpack.c.b16 %v1393, %v1393
        %v1400 = vpack.c.b16 %v1394, %v1394
        %v1401 = vpack.c.b16 %v1395, %v1395
        %v1402 = vpack.c.b16 %v1396, %v1396
        %v1403 = vpack.c.b16 %v1397, %v1397
        %1410 = vst [vmem:[%s295] sm:$0xf] %v1398
        %1411 = vst [vmem:[%s295 + $0x4] sm:$0xf] %v1399
        %1412 = vst [vmem:[%s295 + $0x8] sm:$0xf] %v1400
        %1413 = vst [vmem:[%s295 + $0xc] sm:$0xf] %v1401
        %1414 = vst [vmem:[%s295 + $0x10] sm:$0xf] %v1402
        %1415 = vst [vmem:[%s295 + $0x14] sm:$0xf] %v1403
        %s1416 = sand.u32 %s166, 1
        %s1417 = scalar_lea.sflag [#allocation4], %s1416
        %s1418 = sand.u32 %s166, 1
        %s1419 = smul.addr %s1418, 24
        %s1420 = scalar_lea.vmem [#allocation7], %s1419
        // Predicated region
        $region53: #{tpu_custom_call.1} parent=43 // pred_check
          %p1421 = pneg %p176
        $region54: #{tpu_custom_call.1} parent=43 // pred_check_branch
          %1423 = sbr.rel (%p1421) target = $region56
        $region55: #{tpu_custom_call.1} parent=43 // pred_region
          %s1424 = smul.u32 2, %s22
          %s1426 = ssub.s32 384, 384
          %1427 = vsyncadd %s1417, %s1426
          %s1428 = smul.addr %s1424, 3
          %s1429 = smul.addr %s1428, 64
          %s1430 = scalar_lea.hbm %s6, %s1429
          %s1431 = sshll.u32 %s1420, 4
          %s1432 = int_to_ptr.vmem [resolvable:$true] %s1431
          %1437 = dma.vmem_to_hbm [thread:$0]  %s1432, 384, %s1430, %s1417, 64, 64, 4
        $region56: #{tpu_custom_call.1} parent=43 // pred_fallthru
          _
      $region44: #{tpu_custom_call.1} parent=5 // pred_fallthru
        _
      %p1438 = scmp.le.s32.totalorder 2, %s17
      // Predicated region
      $region57: #{tpu_custom_call.1} parent=5 // pred_check
        %p1439 = pneg %p1438
      $region58: #{tpu_custom_call.1} parent=5 // pred_check_branch
        %1441 = sbr.rel (%p1439) target = $region60
      $region59: #{tpu_custom_call.1} parent=5 // pred_region
        %s1442 = ssub.s32 %s17, 2
        // Predicated region
        $region61: #{tpu_custom_call.1} parent=59 // pred_check
          %p1443 = pneg %p182
        $region62: #{tpu_custom_call.1} parent=59 // pred_check_branch
          %1445 = sbr.rel (%p1443) target = $region64
        $region63: #{tpu_custom_call.1} parent=59 // pred_region
          %s1446 = sand.u32 %s167, 1
          %s1447 = scalar_lea.sflag [#allocation4], %s1446
          %s1448 = sand.u32 %s167, 1
          %s1449 = smul.addr %s1448, 24
          %s1450 = scalar_lea.vmem [#allocation7], %s1449
          %1451 = dma.done %s1447, 384
        $region64: #{tpu_custom_call.1} parent=59 // pred_fallthru
          _
      $region60: #{tpu_custom_call.1} parent=5 // pred_fallthru
        _
    $region6: #{tpu_custom_call.1} parent=1 // loop_footer
      %s21 = sadd.s32 1, %s17
    $region7: #{tpu_custom_call.1} parent=1 // loop_footer_branch
      %16 = sbr.rel target = $region3
    $region8: #{tpu_custom_call.1} parent=1 // loop_exit
      _
    %1452 = vsyncpa [#allocation3], 1
    %s1453 = scalar_lea.sflag [#allocation3], 1
    %1454 = vsyncpa %s1453, 1
    %1455 = vsyncpa [#allocation6], 1
    %1456 = vsyncpa [#allocation4], 1
    %s1457 = scalar_lea.sflag [#allocation4], 1
    %1458 = vsyncpa %s1457, 1

// kernel: tpu_custom_call.1
$region0: #{tpu_custom_call.1}
  #allocation0 [shape = 'u32[]', space=smem, size = 0x4, offset = 0x4, fixed_abs, tag = 'smem constant byte address 0x4 - core index']
  #allocation1 [shape = 'u32[144,128]{1,0:T(1,128)}', space=vmem, size = 0x12000, scoped, tag = 'internal scratch']
  %s0 = inlined_call_operand.vmem [shape: bf16[4,24,48], index: 0, kind: input, shape index: {}]
  %s1 = inlined_call_operand.vmem [shape: bf16[4,24,1], index: 1, kind: input, shape index: {}]
  %s2 = inlined_call_operand.hbm [shape: bf16[3,128,128], index: 2, kind: input, shape index: {}]
  %s3 = inlined_call_operand.vmem [shape: f32[1,128], index: 3, kind: input, shape index: {}]
  %s4 = inlined_call_operand.hbm [shape: bf16[3,128,128], index: 4, kind: input, shape index: {}]
  %s5 = inlined_call_operand.vmem [shape: f32[1,128], index: 5, kind: input, shape index: {}]
  %s6 = inlined_call_operand.hbm [shape: bf16[4,24,128], index: 6, kind: output, shape index: {}]
  %s7 = sld [smem:[#allocation0]]
  $region65: #{tpu_custom_call.1} parent=0
    _
  %s9 = ssub.s32 1, %s7
  %s10 = scalar_select 0, %s9, %s7
  $region1: #{tpu_custom_call.1} parent=0
    #allocation2 [shape = 'u8[98304]{0}', space=vmem, size = 0x18000, scoped, tag = 'input window, operand 2, single buffered']
    #allocation3 [shape = 's32[2]{0}', space=sflag, size = 0x8, scoped, tag = 'scoped memory for tpu_custom_call.1']
    #allocation4 [shape = 's32[2]{0}', space=sflag, size = 0x8, scoped, tag = 'scoped memory for tpu_custom_call.1']
    #allocation5 [shape = 'u8[98304]{0}', space=vmem, size = 0x18000, scoped, tag = 'input window, operand 4, single buffered']
    #allocation6 [shape = 's32[1]{0}', space=sflag, size = 0x4, scoped, tag = 'scoped memory for tpu_custom_call.1']
    #allocation7 [shape = 'u8[24576]{0}', space=vmem, size = 0x6000, scoped, tag = 'output window, operand 0']
    %11 = vsyncpa [#allocation3], 0
    %12 = vsyncpa [#allocation6], 0
    %13 = vsyncpa [#allocation4], 0
    %s14 = scalar_lea.sflag [#allocation4], 1
    %15 = vsyncpa %s14, 0
    loop: start=0, step=1, limit=4
    $region2: #{tpu_custom_call.1} parent=1 // loop_pre_header
      _
    $region3: #{tpu_custom_call.1} parent=1 // loop_header
      %s17 = sphi 0, %s21
      %p18 = scmp.ge.s32.totalorder %s17, 4
      %s27 = sphi 0, %s29
      %s30 = sphi 0, %s27
      %s31 = sphi 0, %s30
      %s47 = sphi 0, %s31
      %s53 = sphi 0, %s55
      %s56 = sphi 0, %s53
      %s57 = sphi 0, %s56
      %s73 = sphi 0, %s57
      %s77 = sphi 0, %s77
      %s79 = sphi 0, %s77
      %s80 = sphi 0, %s79
      %s94 = sphi 0, %s80
      %s98 = sphi 0, %s98
      %s100 = sphi 0, %s98
      %s101 = sphi 0, %s100
      %s115 = sphi 0, %s101
      %s119 = sphi 0, %s119
      %s121 = sphi 0, %s119
      %s122 = sphi 0, %s121
      %s136 = sphi 0, %s122
      %s140 = sphi 0, %s140
      %s142 = sphi 0, %s140
      %s143 = sphi 0, %s142
      %s157 = sphi 0, %s143
      %s163 = sphi 0, %s165
      %s166 = sphi 0, %s163
      %s167 = sphi 0, %s166
      %s183 = sphi 0, %s167
    $region4: #{tpu_custom_call.1} parent=1 // loop_header_branch
      %20 = sbr.rel (%p18) target = $region8
    $region5: #{tpu_custom_call.1} parent=1 // loop_body
      %s22 = ssub.s32 %s17, 1
      %s23 = ssub.s32 %s17, 2
      %s24 = sadd.s32 %s17, 1
      %s25 = ssub.s32 %s17, %s24
      %p26 = scmp.eq.s32.totalorder %s25, 0
      %s28 = sadd.s32 %s27, 1
      %s29 = scalar_select %p26, %s27, %s28
      %p32 = pneg %p26
      %p33 = scmp.eq.s32.totalorder %s17, 1
      %p34 = por %p32, %p33
      %p35 = scmp.ne.s32.totalorder %s27, %s30
      %p36 = scmp.eq.s32.totalorder %s17, 0
      %p37 = por %p35, %p36
      %p38 = scmp.ne.s32.totalorder %s27, %s30
      %p39 = scmp.eq.s32.totalorder %s22, 1
      %p40 = por %p38, %p39
      %p41 = scmp.ne.s32.totalorder %s30, %s31
      %p42 = scmp.eq.s32.totalorder %s22, 0
      %p43 = por %p41, %p42
      %p44 = scmp.ne.s32.totalorder %s30, %s31
      %p45 = scmp.eq.s32.totalorder %s23, 1
      %p46 = por %p44, %p45
      %p48 = scmp.ne.s32.totalorder %s31, %s47
      %p49 = scmp.eq.s32.totalorder %s23, 0
      %p50 = por %p48, %p49
      %s51 = ssub.s32 %s17, %s24
      %p52 = scmp.eq.s32.totalorder %s51, 0
      %s54 = sadd.s32 %s53, 1
      %s55 = scalar_select %p52, %s53, %s54
      %p58 = pneg %p52
      %p59 = scmp.eq.s32.totalorder %s17, 1
      %p60 = por %p58, %p59
      %p61 = scmp.ne.s32.totalorder %s53, %s56
      %p62 = scmp.eq.s32.totalorder %s17, 0
      %p63 = por %p61, %p62
      %p64 = scmp.ne.s32.totalorder %s53, %s56
      %p65 = scmp.eq.s32.totalorder %s22, 1
      %p66 = por %p64, %p65
      %p67 = scmp.ne.s32.totalorder %s56, %s57
      %p68 = scmp.eq.s32.totalorder %s22, 0
      %p69 = por %p67, %p68
      %p70 = scmp.ne.s32.totalorder %s56, %s57
      %p71 = scmp.eq.s32.totalorder %s23, 1
      %p72 = por %p70, %p71
      %p74 = scmp.ne.s32.totalorder %s57, %s73
      %p75 = scmp.eq.s32.totalorder %s23, 0
      %p76 = por %p74, %p75
      %s78 = sadd.s32 %s77, 1
      %p81 = scmp.eq.s32.totalorder %s17, 1
      %p82 = scmp.ne.s32.totalorder %s77, %s79
      %p83 = scmp.eq.s32.totalorder %s17, 0
      %p84 = por %p82, %p83
      %p85 = scmp.ne.s32.totalorder %s77, %s79
      %p86 = scmp.eq.s32.totalorder %s22, 1
      %p87 = por %p85, %p86
      %p88 = scmp.ne.s32.totalorder %s79, %s80
      %p89 = scmp.eq.s32.totalorder %s22, 0
      %p90 = por %p88, %p89
      %p91 = scmp.ne.s32.totalorder %s79, %s80
      %p92 = scmp.eq.s32.totalorder %s23, 1
      %p93 = por %p91, %p92
      %p95 = scmp.ne.s32.totalorder %s80, %s94
      %p96 = scmp.eq.s32.totalorder %s23, 0
      %p97 = por %p95, %p96
      %s99 = sadd.s32 %s98, 1
      %p102 = scmp.eq.s32.totalorder %s17, 1
      %p103 = scmp.ne.s32.totalorder %s98, %s100
      %p104 = scmp.eq.s32.totalorder %s17, 0
      %p105 = por %p103, %p104
      %p106 = scmp.ne.s32.totalorder %s98, %s100
      %p107 = scmp.eq.s32.totalorder %s22, 1
      %p108 = por %p106, %p107
      %p109 = scmp.ne.s32.totalorder %s100, %s101
      %p110 = scmp.eq.s32.totalorder %s22, 0
      %p111 = por %p109, %p110
      %p112 = scmp.ne.s32.totalorder %s100, %s101
      %p113 = scmp.eq.s32.totalorder %s23, 1
      %p114 = por %p112, %p113
      %p116 = scmp.ne.s32.totalorder %s101, %s115
      %p117 = scmp.eq.s32.totalorder %s23, 0
      %p118 = por %p116, %p117
      %s120 = sadd.s32 %s119, 1
      %p123 = scmp.eq.s32.totalorder %s17, 1
      %p124 = scmp.ne.s32.totalorder %s119, %s121
      %p125 = scmp.eq.s32.totalorder %s17, 0
      %p126 = por %p124, %p125
      %p127 = scmp.ne.s32.totalorder %s119, %s121
      %p128 = scmp.eq.s32.totalorder %s22, 1
      %p129 = por %p127, %p128
      %p130 = scmp.ne.s32.totalorder %s121, %s122
      %p131 = scmp.eq.s32.totalorder %s22, 0
      %p132 = por %p130, %p131
      %p133 = scmp.ne.s32.totalorder %s121, %s122
      %p134 = scmp.eq.s32.totalorder %s23, 1
      %p135 = por %p133, %p134
      %p137 = scmp.ne.s32.totalorder %s122, %s136
      %p138 = scmp.eq.s32.totalorder %s23, 0
      %p139 = por %p137, %p138
      %s141 = sadd.s32 %s140, 1
      %p144 = scmp.eq.s32.totalorder %s17, 1
      %p145 = scmp.ne.s32.totalorder %s140, %s142
      %p146 = scmp.eq.s32.totalorder %s17, 0
      %p147 = por %p145, %p146
      %p148 = scmp.ne.s32.totalorder %s140, %s142
      %p149 = scmp.eq.s32.totalorder %s22, 1
      %p150 = por %p148, %p149
      %p151 = scmp.ne.s32.totalorder %s142, %s143
      %p152 = scmp.eq.s32.totalorder %s22, 0
      %p153 = por %p151, %p152
      %p154 = scmp.ne.s32.totalorder %s142, %s143
      %p155 = scmp.eq.s32.totalorder %s23, 1
      %p156 = por %p154, %p155
      %p158 = scmp.ne.s32.totalorder %s143, %s157
      %p159 = scmp.eq.s32.totalorder %s23, 0
      %p160 = por %p158, %p159
      %s161 = ssub.s32 %s17, %s24
      %p162 = scmp.eq.s32.totalorder %s161, 0
      %s164 = sadd.s32 %s163, 1
      %s165 = scalar_select %p162, %s163, %s164
      %p168 = pneg %p162
      %p169 = scmp.eq.s32.totalorder %s17, 1
      %p170 = por %p168, %p169
      %p171 = scmp.ne.s32.totalorder %s163, %s166
      %p172 = scmp.eq.s32.totalorder %s17, 0
      %p173 = por %p171, %p172
      %p174 = scmp.ne.s32.totalorder %s163, %s166
      %p175 = scmp.eq.s32.totalorder %s22, 1
      %p176 = por %p174, %p175
      %p177 = scmp.ne.s32.totalorder %s166, %s167
      %p178 = scmp.eq.s32.totalorder %s22, 0
      %p179 = por %p177, %p178
      %p180 = scmp.ne.s32.totalorder %s166, %s167
      %p181 = scmp.eq.s32.totalorder %s23, 1
      %p182 = por %p180, %p181
      %p184 = scmp.ne.s32.totalorder %s167, %s183
      %p185 = scmp.eq.s32.totalorder %s23, 0
      %p186 = por %p184, %p185
      %p187 = scmp.le.s32.totalorder 1, %s17
      %p188 = scmp.lt.s32.totalorder %s17, 3
      %p189 = pnand %p187, %p188
      %p190 = pneg %p189
      // Predicated region
      $region9: #{tpu_custom_call.1} parent=5 // pred_check
        _
      $region10: #{tpu_custom_call.1} parent=5 // pred_check_branch
        %192 = sbr.rel (%p189) target = $region12
      $region11: #{tpu_custom_call.1} parent=5 // pred_region
        %s193 = ssub.s32 %s17, 1
        // Predicated region
        $region13: #{tpu_custom_call.1} parent=11 // pred_check
          %p194 = pneg %p90
        $region14: #{tpu_custom_call.1} parent=11 // pred_check_branch
          %196 = sbr.rel (%p194) target = $region16
        $region15: #{tpu_custom_call.1} parent=11 // pred_region
          %s198 = ssub.s32 3072, 3072
          %199 = vsyncadd [#allocation3], %s198
          %s200 = sshll.u32 [#allocation2], 4
          %s201 = int_to_ptr.vmem [resolvable:$true] %s200
          %206 = dma.hbm_to_vmem [thread:$0]  %s2, 3072, %s201, [#allocation3], 64, 64, 4
        $region16: #{tpu_custom_call.1} parent=11 // pred_fallthru
          _
        // Predicated region
        $region17: #{tpu_custom_call.1} parent=11 // pred_check
          %p207 = pneg %p111
        $region18: #{tpu_custom_call.1} parent=11 // pred_check_branch
          %209 = sbr.rel (%p207) target = $region20
        $region19: #{tpu_custom_call.1} parent=11 // pred_region
          _
        $region20: #{tpu_custom_call.1} parent=11 // pred_fallthru
          _
        // Predicated region
        $region21: #{tpu_custom_call.1} parent=11 // pred_check
          %p210 = pneg %p132
        $region22: #{tpu_custom_call.1} parent=11 // pred_check_branch
          %212 = sbr.rel (%p210) target = $region24
        $region23: #{tpu_custom_call.1} parent=11 // pred_region
          %s214 = ssub.s32 3072, 3072
          %215 = vsyncadd [#allocation6], %s214
          %s216 = sshll.u32 [#allocation5], 4
          %s217 = int_to_ptr.vmem [resolvable:$true] %s216
          %222 = dma.hbm_to_vmem [thread:$0]  %s4, 3072, %s217, [#allocation6], 64, 64, 4
        $region24: #{tpu_custom_call.1} parent=11 // pred_fallthru
          _
        // Predicated region
        $region25: #{tpu_custom_call.1} parent=11 // pred_check
          %p223 = pneg %p153
        $region26: #{tpu_custom_call.1} parent=11 // pred_check_branch
          %225 = sbr.rel (%p223) target = $region28
        $region27: #{tpu_custom_call.1} parent=11 // pred_region
          _
        $region28: #{tpu_custom_call.1} parent=11 // pred_fallthru
          _
      $region12: #{tpu_custom_call.1} parent=5 // pred_fallthru
        _
      %p226 = scmp.lt.s32.totalorder %s17, 2
      // Predicated region
      $region29: #{tpu_custom_call.1} parent=5 // pred_check
        %p227 = pneg %p226
      $region30: #{tpu_custom_call.1} parent=5 // pred_check_branch
        %229 = sbr.rel (%p227) target = $region32
      $region31: #{tpu_custom_call.1} parent=5 // pred_region
        // Predicated region
        $region33: #{tpu_custom_call.1} parent=31 // pred_check
          %p230 = pneg %p37
        $region34: #{tpu_custom_call.1} parent=31 // pred_check_branch
          %232 = sbr.rel (%p230) target = $region36
        $region35: #{tpu_custom_call.1} parent=31 // pred_region
          %s233 = smul.u32 2, %s17
          %p234 = scmp.lt.s32.totalorder %s233, 3
          %s235 = scalar_select %p234, %s233, 3
          %s236 = smul.addr %s235, 3
          %s237 = smul.addr %s236, 4
          %s238 = scalar_lea.vmem %s0, %s237
          %s239 = smul.u32 2, %s17
        $region36: #{tpu_custom_call.1} parent=31 // pred_fallthru
          _
        // Predicated region
        $region37: #{tpu_custom_call.1} parent=31 // pred_check
          %p240 = pneg %p63
        $region38: #{tpu_custom_call.1} parent=31 // pred_check_branch
          %242 = sbr.rel (%p240) target = $region40
        $region39: #{tpu_custom_call.1} parent=31 // pred_region
          %s243 = smul.u32 2, %s17
          %p244 = scmp.lt.s32.totalorder %s243, 3
          %s245 = scalar_select %p244, %s243, 3
          %s246 = smul.addr %s245, 3
          %s247 = smul.addr %s246, 4
          %s248 = scalar_lea.vmem %s1, %s247
          %s249 = smul.u32 2, %s17
        $region40: #{tpu_custom_call.1} parent=31 // pred_fallthru
          _
      $region32: #{tpu_custom_call.1} parent=5 // pred_fallthru
        _
      %p250 = scmp.le.s32.totalorder 1, %s17
      %p251 = scmp.lt.s32.totalorder %s17, 3
      %p252 = pnand %p250, %p251
      %p253 = pneg %p252
      // Predicated region
      $region41: #{tpu_custom_call.1} parent=5 // pred_check
        _
      $region42: #{tpu_custom_call.1} parent=5 // pred_check_branch
        %255 = sbr.rel (%p252) target = $region44
      $region43: #{tpu_custom_call.1} parent=5 // pred_region
        %s256 = ssub.s32 %s17, 1
        // Predicated region
        $region45: #{tpu_custom_call.1} parent=43 // pred_check
          %p257 = pneg %p90
        $region46: #{tpu_custom_call.1} parent=43 // pred_check_branch
          %259 = sbr.rel (%p257) target = $region48
        $region47: #{tpu_custom_call.1} parent=43 // pred_region
          %260 = dma.done [#allocation3], 3072
        $region48: #{tpu_custom_call.1} parent=43 // pred_fallthru
          _
        // Predicated region
        $region49: #{tpu_custom_call.1} parent=43 // pred_check
          %p261 = pneg %p132
        $region50: #{tpu_custom_call.1} parent=43 // pred_check_branch
          %263 = sbr.rel (%p261) target = $region52
        $region51: #{tpu_custom_call.1} parent=43 // pred_region
          %264 = dma.done [#allocation6], 3072
        $region52: #{tpu_custom_call.1} parent=43 // pred_fallthru
          _
        %s265 = smul.u32 2, %s22
        %p266 = scmp.lt.s32.totalorder %s265, 3
        %s267 = scalar_select %p266, %s265, 3
        %s268 = smul.addr %s267, 3
        %s269 = smul.addr %s268, 4
        %s270 = scalar_lea.vmem %s0, %s269
        %p271 = pneg %p43
        %p272 = pneg %p40
        %s273 = smul.u32 2, %s22
        %p274 = scmp.lt.s32.totalorder %s273, 3
        %s275 = scalar_select %p274, %s273, 3
        %s276 = smul.addr %s275, 3
        %s277 = smul.addr %s276, 4
        %s278 = scalar_lea.vmem %s1, %s277
        %p279 = pneg %p69
        %p280 = pneg %p66
        %p281 = pneg %p90
        %p282 = pneg %p87
        %p283 = pneg %p111
        %p284 = pneg %p108
        %p285 = pneg %p132
        %p286 = pneg %p129
        %p287 = pneg %p153
        %p288 = pneg %p150
        %p289 = pneg %p179
        %p290 = pneg %p176
        %s291 = sand.u32 %s166, 1
        %s292 = scalar_lea.sflag [#allocation4], %s291
        %s293 = sand.u32 %s166, 1
        %s294 = smul.addr %s293, 24
        %s295 = scalar_lea.vmem [#allocation7], %s294
        %s296 = smul.u32 2, %s22
        %p297 = scmp.lt.s32.totalorder %s296, 3
        %s298 = scalar_select %p297, %s296, 3
        %s299 = smul.addr %s298, 3
        %s300 = smul.addr %s299, 4
        %s301 = scalar_lea.vmem %s0, %s300
        %s302 = smul.u32 2, %s22
        %s303 = smul.u32 2, %s22
        %p304 = scmp.lt.s32.totalorder %s303, 3
        %s305 = scalar_select %p304, %s303, 3
        %s306 = smul.addr %s305, 3
        %s307 = smul.addr %s306, 4
        %s308 = scalar_lea.vmem %s1, %s307
        %s309 = smul.u32 2, %s22
        %s310 = smul.u32 2, %s22
        %v312 = vld [vmem:[%s301] sm:$0xf]
        %v313 = vld [vmem:[%s301 + $0x4] sm:$0xf]
        %v314 = vld [vmem:[%s301 + $0x8] sm:$0xf]
        %v315 = vld [vmem:[%s301 + $0xc] sm:$0xf]
        %v316 = vld [vmem:[%s301 + $0x10] sm:$0xf]
        %v317 = vld [vmem:[%s301 + $0x14] sm:$0xf]
        %v318 = vunpack.c.l.bf16 %v312
        %v319 = vunpack.c.l.bf16 %v313
        %v320 = vunpack.c.l.bf16 %v314
        %v321 = vunpack.c.l.bf16 %v315
        %v322 = vunpack.c.l.bf16 %v316
        %v323 = vunpack.c.l.bf16 %v317
        %vm324 = vcmask 392192
        %v325 = vsel %vm324, %v318, 0.0
        %v326 = vsel %vm324, %v319, 0.0
        %v327 = vsel %vm324, %v320, 0.0
        %v328 = vsel %vm324, %v321, 0.0
        %v329 = vsel %vm324, %v322, 0.0
        %v330 = vsel %vm324, %v323, 0.0
        %v331 = vld [vmem:[%s308] sm:$0xf]
        %v332 = vld [vmem:[%s308 + $0x4] sm:$0xf]
        %v333 = vld [vmem:[%s308 + $0x8] sm:$0xf]
        %v334 = vld [vmem:[%s308 + $0xc] sm:$0xf]
        %v335 = vld [vmem:[%s308 + $0x10] sm:$0xf]
        %v336 = vld [vmem:[%s308 + $0x14] sm:$0xf]
        %v337 = vunpack.c.l.bf16 %v331
        %v338 = vunpack.c.l.bf16 %v332
        %v339 = vunpack.c.l.bf16 %v333
        %v340 = vunpack.c.l.bf16 %v334
        %v341 = vunpack.c.l.bf16 %v335
        %v342 = vunpack.c.l.bf16 %v336
        %344 = vset.pattern.permute.xlu0 0
        %345 = vperm.xlu0 %344, %v337
        %v346 = vpop.permute.xlu0 %345
        %349 = vset.pattern.permute.xlu0 0
        %350 = vperm.xlu0 %349, %v338
        %v351 = vpop.permute.xlu0 %350
        %354 = vset.pattern.permute.xlu0 0
        %355 = vperm.xlu0 %354, %v339
        %v356 = vpop.permute.xlu0 %355
        %359 = vset.pattern.permute.xlu0 0
        %360 = vperm.xlu0 %359, %v340
        %v361 = vpop.permute.xlu0 %360
        %364 = vset.pattern.permute.xlu0 0
        %365 = vperm.xlu0 %364, %v341
        %v366 = vpop.permute.xlu0 %365
        %369 = vset.pattern.permute.xlu0 0
        %370 = vperm.xlu0 %369, %v342
        %v371 = vpop.permute.xlu0 %370
        %v373 = vlaneseq
        %v374 = vshrl.u32 %v373, 7
        %v375 = vadd.s32 %v374, 8
        %v376 = vadd.s32 %v374, 16
        %v377 = vadd.s32 %v374, 24
        %v378 = vadd.s32 %v374, 32
        %v379 = vadd.s32 %v374, 40
        %vm380 = vcmp.lt.s32.totalorder %v374, 0
        %v381 = vsub.s32 0, %v374
        %v382 = vsel %vm380, %v381, %v374
        %v383 = vmul.u32.u64.compose %v382, 2863311531
        %v384 = vextract.low.u32 %v383
        %v385 = vextract.high.u32 %v383
        %v386 = vshrl.u32 %v385, 4
        %v387 = vmul.u32 %v386, 24
        %v388 = vsub.s32 %v382, %v387
        %v389 = vsub.s32 0, %v388
        %v390 = vsel %vm380, %v389, %v388
        %vm391 = vcmp.lt.s32.totalorder %v375, 0
        %v392 = vsub.s32 0, %v375
        %v393 = vsel %vm391, %v392, %v375
        %v394 = vmul.u32.u64.compose %v393, 2863311531
        %v395 = vextract.low.u32 %v394
        %v396 = vextract.high.u32 %v394
        %v397 = vshrl.u32 %v396, 4
        %v398 = vmul.u32 %v397, 24
        %v399 = vsub.s32 %v393, %v398
        %v400 = vsub.s32 0, %v399
        %v401 = vsel %vm391, %v400, %v399
        %vm402 = vcmp.lt.s32.totalorder %v376, 0
        %v403 = vsub.s32 0, %v376
        %v404 = vsel %vm402, %v403, %v376
        %v405 = vmul.u32.u64.compose %v404, 2863311531
        %v406 = vextract.low.u32 %v405
        %v407 = vextract.high.u32 %v405
        %v408 = vshrl.u32 %v407, 4
        %v409 = vmul.u32 %v408, 24
        %v410 = vsub.s32 %v404, %v409
        %v411 = vsub.s32 0, %v410
        %v412 = vsel %vm402, %v411, %v410
        %vm413 = vcmp.lt.s32.totalorder %v377, 0
        %v414 = vsub.s32 0, %v377
        %v415 = vsel %vm413, %v414, %v377
        %v416 = vmul.u32.u64.compose %v415, 2863311531
        %v417 = vextract.low.u32 %v416
        %v418 = vextract.high.u32 %v416
        %v419 = vshrl.u32 %v418, 4
        %v420 = vmul.u32 %v419, 24
        %v421 = vsub.s32 %v415, %v420
        %v422 = vsub.s32 0, %v421
        %v423 = vsel %vm413, %v422, %v421
        %vm424 = vcmp.lt.s32.totalorder %v378, 0
        %v425 = vsub.s32 0, %v378
        %v426 = vsel %vm424, %v425, %v378
        %v427 = vmul.u32.u64.compose %v426, 2863311531
        %v428 = vextract.low.u32 %v427
        %v429 = vextract.high.u32 %v427
        %v430 = vshrl.u32 %v429, 4
        %v431 = vmul.u32 %v430, 24
        %v432 = vsub.s32 %v426, %v431
        %v433 = vsub.s32 0, %v432
        %v434 = vsel %vm424, %v433, %v432
        %vm435 = vcmp.lt.s32.totalorder %v379, 0
        %v436 = vsub.s32 0, %v379
        %v437 = vsel %vm435, %v436, %v379
        %v438 = vmul.u32.u64.compose %v437, 2863311531
        %v439 = vextract.low.u32 %v438
        %v440 = vextract.high.u32 %v438
        %v441 = vshrl.u32 %v440, 4
        %v442 = vmul.u32 %v441, 24
        %v443 = vsub.s32 %v437, %v442
        %v444 = vsub.s32 0, %v443
        %v445 = vsel %vm435, %v444, %v443
        %vm446 = vcmp.ne.s32.totalorder %v390, 0
        %vm447 = vcmp.ne.s32.totalorder %v401, 0
        %vm448 = vcmp.ne.s32.totalorder %v412, 0
        %vm449 = vcmp.ne.s32.totalorder %v423, 0
        %vm450 = vcmp.ne.s32.totalorder %v434, 0
        %vm451 = vcmp.ne.s32.totalorder %v445, 0
        %vm452 = vcmp.lt.s32.totalorder %v390, 0
        %vm453 = vcmp.lt.s32.totalorder %v401, 0
        %vm454 = vcmp.lt.s32.totalorder %v412, 0
        %vm455 = vcmp.lt.s32.totalorder %v423, 0
        %vm456 = vcmp.lt.s32.totalorder %v434, 0
        %vm457 = vcmp.lt.s32.totalorder %v445, 0
        %vm458 = vmand %vm452, %vm446
        %vm459 = vmand %vm453, %vm447
        %vm460 = vmand %vm454, %vm448
        %vm461 = vmand %vm455, %vm449
        %vm462 = vmand %vm456, %vm450
        %vm463 = vmand %vm457, %vm451
        %v464 = vadd.s32 %v390, 24
        %v465 = vadd.s32 %v401, 24
        %v466 = vadd.s32 %v412, 24
        %v467 = vadd.s32 %v423, 24
        %v468 = vadd.s32 %v434, 24
        %v469 = vadd.s32 %v445, 24
        %v470 = vsel %vm458, %v464, %v390
        %v471 = vsel %vm459, %v465, %v401
        %v472 = vsel %vm460, %v466, %v412
        %v473 = vsel %vm461, %v467, %v423
        %v474 = vsel %vm462, %v468, %v434
        %v475 = vsel %vm463, %v469, %v445
        %vm476 = vcmp.lt.s32.totalorder %v470, 23
        %vm477 = vcmp.lt.s32.totalorder %v471, 23
        %vm478 = vcmp.lt.s32.totalorder %v472, 23
        %vm479 = vcmp.lt.s32.totalorder %v473, 23
        %vm480 = vcmp.lt.s32.totalorder %v474, 23
        %vm481 = vcmp.lt.s32.totalorder %v475, 23
        %v482 = vsel %vm476, 1, 0
        %v483 = vsel %vm477, 1, 0
        %v484 = vsel %vm478, 1, 0
        %v485 = vsel %vm479, 1, 0
        %v486 = vsel %vm480, 1, 0
        %v487 = vsel %vm481, 1, 0
        %v488 = vcvt.s32.f32 %v482
        %v489 = vcvt.s32.f32 %v483
        %v490 = vcvt.s32.f32 %v484
        %v491 = vcvt.s32.f32 %v485
        %v492 = vcvt.s32.f32 %v486
        %v493 = vcvt.s32.f32 %v487
        %vm494 = vcmp.lt.s32.totalorder %v470, 22
        %vm495 = vcmp.lt.s32.totalorder %v471, 22
        %vm496 = vcmp.lt.s32.totalorder %v472, 22
        %vm497 = vcmp.lt.s32.totalorder %v473, 22
        %vm498 = vcmp.lt.s32.totalorder %v474, 22
        %vm499 = vcmp.lt.s32.totalorder %v475, 22
        %v500 = vsel %vm494, 1, 0
        %v501 = vsel %vm495, 1, 0
        %v502 = vsel %vm496, 1, 0
        %v503 = vsel %vm497, 1, 0
        %v504 = vsel %vm498, 1, 0
        %v505 = vsel %vm499, 1, 0
        %v506 = vcvt.s32.f32 %v500
        %v507 = vcvt.s32.f32 %v501
        %v508 = vcvt.s32.f32 %v502
        %v509 = vcvt.s32.f32 %v503
        %v510 = vcvt.s32.f32 %v504
        %v511 = vcvt.s32.f32 %v505
        %v512 = vmul.f32 %v325, %v346
        %v513 = vmul.f32 %v326, %v351
        %v514 = vmul.f32 %v327, %v356
        %v515 = vmul.f32 %v328, %v361
        %v516 = vmul.f32 %v329, %v366
        %v517 = vmul.f32 %v330, %v371
        %v518 = vpack.c.bf16 %v513, %v512
        %v519 = vpack.c.bf16 %v515, %v514
        %v520 = vpack.c.bf16 %v517, %v516
        %v521 = vld [vmem:[#allocation2] sm:$0xf]
        %v522 = vld [vmem:[#allocation2 + $0x4] sm:$0xf]
        %v523 = vld [vmem:[#allocation2 + $0x8] sm:$0xf]
        %v524 = vld [vmem:[#allocation2 + $0xc] sm:$0xf]
        %v525 = vld [vmem:[#allocation2 + $0x10] sm:$0xf]
        %v526 = vld [vmem:[#allocation2 + $0x14] sm:$0xf]
        %v527 = vld [vmem:[#allocation2 + $0x18] sm:$0xf]
        %v528 = vld [vmem:[#allocation2 + $0x1c] sm:$0xf]
        %v529 = vld [vmem:[#allocation2 + $0x20] sm:$0xf]
        %v530 = vld [vmem:[#allocation2 + $0x24] sm:$0xf]
        %v531 = vld [vmem:[#allocation2 + $0x28] sm:$0xf]
        %v532 = vld [vmem:[#allocation2 + $0x2c] sm:$0xf]
        %v533 = vld [vmem:[#allocation2 + $0x30] sm:$0xf]
        %v534 = vld [vmem:[#allocation2 + $0x34] sm:$0xf]
        %v535 = vld [vmem:[#allocation2 + $0x38] sm:$0xf]
        %v536 = vld [vmem:[#allocation2 + $0x3c] sm:$0xf]
        %v537 = vrot.slane %v512, 1
        %v538 = vrot.slane %v513, 1
        %v539 = vrot.slane %v514, 1
        %v540 = vrot.slane %v515, 1
        %v541 = vrot.slane %v516, 1
        %v542 = vrot.slane %v517, 1
        %vm543 = vcmp.lt.s32.totalorder %v374, 7
        %v544 = vsel %vm543, %v541, %v542
        %v545 = vsel %vm543, %v540, %v541
        %v546 = vsel %vm543, %v539, %v540
        %v547 = vsel %vm543, %v538, %v539
        %v548 = vsel %vm543, %v537, %v538
        %v549 = vsel %vm543, %v542, %v537
        %v550 = vmul.f32 %v548, %v488
        %v551 = vmul.f32 %v547, %v489
        %v552 = vmul.f32 %v546, %v490
        %v553 = vmul.f32 %v545, %v491
        %v554 = vmul.f32 %v544, %v492
        %v555 = vmul.f32 %v549, %v493
        %v556 = vpack.c.bf16 %v551, %v550
        %v557 = vpack.c.bf16 %v553, %v552
        %v558 = vpack.c.bf16 %v555, %v554
        %s559 = scalar_lea.vmem [#allocation2], 64
        %v560 = vld [vmem:[%s559] sm:$0xf]
        %v561 = vld [vmem:[%s559 + $0x4] sm:$0xf]
        %v562 = vld [vmem:[%s559 + $0x8] sm:$0xf]
        %v563 = vld [vmem:[%s559 + $0xc] sm:$0xf]
        %v564 = vld [vmem:[%s559 + $0x10] sm:$0xf]
        %v565 = vld [vmem:[%s559 + $0x14] sm:$0xf]
        %v566 = vld [vmem:[%s559 + $0x18] sm:$0xf]
        %v567 = vld [vmem:[%s559 + $0x1c] sm:$0xf]
        %v568 = vld [vmem:[%s559 + $0x20] sm:$0xf]
        %v569 = vld [vmem:[%s559 + $0x24] sm:$0xf]
        %v570 = vld [vmem:[%s559 + $0x28] sm:$0xf]
        %v571 = vld [vmem:[%s559 + $0x2c] sm:$0xf]
        %v572 = vld [vmem:[%s559 + $0x30] sm:$0xf]
        %v573 = vld [vmem:[%s559 + $0x34] sm:$0xf]
        %v574 = vld [vmem:[%s559 + $0x38] sm:$0xf]
        %v575 = vld [vmem:[%s559 + $0x3c] sm:$0xf]
        %v592 = vunpack.c.l.b16 %v560
        %v593 = vunpack.c.l.b16 %v561
        %v594 = vunpack.c.l.b16 %v562
        %v595 = vunpack.c.l.b16 %v563
        %v596 = vunpack.c.l.b16 %v564
        %v597 = vunpack.c.l.b16 %v565
        %v598 = vunpack.c.l.b16 %v566
        %v599 = vunpack.c.l.b16 %v567
        %v600 = vunpack.c.l.b16 %v568
        %v601 = vunpack.c.l.b16 %v569
        %v602 = vunpack.c.l.b16 %v570
        %v603 = vunpack.c.l.b16 %v571
        %v604 = vunpack.c.l.b16 %v572
        %v605 = vunpack.c.l.b16 %v573
        %v606 = vunpack.c.l.b16 %v574
        %v607 = vunpack.c.l.b16 %v575
        %v608 = vpack.c.b16 %v593, %v592
        %v609 = vpack.c.b16 %v595, %v594
        %v610 = vpack.c.b16 %v597, %v596
        %v611 = vpack.c.b16 %v599, %v598
        %v612 = vpack.c.b16 %v601, %v600
        %v613 = vpack.c.b16 %v603, %v602
        %v614 = vpack.c.b16 %v605, %v604
        %v615 = vpack.c.b16 %v607, %v606
        %624 = vmatprep.subr.bf16.mxu0 0
        %625 = vmatpush1.bf16.msra.mxu0 %v615
        %626 = vmatprep.subr.bf16.mxu0 0
        %627 = vmatpush1.bf16.msra.mxu0 %v614
        %628 = vmatprep.subr.bf16.mxu0 0
        %629 = vmatpush1.bf16.msra.mxu0 %v613
        %630 = vmatprep.subr.bf16.mxu0 0
        %631 = vmatpush1.bf16.msra.mxu0 %v612
        %632 = vmatprep.subr.bf16.mxu0 0
        %633 = vmatpush1.bf16.msra.mxu0 %v611
        %634 = vmatprep.subr.bf16.mxu0 0
        %635 = vmatpush1.bf16.msra.mxu0 %v610
        %636 = vmatprep.subr.bf16.mxu0 0
        %637 = vmatpush1.bf16.msra.mxu0 %v609
        %638 = vmatprep.subr.bf16.mxu0 0
        %639 = vmatpush1.bf16.msra.mxu0 %v608
        %640 = vmatprep.subr.bf16.mxu0 0
        %641 = vmatpush2.bf16.msra.mxu0 0
        %642 = vmatprep.subr.bf16.mxu0 0
        %643 = vmatpush2.bf16.msra.mxu0 0
        %644 = vmatprep.subr.bf16.mxu0 0
        %645 = vmatpush2.bf16.msra.mxu0 0
        %646 = vmatprep.subr.bf16.mxu0 0
        %647 = vmatpush2.bf16.msra.mxu0 0
        %648 = vmatprep.subr.bf16.mxu0 0
        %649 = vmatpush2.bf16.msra.mxu0 0
        %650 = vmatprep.subr.bf16.mxu0 0
        %651 = vmatpush2.bf16.msra.mxu0 0
        %652 = vmatprep.subr.bf16.mxu0 0
        %653 = vmatpush2.bf16.msra.mxu0 0
        %654 = vmatprep.subr.bf16.mxu0 0
        %655 = vmatpush2.bf16.msra.mxu0 0
        %656 = vmatprep.mubr.bf16.mxu0 0
        %657 = vmatmul.mubr.bf16.gmra.mxu0 %v556
        %v658 = vpop.f32.mrf.mxu0
        %v659 = vadd.f32 0.0, %v658
        %v660 = vpop.f32.mrf.mxu0
        %v661 = vpop.f32.mrf.mxu0
        %v662 = vadd.f32 0.0, %v661
        %v663 = vpop.f32.mrf.mxu0
        %664 = vmatprep.mubr.bf16.mxu0 0
        %665 = vmatmul.mubr.bf16.gmra.mxu0 %v557
        %v666 = vpop.f32.mrf.mxu0
        %v667 = vadd.f32 0.0, %v666
        %v668 = vpop.f32.mrf.mxu0
        %v669 = vpop.f32.mrf.mxu0
        %v670 = vadd.f32 0.0, %v669
        %v671 = vpop.f32.mrf.mxu0
        %672 = vmatprep.mubr.bf16.mxu0 0
        %673 = vmatmul.mubr.bf16.gmra.mxu0 %v558
        %v674 = vpop.f32.mrf.mxu0
        %v675 = vadd.f32 0.0, %v674
        %v676 = vpop.f32.mrf.mxu0
        %v677 = vpop.f32.mrf.mxu0
        %v678 = vadd.f32 0.0, %v677
        %v679 = vpop.f32.mrf.mxu0
        %680 = vdwg.mxu0
        %v697 = vunpack.c.l.b16 %v521
        %v698 = vunpack.c.l.b16 %v522
        %v699 = vunpack.c.l.b16 %v523
        %v700 = vunpack.c.l.b16 %v524
        %v701 = vunpack.c.l.b16 %v525
        %v702 = vunpack.c.l.b16 %v526
        %v703 = vunpack.c.l.b16 %v527
        %v704 = vunpack.c.l.b16 %v528
        %v705 = vunpack.c.l.b16 %v529
        %v706 = vunpack.c.l.b16 %v530
        %v707 = vunpack.c.l.b16 %v531
        %v708 = vunpack.c.l.b16 %v532
        %v709 = vunpack.c.l.b16 %v533
        %v710 = vunpack.c.l.b16 %v534
        %v711 = vunpack.c.l.b16 %v535
        %v712 = vunpack.c.l.b16 %v536
        %v713 = vpack.c.b16 %v698, %v697
        %v714 = vpack.c.b16 %v700, %v699
        %v715 = vpack.c.b16 %v702, %v701
        %v716 = vpack.c.b16 %v704, %v703
        %v717 = vpack.c.b16 %v706, %v705
        %v718 = vpack.c.b16 %v708, %v707
        %v719 = vpack.c.b16 %v710, %v709
        %v720 = vpack.c.b16 %v712, %v711
        %729 = vmatprep.subr.bf16.mxu0 0
        %730 = vmatpush1.bf16.msra.mxu0 %v720
        %731 = vmatprep.subr.bf16.mxu0 0
        %732 = vmatpush1.bf16.msra.mxu0 %v719
        %733 = vmatprep.subr.bf16.mxu0 0
        %734 = vmatpush1.bf16.msra.mxu0 %v718
        %735 = vmatprep.subr.bf16.mxu0 0
        %736 = vmatpush1.bf16.msra.mxu0 %v717
        %737 = vmatprep.subr.bf16.mxu0 0
        %738 = vmatpush1.bf16.msra.mxu0 %v716
        %739 = vmatprep.subr.bf16.mxu0 0
        %740 = vmatpush1.bf16.msra.mxu0 %v715
        %741 = vmatprep.subr.bf16.mxu0 0
        %742 = vmatpush1.bf16.msra.mxu0 %v714
        %743 = vmatprep.subr.bf16.mxu0 0
        %744 = vmatpush1.bf16.msra.mxu0 %v713
        %745 = vmatprep.subr.bf16.mxu0 0
        %746 = vmatpush2.bf16.msra.mxu0 0
        %747 = vmatprep.subr.bf16.mxu0 0
        %748 = vmatpush2.bf16.msra.mxu0 0
        %749 = vmatprep.subr.bf16.mxu0 0
        %750 = vmatpush2.bf16.msra.mxu0 0
        %751 = vmatprep.subr.bf16.mxu0 0
        %752 = vmatpush2.bf16.msra.mxu0 0
        %753 = vmatprep.subr.bf16.mxu0 0
        %754 = vmatpush2.bf16.msra.mxu0 0
        %755 = vmatprep.subr.bf16.mxu0 0
        %756 = vmatpush2.bf16.msra.mxu0 0
        %757 = vmatprep.subr.bf16.mxu0 0
        %758 = vmatpush2.bf16.msra.mxu0 0
        %759 = vmatprep.subr.bf16.mxu0 0
        %760 = vmatpush2.bf16.msra.mxu0 0
        %761 = vmatprep.mubr.bf16.mxu0 0
        %762 = vmatmul.mubr.bf16.gmra.mxu0 %v518
        %v763 = vpop.f32.mrf.mxu0
        %v764 = vadd.f32 %v659, %v763
        %v765 = vpop.f32.mrf.mxu0
        %v766 = vpop.f32.mrf.mxu0
        %v767 = vadd.f32 %v662, %v766
        %v768 = vpop.f32.mrf.mxu0
        %769 = vmatprep.mubr.bf16.mxu0 0
        %770 = vmatmul.mubr.bf16.gmra.mxu0 %v519
        %v771 = vpop.f32.mrf.mxu0
        %v772 = vadd.f32 %v667, %v771
        %v773 = vpop.f32.mrf.mxu0
        %v774 = vpop.f32.mrf.mxu0
        %v775 = vadd.f32 %v670, %v774
        %v776 = vpop.f32.mrf.mxu0
        %777 = vmatprep.mubr.bf16.mxu0 0
        %778 = vmatmul.mubr.bf16.gmra.mxu0 %v520
        %v779 = vpop.f32.mrf.mxu0
        %v780 = vadd.f32 %v675, %v779
        %v781 = vpop.f32.mrf.mxu0
        %v782 = vpop.f32.mrf.mxu0
        %v783 = vadd.f32 %v678, %v782
        %v784 = vpop.f32.mrf.mxu0
        %785 = vdwg.mxu0
        %v786 = vrot.slane %v512, 2
        %v787 = vrot.slane %v513, 2
        %v788 = vrot.slane %v514, 2
        %v789 = vrot.slane %v515, 2
        %v790 = vrot.slane %v516, 2
        %v791 = vrot.slane %v517, 2
        %vm792 = vcmp.lt.s32.totalorder %v374, 6
        %v793 = vsel %vm792, %v790, %v791
        %v794 = vsel %vm792, %v789, %v790
        %v795 = vsel %vm792, %v788, %v789
        %v796 = vsel %vm792, %v787, %v788
        %v797 = vsel %vm792, %v786, %v787
        %v798 = vsel %vm792, %v791, %v786
        %v799 = vmul.f32 %v797, %v506
        %v800 = vmul.f32 %v796, %v507
        %v801 = vmul.f32 %v795, %v508
        %v802 = vmul.f32 %v794, %v509
        %v803 = vmul.f32 %v793, %v510
        %v804 = vmul.f32 %v798, %v511
        %v805 = vpack.c.bf16 %v800, %v799
        %v806 = vpack.c.bf16 %v802, %v801
        %v807 = vpack.c.bf16 %v804, %v803
        %s808 = scalar_lea.vmem [#allocation2], 128
        %v809 = vld [vmem:[%s808] sm:$0xf]
        %v810 = vld [vmem:[%s808 + $0x4] sm:$0xf]
        %v811 = vld [vmem:[%s808 + $0x8] sm:$0xf]
        %v812 = vld [vmem:[%s808 + $0xc] sm:$0xf]
        %v813 = vld [vmem:[%s808 + $0x10] sm:$0xf]
        %v814 = vld [vmem:[%s808 + $0x14] sm:$0xf]
        %v815 = vld [vmem:[%s808 + $0x18] sm:$0xf]
        %v816 = vld [vmem:[%s808 + $0x1c] sm:$0xf]
        %v817 = vld [vmem:[%s808 + $0x20] sm:$0xf]
        %v818 = vld [vmem:[%s808 + $0x24] sm:$0xf]
        %v819 = vld [vmem:[%s808 + $0x28] sm:$0xf]
        %v820 = vld [vmem:[%s808 + $0x2c] sm:$0xf]
        %v821 = vld [vmem:[%s808 + $0x30] sm:$0xf]
        %v822 = vld [vmem:[%s808 + $0x34] sm:$0xf]
        %v823 = vld [vmem:[%s808 + $0x38] sm:$0xf]
        %v824 = vld [vmem:[%s808 + $0x3c] sm:$0xf]
        %v841 = vunpack.c.l.b16 %v809
        %v842 = vunpack.c.l.b16 %v810
        %v843 = vunpack.c.l.b16 %v811
        %v844 = vunpack.c.l.b16 %v812
        %v845 = vunpack.c.l.b16 %v813
        %v846 = vunpack.c.l.b16 %v814
        %v847 = vunpack.c.l.b16 %v815
        %v848 = vunpack.c.l.b16 %v816
        %v849 = vunpack.c.l.b16 %v817
        %v850 = vunpack.c.l.b16 %v818
        %v851 = vunpack.c.l.b16 %v819
        %v852 = vunpack.c.l.b16 %v820
        %v853 = vunpack.c.l.b16 %v821
        %v854 = vunpack.c.l.b16 %v822
        %v855 = vunpack.c.l.b16 %v823
        %v856 = vunpack.c.l.b16 %v824
        %v857 = vpack.c.b16 %v842, %v841
        %v858 = vpack.c.b16 %v844, %v843
        %v859 = vpack.c.b16 %v846, %v845
        %v860 = vpack.c.b16 %v848, %v847
        %v861 = vpack.c.b16 %v850, %v849
        %v862 = vpack.c.b16 %v852, %v851
        %v863 = vpack.c.b16 %v854, %v853
        %v864 = vpack.c.b16 %v856, %v855
        %873 = vmatprep.subr.bf16.mxu0 0
        %874 = vmatpush1.bf16.msra.mxu0 %v864
        %875 = vmatprep.subr.bf16.mxu0 0
        %876 = vmatpush1.bf16.msra.mxu0 %v863
        %877 = vmatprep.subr.bf16.mxu0 0
        %878 = vmatpush1.bf16.msra.mxu0 %v862
        %879 = vmatprep.subr.bf16.mxu0 0
        %880 = vmatpush1.bf16.msra.mxu0 %v861
        %881 = vmatprep.subr.bf16.mxu0 0
        %882 = vmatpush1.bf16.msra.mxu0 %v860
        %883 = vmatprep.subr.bf16.mxu0 0
        %884 = vmatpush1.bf16.msra.mxu0 %v859
        %885 = vmatprep.subr.bf16.mxu0 0
        %886 = vmatpush1.bf16.msra.mxu0 %v858
        %887 = vmatprep.subr.bf16.mxu0 0
        %888 = vmatpush1.bf16.msra.mxu0 %v857
        %889 = vmatprep.subr.bf16.mxu0 0
        %890 = vmatpush2.bf16.msra.mxu0 0
        %891 = vmatprep.subr.bf16.mxu0 0
        %892 = vmatpush2.bf16.msra.mxu0 0
        %893 = vmatprep.subr.bf16.mxu0 0
        %894 = vmatpush2.bf16.msra.mxu0 0
        %895 = vmatprep.subr.bf16.mxu0 0
        %896 = vmatpush2.bf16.msra.mxu0 0
        %897 = vmatprep.subr.bf16.mxu0 0
        %898 = vmatpush2.bf16.msra.mxu0 0
        %899 = vmatprep.subr.bf16.mxu0 0
        %900 = vmatpush2.bf16.msra.mxu0 0
        %901 = vmatprep.subr.bf16.mxu0 0
        %902 = vmatpush2.bf16.msra.mxu0 0
        %903 = vmatprep.subr.bf16.mxu0 0
        %904 = vmatpush2.bf16.msra.mxu0 0
        %905 = vmatprep.mubr.bf16.mxu0 0
        %906 = vmatmul.mubr.bf16.gmra.mxu0 %v805
        %v907 = vpop.f32.mrf.mxu0
        %v908 = vadd.f32 0.0, %v907
        %v909 = vpop.f32.mrf.mxu0
        %v910 = vpop.f32.mrf.mxu0
        %v911 = vadd.f32 0.0, %v910
        %v912 = vpop.f32.mrf.mxu0
        %913 = vmatprep.mubr.bf16.mxu0 0
        %914 = vmatmul.mubr.bf16.gmra.mxu0 %v806
        %v915 = vpop.f32.mrf.mxu0
        %v916 = vadd.f32 0.0, %v915
        %v917 = vpop.f32.mrf.mxu0
        %v918 = vpop.f32.mrf.mxu0
        %v919 = vadd.f32 0.0, %v918
        %v920 = vpop.f32.mrf.mxu0
        %921 = vmatprep.mubr.bf16.mxu0 0
        %922 = vmatmul.mubr.bf16.gmra.mxu0 %v807
        %v923 = vpop.f32.mrf.mxu0
        %v924 = vadd.f32 0.0, %v923
        %v925 = vpop.f32.mrf.mxu0
        %v926 = vpop.f32.mrf.mxu0
        %v927 = vadd.f32 0.0, %v926
        %v928 = vpop.f32.mrf.mxu0
        %929 = vdwg.mxu0
        %v930 = vadd.f32 %v764, %v908
        %v931 = vadd.f32 %v767, %v911
        %v932 = vadd.f32 %v772, %v916
        %v933 = vadd.f32 %v775, %v919
        %v934 = vadd.f32 %v780, %v924
        %v935 = vadd.f32 %v783, %v927
        %v936 = vld [vmem:[%s3] sm:$0x1]
        %v938 = vlaneseq
        %v939 = vshrl.u32 %v938, 7
        %v940 = vsub.s32 0, %v939
        %v941 = vrot.slane %v936, %v940
        %v943 = vadd.f32 %v930, %v941
        %v944 = vadd.f32 %v931, %v941
        %v945 = vadd.f32 %v932, %v941
        %v946 = vadd.f32 %v933, %v941
        %v947 = vadd.f32 %v934, %v941
        %v948 = vadd.f32 %v935, %v941
        %v949 = vmul.f32 %v943, %v346
        %v950 = vmul.f32 %v944, %v351
        %v951 = vmul.f32 %v945, %v356
        %v952 = vmul.f32 %v946, %v361
        %v953 = vmul.f32 %v947, %v366
        %v954 = vmul.f32 %v948, %v371
        %v955 = vpack.c.bf16 %v950, %v949
        %v956 = vpack.c.bf16 %v952, %v951
        %v957 = vpack.c.bf16 %v954, %v953
        %v958 = vld [vmem:[#allocation5] sm:$0xf]
        %v959 = vld [vmem:[#allocation5 + $0x4] sm:$0xf]
        %v960 = vld [vmem:[#allocation5 + $0x8] sm:$0xf]
        %v961 = vld [vmem:[#allocation5 + $0xc] sm:$0xf]
        %v962 = vld [vmem:[#allocation5 + $0x10] sm:$0xf]
        %v963 = vld [vmem:[#allocation5 + $0x14] sm:$0xf]
        %v964 = vld [vmem:[#allocation5 + $0x18] sm:$0xf]
        %v965 = vld [vmem:[#allocation5 + $0x1c] sm:$0xf]
        %v966 = vld [vmem:[#allocation5 + $0x20] sm:$0xf]
        %v967 = vld [vmem:[#allocation5 + $0x24] sm:$0xf]
        %v968 = vld [vmem:[#allocation5 + $0x28] sm:$0xf]
        %v969 = vld [vmem:[#allocation5 + $0x2c] sm:$0xf]
        %v970 = vld [vmem:[#allocation5 + $0x30] sm:$0xf]
        %v971 = vld [vmem:[#allocation5 + $0x34] sm:$0xf]
        %v972 = vld [vmem:[#allocation5 + $0x38] sm:$0xf]
        %v973 = vld [vmem:[#allocation5 + $0x3c] sm:$0xf]
        %v974 = vrot.slane %v949, 1
        %v975 = vrot.slane %v950, 1
        %v976 = vrot.slane %v951, 1
        %v977 = vrot.slane %v952, 1
        %v978 = vrot.slane %v953, 1
        %v979 = vrot.slane %v954, 1
        %v980 = vsel %vm543, %v978, %v979
        %v981 = vsel %vm543, %v977, %v978
        %v982 = vsel %vm543, %v976, %v977
        %v983 = vsel %vm543, %v975, %v976
        %v984 = vsel %vm543, %v974, %v975
        %v985 = vsel %vm543, %v979, %v974
        %v986 = vmul.f32 %v984, %v488
        %v987 = vmul.f32 %v983, %v489
        %v988 = vmul.f32 %v982, %v490
        %v989 = vmul.f32 %v981, %v491
        %v990 = vmul.f32 %v980, %v492
        %v991 = vmul.f32 %v985, %v493
        %v992 = vpack.c.bf16 %v987, %v986
        %v993 = vpack.c.bf16 %v989, %v988
        %v994 = vpack.c.bf16 %v991, %v990
        %s995 = scalar_lea.vmem [#allocation5], 64
        %v996 = vld [vmem:[%s995] sm:$0xf]
        %v997 = vld [vmem:[%s995 + $0x4] sm:$0xf]
        %v998 = vld [vmem:[%s995 + $0x8] sm:$0xf]
        %v999 = vld [vmem:[%s995 + $0xc] sm:$0xf]
        %v1000 = vld [vmem:[%s995 + $0x10] sm:$0xf]
        %v1001 = vld [vmem:[%s995 + $0x14] sm:$0xf]
        %v1002 = vld [vmem:[%s995 + $0x18] sm:$0xf]
        %v1003 = vld [vmem:[%s995 + $0x1c] sm:$0xf]
        %v1004 = vld [vmem:[%s995 + $0x20] sm:$0xf]
        %v1005 = vld [vmem:[%s995 + $0x24] sm:$0xf]
        %v1006 = vld [vmem:[%s995 + $0x28] sm:$0xf]
        %v1007 = vld [vmem:[%s995 + $0x2c] sm:$0xf]
        %v1008 = vld [vmem:[%s995 + $0x30] sm:$0xf]
        %v1009 = vld [vmem:[%s995 + $0x34] sm:$0xf]
        %v1010 = vld [vmem:[%s995 + $0x38] sm:$0xf]
        %v1011 = vld [vmem:[%s995 + $0x3c] sm:$0xf]
        %v1028 = vunpack.c.l.b16 %v996
        %v1029 = vunpack.c.l.b16 %v997
        %v1030 = vunpack.c.l.b16 %v998
        %v1031 = vunpack.c.l.b16 %v999
        %v1032 = vunpack.c.l.b16 %v1000
        %v1033 = vunpack.c.l.b16 %v1001
        %v1034 = vunpack.c.l.b16 %v1002
        %v1035 = vunpack.c.l.b16 %v1003
        %v1036 = vunpack.c.l.b16 %v1004
        %v1037 = vunpack.c.l.b16 %v1005
        %v1038 = vunpack.c.l.b16 %v1006
        %v1039 = vunpack.c.l.b16 %v1007
        %v1040 = vunpack.c.l.b16 %v1008
        %v1041 = vunpack.c.l.b16 %v1009
        %v1042 = vunpack.c.l.b16 %v1010
        %v1043 = vunpack.c.l.b16 %v1011
        %v1044 = vpack.c.b16 %v1029, %v1028
        %v1045 = vpack.c.b16 %v1031, %v1030
        %v1046 = vpack.c.b16 %v1033, %v1032
        %v1047 = vpack.c.b16 %v1035, %v1034
        %v1048 = vpack.c.b16 %v1037, %v1036
        %v1049 = vpack.c.b16 %v1039, %v1038
        %v1050 = vpack.c.b16 %v1041, %v1040
        %v1051 = vpack.c.b16 %v1043, %v1042
        %1060 = vmatprep.subr.bf16.mxu0 0
        %1061 = vmatpush1.bf16.msra.mxu0 %v1051
        %1062 = vmatprep.subr.bf16.mxu0 0
        %1063 = vmatpush1.bf16.msra.mxu0 %v1050
        %1064 = vmatprep.subr.bf16.mxu0 0
        %1065 = vmatpush1.bf16.msra.mxu0 %v1049
        %1066 = vmatprep.subr.bf16.mxu0 0
        %1067 = vmatpush1.bf16.msra.mxu0 %v1048
        %1068 = vmatprep.subr.bf16.mxu0 0
        %1069 = vmatpush1.bf16.msra.mxu0 %v1047
        %1070 = vmatprep.subr.bf16.mxu0 0
        %1071 = vmatpush1.bf16.msra.mxu0 %v1046
        %1072 = vmatprep.subr.bf16.mxu0 0
        %1073 = vmatpush1.bf16.msra.mxu0 %v1045
        %1074 = vmatprep.subr.bf16.mxu0 0
        %1075 = vmatpush1.bf16.msra.mxu0 %v1044
        %1076 = vmatprep.subr.bf16.mxu0 0
        %1077 = vmatpush2.bf16.msra.mxu0 0
        %1078 = vmatprep.subr.bf16.mxu0 0
        %1079 = vmatpush2.bf16.msra.mxu0 0
        %1080 = vmatprep.subr.bf16.mxu0 0
        %1081 = vmatpush2.bf16.msra.mxu0 0
        %1082 = vmatprep.subr.bf16.mxu0 0
        %1083 = vmatpush2.bf16.msra.mxu0 0
        %1084 = vmatprep.subr.bf16.mxu0 0
        %1085 = vmatpush2.bf16.msra.mxu0 0
        %1086 = vmatprep.subr.bf16.mxu0 0
        %1087 = vmatpush2.bf16.msra.mxu0 0
        %1088 = vmatprep.subr.bf16.mxu0 0
        %1089 = vmatpush2.bf16.msra.mxu0 0
        %1090 = vmatprep.subr.bf16.mxu0 0
        %1091 = vmatpush2.bf16.msra.mxu0 0
        %1092 = vmatprep.mubr.bf16.mxu0 0
        %1093 = vmatmul.mubr.bf16.gmra.mxu0 %v992
        %v1094 = vpop.f32.mrf.mxu0
        %v1095 = vadd.f32 0.0, %v1094
        %v1096 = vpop.f32.mrf.mxu0
        %v1097 = vpop.f32.mrf.mxu0
        %v1098 = vadd.f32 0.0, %v1097
        %v1099 = vpop.f32.mrf.mxu0
        %1100 = vmatprep.mubr.bf16.mxu0 0
        %1101 = vmatmul.mubr.bf16.gmra.mxu0 %v993
        %v1102 = vpop.f32.mrf.mxu0
        %v1103 = vadd.f32 0.0, %v1102
        %v1104 = vpop.f32.mrf.mxu0
        %v1105 = vpop.f32.mrf.mxu0
        %v1106 = vadd.f32 0.0, %v1105
        %v1107 = vpop.f32.mrf.mxu0
        %1108 = vmatprep.mubr.bf16.mxu0 0
        %1109 = vmatmul.mubr.bf16.gmra.mxu0 %v994
        %v1110 = vpop.f32.mrf.mxu0
        %v1111 = vadd.f32 0.0, %v1110
        %v1112 = vpop.f32.mrf.mxu0
        %v1113 = vpop.f32.mrf.mxu0
        %v1114 = vadd.f32 0.0, %v1113
        %v1115 = vpop.f32.mrf.mxu0
        %1116 = vdwg.mxu0
        %v1133 = vunpack.c.l.b16 %v958
        %v1134 = vunpack.c.l.b16 %v959
        %v1135 = vunpack.c.l.b16 %v960
        %v1136 = vunpack.c.l.b16 %v961
        %v1137 = vunpack.c.l.b16 %v962
        %v1138 = vunpack.c.l.b16 %v963
        %v1139 = vunpack.c.l.b16 %v964
        %v1140 = vunpack.c.l.b16 %v965
        %v1141 = vunpack.c.l.b16 %v966
        %v1142 = vunpack.c.l.b16 %v967
        %v1143 = vunpack.c.l.b16 %v968
        %v1144 = vunpack.c.l.b16 %v969
        %v1145 = vunpack.c.l.b16 %v970
        %v1146 = vunpack.c.l.b16 %v971
        %v1147 = vunpack.c.l.b16 %v972
        %v1148 = vunpack.c.l.b16 %v973
        %v1149 = vpack.c.b16 %v1134, %v1133
        %v1150 = vpack.c.b16 %v1136, %v1135
        %v1151 = vpack.c.b16 %v1138, %v1137
        %v1152 = vpack.c.b16 %v1140, %v1139
        %v1153 = vpack.c.b16 %v1142, %v1141
        %v1154 = vpack.c.b16 %v1144, %v1143
        %v1155 = vpack.c.b16 %v1146, %v1145
        %v1156 = vpack.c.b16 %v1148, %v1147
        %1165 = vmatprep.subr.bf16.mxu0 0
        %1166 = vmatpush1.bf16.msra.mxu0 %v1156
        %1167 = vmatprep.subr.bf16.mxu0 0
        %1168 = vmatpush1.bf16.msra.mxu0 %v1155
        %1169 = vmatprep.subr.bf16.mxu0 0
        %1170 = vmatpush1.bf16.msra.mxu0 %v1154
        %1171 = vmatprep.subr.bf16.mxu0 0
        %1172 = vmatpush1.bf16.msra.mxu0 %v1153
        %1173 = vmatprep.subr.bf16.mxu0 0
        %1174 = vmatpush1.bf16.msra.mxu0 %v1152
        %1175 = vmatprep.subr.bf16.mxu0 0
        %1176 = vmatpush1.bf16.msra.mxu0 %v1151
        %1177 = vmatprep.subr.bf16.mxu0 0
        %1178 = vmatpush1.bf16.msra.mxu0 %v1150
        %1179 = vmatprep.subr.bf16.mxu0 0
        %1180 = vmatpush1.bf16.msra.mxu0 %v1149
        %1181 = vmatprep.subr.bf16.mxu0 0
        %1182 = vmatpush2.bf16.msra.mxu0 0
        %1183 = vmatprep.subr.bf16.mxu0 0
        %1184 = vmatpush2.bf16.msra.mxu0 0
        %1185 = vmatprep.subr.bf16.mxu0 0
        %1186 = vmatpush2.bf16.msra.mxu0 0
        %1187 = vmatprep.subr.bf16.mxu0 0
        %1188 = vmatpush2.bf16.msra.mxu0 0
        %1189 = vmatprep.subr.bf16.mxu0 0
        %1190 = vmatpush2.bf16.msra.mxu0 0
        %1191 = vmatprep.subr.bf16.mxu0 0
        %1192 = vmatpush2.bf16.msra.mxu0 0
        %1193 = vmatprep.subr.bf16.mxu0 0
        %1194 = vmatpush2.bf16.msra.mxu0 0
        %1195 = vmatprep.subr.bf16.mxu0 0
        %1196 = vmatpush2.bf16.msra.mxu0 0
        %1197 = vmatprep.mubr.bf16.mxu0 0
        %1198 = vmatmul.mubr.bf16.gmra.mxu0 %v955
        %v1199 = vpop.f32.mrf.mxu0
        %v1200 = vadd.f32 %v1095, %v1199
        %v1201 = vpop.f32.mrf.mxu0
        %v1202 = vpop.f32.mrf.mxu0
        %v1203 = vadd.f32 %v1098, %v1202
        %v1204 = vpop.f32.mrf.mxu0
        %1205 = vmatprep.mubr.bf16.mxu0 0
        %1206 = vmatmul.mubr.bf16.gmra.mxu0 %v956
        %v1207 = vpop.f32.mrf.mxu0
        %v1208 = vadd.f32 %v1103, %v1207
        %v1209 = vpop.f32.mrf.mxu0
        %v1210 = vpop.f32.mrf.mxu0
        %v1211 = vadd.f32 %v1106, %v1210
        %v1212 = vpop.f32.mrf.mxu0
        %1213 = vmatprep.mubr.bf16.mxu0 0
        %1214 = vmatmul.mubr.bf16.gmra.mxu0 %v957
        %v1215 = vpop.f32.mrf.mxu0
        %v1216 = vadd.f32 %v1111, %v1215
        %v1217 = vpop.f32.mrf.mxu0
        %v1218 = vpop.f32.mrf.mxu0
        %v1219 = vadd.f32 %v1114, %v1218
        %v1220 = vpop.f32.mrf.mxu0
        %1221 = vdwg.mxu0
        %v1222 = vrot.slane %v949, 2
        %v1223 = vrot.slane %v950, 2
        %v1224 = vrot.slane %v951, 2
        %v1225 = vrot.slane %v952, 2
        %v1226 = vrot.slane %v953, 2
        %v1227 = vrot.slane %v954, 2
        %v1228 = vsel %vm792, %v1226, %v1227
        %v1229 = vsel %vm792, %v1225, %v1226
        %v1230 = vsel %vm792, %v1224, %v1225
        %v1231 = vsel %vm792, %v1223, %v1224
        %v1232 = vsel %vm792, %v1222, %v1223
        %v1233 = vsel %vm792, %v1227, %v1222
        %v1234 = vmul.f32 %v1232, %v506
        %v1235 = vmul.f32 %v1231, %v507
        %v1236 = vmul.f32 %v1230, %v508
        %v1237 = vmul.f32 %v1229, %v509
        %v1238 = vmul.f32 %v1228, %v510
        %v1239 = vmul.f32 %v1233, %v511
        %v1240 = vpack.c.bf16 %v1235, %v1234
        %v1241 = vpack.c.bf16 %v1237, %v1236
        %v1242 = vpack.c.bf16 %v1239, %v1238
        %s1243 = scalar_lea.vmem [#allocation5], 128
        %v1244 = vld [vmem:[%s1243] sm:$0xf]
        %v1245 = vld [vmem:[%s1243 + $0x4] sm:$0xf]
        %v1246 = vld [vmem:[%s1243 + $0x8] sm:$0xf]
        %v1247 = vld [vmem:[%s1243 + $0xc] sm:$0xf]
        %v1248 = vld [vmem:[%s1243 + $0x10] sm:$0xf]
        %v1249 = vld [vmem:[%s1243 + $0x14] sm:$0xf]
        %v1250 = vld [vmem:[%s1243 + $0x18] sm:$0xf]
        %v1251 = vld [vmem:[%s1243 + $0x1c] sm:$0xf]
        %v1252 = vld [vmem:[%s1243 + $0x20] sm:$0xf]
        %v1253 = vld [vmem:[%s1243 + $0x24] sm:$0xf]
        %v1254 = vld [vmem:[%s1243 + $0x28] sm:$0xf]
        %v1255 = vld [vmem:[%s1243 + $0x2c] sm:$0xf]
        %v1256 = vld [vmem:[%s1243 + $0x30] sm:$0xf]
        %v1257 = vld [vmem:[%s1243 + $0x34] sm:$0xf]
        %v1258 = vld [vmem:[%s1243 + $0x38] sm:$0xf]
        %v1259 = vld [vmem:[%s1243 + $0x3c] sm:$0xf]
        %v1276 = vunpack.c.l.b16 %v1244
        %v1277 = vunpack.c.l.b16 %v1245
        %v1278 = vunpack.c.l.b16 %v1246
        %v1279 = vunpack.c.l.b16 %v1247
        %v1280 = vunpack.c.l.b16 %v1248
        %v1281 = vunpack.c.l.b16 %v1249
        %v1282 = vunpack.c.l.b16 %v1250
        %v1283 = vunpack.c.l.b16 %v1251
        %v1284 = vunpack.c.l.b16 %v1252
        %v1285 = vunpack.c.l.b16 %v1253
        %v1286 = vunpack.c.l.b16 %v1254
        %v1287 = vunpack.c.l.b16 %v1255
        %v1288 = vunpack.c.l.b16 %v1256
        %v1289 = vunpack.c.l.b16 %v1257
        %v1290 = vunpack.c.l.b16 %v1258
        %v1291 = vunpack.c.l.b16 %v1259
        %v1292 = vpack.c.b16 %v1277, %v1276
        %v1293 = vpack.c.b16 %v1279, %v1278
        %v1294 = vpack.c.b16 %v1281, %v1280
        %v1295 = vpack.c.b16 %v1283, %v1282
        %v1296 = vpack.c.b16 %v1285, %v1284
        %v1297 = vpack.c.b16 %v1287, %v1286
        %v1298 = vpack.c.b16 %v1289, %v1288
        %v1299 = vpack.c.b16 %v1291, %v1290
        %1308 = vmatprep.subr.bf16.mxu0 0
        %1309 = vmatpush1.bf16.msra.mxu0 %v1299
        %1310 = vmatprep.subr.bf16.mxu0 0
        %1311 = vmatpush1.bf16.msra.mxu0 %v1298
        %1312 = vmatprep.subr.bf16.mxu0 0
        %1313 = vmatpush1.bf16.msra.mxu0 %v1297
        %1314 = vmatprep.subr.bf16.mxu0 0
        %1315 = vmatpush1.bf16.msra.mxu0 %v1296
        %1316 = vmatprep.subr.bf16.mxu0 0
        %1317 = vmatpush1.bf16.msra.mxu0 %v1295
        %1318 = vmatprep.subr.bf16.mxu0 0
        %1319 = vmatpush1.bf16.msra.mxu0 %v1294
        %1320 = vmatprep.subr.bf16.mxu0 0
        %1321 = vmatpush1.bf16.msra.mxu0 %v1293
        %1322 = vmatprep.subr.bf16.mxu0 0
        %1323 = vmatpush1.bf16.msra.mxu0 %v1292
        %1324 = vmatprep.subr.bf16.mxu0 0
        %1325 = vmatpush2.bf16.msra.mxu0 0
        %1326 = vmatprep.subr.bf16.mxu0 0
        %1327 = vmatpush2.bf16.msra.mxu0 0
        %1328 = vmatprep.subr.bf16.mxu0 0
        %1329 = vmatpush2.bf16.msra.mxu0 0
        %1330 = vmatprep.subr.bf16.mxu0 0
        %1331 = vmatpush2.bf16.msra.mxu0 0
        %1332 = vmatprep.subr.bf16.mxu0 0
        %1333 = vmatpush2.bf16.msra.mxu0 0
        %1334 = vmatprep.subr.bf16.mxu0 0
        %1335 = vmatpush2.bf16.msra.mxu0 0
        %1336 = vmatprep.subr.bf16.mxu0 0
        %1337 = vmatpush2.bf16.msra.mxu0 0
        %1338 = vmatprep.subr.bf16.mxu0 0
        %1339 = vmatpush2.bf16.msra.mxu0 0
        %1340 = vmatprep.mubr.bf16.mxu0 0
        %1341 = vmatmul.mubr.bf16.gmra.mxu0 %v1240
        %v1342 = vpop.f32.mrf.mxu0
        %v1343 = vadd.f32 0.0, %v1342
        %v1344 = vpop.f32.mrf.mxu0
        %v1345 = vpop.f32.mrf.mxu0
        %v1346 = vadd.f32 0.0, %v1345
        %v1347 = vpop.f32.mrf.mxu0
        %1348 = vmatprep.mubr.bf16.mxu0 0
        %1349 = vmatmul.mubr.bf16.gmra.mxu0 %v1241
        %v1350 = vpop.f32.mrf.mxu0
        %v1351 = vadd.f32 0.0, %v1350
        %v1352 = vpop.f32.mrf.mxu0
        %v1353 = vpop.f32.mrf.mxu0
        %v1354 = vadd.f32 0.0, %v1353
        %v1355 = vpop.f32.mrf.mxu0
        %1356 = vmatprep.mubr.bf16.mxu0 0
        %1357 = vmatmul.mubr.bf16.gmra.mxu0 %v1242
        %v1358 = vpop.f32.mrf.mxu0
        %v1359 = vadd.f32 0.0, %v1358
        %v1360 = vpop.f32.mrf.mxu0
        %v1361 = vpop.f32.mrf.mxu0
        %v1362 = vadd.f32 0.0, %v1361
        %v1363 = vpop.f32.mrf.mxu0
        %1364 = vdwg.mxu0
        %v1365 = vadd.f32 %v1200, %v1343
        %v1366 = vadd.f32 %v1203, %v1346
        %v1367 = vadd.f32 %v1208, %v1351
        %v1368 = vadd.f32 %v1211, %v1354
        %v1369 = vadd.f32 %v1216, %v1359
        %v1370 = vadd.f32 %v1219, %v1362
        %v1371 = vld [vmem:[%s5] sm:$0x1]
        %v1373 = vlaneseq
        %v1374 = vshrl.u32 %v1373, 7
        %v1375 = vsub.s32 0, %v1374
        %v1376 = vrot.slane %v1371, %v1375
        %v1378 = vadd.f32 %v1365, %v1376
        %v1379 = vadd.f32 %v1366, %v1376
        %v1380 = vadd.f32 %v1367, %v1376
        %v1381 = vadd.f32 %v1368, %v1376
        %v1382 = vadd.f32 %v1369, %v1376
        %v1383 = vadd.f32 %v1370, %v1376
        %v1384 = vpack.c.bf16 %v1379, %v1378
        %v1385 = vpack.c.bf16 %v1380, %v1380
        %v1386 = vpack.c.bf16 %v1382, %v1381
        %v1387 = vpack.c.bf16 %v1383, %v1383
        %v1392 = vunpack.c.l.b16 %v1384
        %v1393 = vunpack.c.h.b16 %v1384
        %v1394 = vunpack.c.l.b16 %v1385
        %v1395 = vunpack.c.l.b16 %v1386
        %v1396 = vunpack.c.h.b16 %v1386
        %v1397 = vunpack.c.l.b16 %v1387
        %v1398 = vpack.c.b16 %v1392, %v1392
        %v1399 = vpack.c.b16 %v1393, %v1393
        %v1400 = vpack.c.b16 %v1394, %v1394
        %v1401 = vpack.c.b16 %v1395, %v1395
        %v1402 = vpack.c.b16 %v1396, %v1396
        %v1403 = vpack.c.b16 %v1397, %v1397
        %1410 = vst [vmem:[%s295] sm:$0xf] %v1398
        %1411 = vst [vmem:[%s295 + $0x4] sm:$0xf] %v1399
        %1412 = vst [vmem:[%s295 + $0x8] sm:$0xf] %v1400
        %1413 = vst [vmem:[%s295 + $0xc] sm:$0xf] %v1401
        %1414 = vst [vmem:[%s295 + $0x10] sm:$0xf] %v1402
        %1415 = vst [vmem:[%s295 + $0x14] sm:$0xf] %v1403
        %s1416 = sand.u32 %s166, 1
        %s1417 = scalar_lea.sflag [#allocation4], %s1416
        %s1418 = sand.u32 %s166, 1
        %s1419 = smul.addr %s1418, 24
        %s1420 = scalar_lea.vmem [#allocation7], %s1419
        // Predicated region
        $region53: #{tpu_custom_call.1} parent=43 // pred_check
          %p1421 = pneg %p176
        $region54: #{tpu_custom_call.1} parent=43 // pred_check_branch
          %1423 = sbr.rel (%p1421) target = $region56
        $region55: #{tpu_custom_call.1} parent=43 // pred_region
          %s1424 = smul.u32 2, %s22
          %s1426 = ssub.s32 384, 384
          %1427 = vsyncadd %s1417, %s1426
          %s1428 = smul.addr %s1424, 3
          %s1429 = smul.addr %s1428, 64
          %s1430 = scalar_lea.hbm %s6, %s1429
          %s1431 = sshll.u32 %s1420, 4
          %s1432 = int_to_ptr.vmem [resolvable:$true] %s1431
          %1437 = dma.vmem_to_hbm [thread:$0]  %s1432, 384, %s1430, %s1417, 64, 64, 4
        $region56: #{tpu_custom_call.1} parent=43 // pred_fallthru
          _
      $region44: #{tpu_custom_call.1} parent=5 // pred_fallthru
        _
      %p1438 = scmp.le.s32.totalorder 2, %s17
      // Predicated region
      $region57: #{tpu_custom_call.1} parent=5 // pred_check
        %p1439 = pneg %p1438
      $region58: #{tpu_custom_call.1} parent=5 // pred_check_branch
        %1441 = sbr.rel (%p1439) target = $region60
      $region59: #{tpu_custom_call.1} parent=5 // pred_region
        %s1442 = ssub.s32 %s17, 2
        // Predicated region
        $region61: #{tpu_custom_call.1} parent=59 // pred_check
          %p1443 = pneg %p182
        $region62: #{tpu_custom_call.1} parent=59 // pred_check_branch
          %1445 = sbr.rel (%p1443) target = $region64
        $region63: #{tpu_custom_call.1} parent=59 // pred_region
          %s1446 = sand.u32 %s167, 1
          %s1447 = scalar_lea.sflag [#allocation4], %s1446
          %s1448 = sand.u32 %s167, 1
          %s1449 = smul.addr %s1448, 24
          %s1450 = scalar_lea.vmem [#allocation7], %s1449
          %1451 = dma.done %s1447, 384
        $region64: #{tpu_custom_call.1} parent=59 // pred_fallthru
          _
      $region60: #{tpu_custom_call.1} parent=5 // pred_fallthru
        _
    $region6: #{tpu_custom_call.1} parent=1 // loop_footer
      %s21 = sadd.s32 1, %s17
    $region7: #{tpu_custom_call.1} parent=1 // loop_footer_branch
      %16 = sbr.rel target = $region3
    $region8: #{tpu_custom_call.1} parent=1 // loop_exit
      _
    %1452 = vsyncpa [#allocation3], 1
    %s1453 = scalar_lea.sflag [#allocation3], 1
    %1454 = vsyncpa %s1453, 1
    %1455 = vsyncpa [#allocation6], 1
    %1456 = vsyncpa [#allocation4], 1
    %s1457 = scalar_lea.sflag [#allocation4], 1
    %1458 = vsyncpa %s1457, 1

</llo_original>
